<compile_context>
chip_gen: v7x
topology: tpu7x:2x2x1
jax: 0.10.0
libtpu: 0.0.40
codegen_flags: <defaults>
</compile_context>

<pallas_src>
import math

import numpy as np
import jax
import jax.numpy as jnp
from jax import lax
from jax.experimental import pallas as pl
from jax.experimental.pallas import tpu as pltpu

# LogPoolingCovLayer(5, 5, pool_type='avg_pool', num_levels=2, ang_levels=6,
# facbase=3) modelled as a fixed assignment of the 24 non-center offsets of
# the 5x5 window to log-polar bins (center pixel handled by centerconv2;
# bins left empty by facbase=3 contribute zero).
KH = KW = 5
PAD = 2
NUM_LEVELS = 2
ANG_LEVELS = 6
FACBASE = 3
NBINS = NUM_LEVELS * ANG_LEVELS            # 12 bins -> (4, 3) lpsc1 kernel
NOFF = KH * KW                             # 25 window offsets (incl. center)
NOFF_PAD = NOFF + (NOFF % 2)               # pad to 26 so offsets pair up
OFFSETS = tuple((ky, kx) for ky in range(KH) for kx in range(KW))
BN_EPS = 1e-5


def _log_polar_bins():
    """Assign every non-center offset of the 5x5 window to a log-polar bin."""
    rmax = math.hypot(PAD, PAD)
    bounds = [rmax / (FACBASE ** (NUM_LEVELS - l)) for l in range(NUM_LEVELS + 1)]
    bins = [[] for _ in range(NBINS)]
    for ky in range(KH):
        for kx in range(KW):
            dy, dx = ky - PAD, kx - PAD
            if dy == 0 and dx == 0:
                continue                                     # center excluded
            r = math.hypot(dy, dx)
            lev = NUM_LEVELS - 1
            for l in range(NUM_LEVELS):
                if r <= bounds[l + 1] + 1e-9:
                    lev = l
                    break
            ang = math.atan2(dy, dx)
            if ang < 0.0:
                ang += 2.0 * math.pi
            sec = min(int(ang / (2.0 * math.pi / ANG_LEVELS)), ANG_LEVELS - 1)
            bins[lev * ANG_LEVELS + sec].append((ky, kx))
    assert sum(len(b) for b in bins) == NOFF - 1
    return bins


_BINS = _log_polar_bins()
_OFFSET_TO_BIN = {off: b for b, offs in enumerate(_BINS) for off in offs}


# ---------------------------------------------------------------------------
# Pallas kernels (channel-major (C, pixels) layout; pixels on lanes).
# ---------------------------------------------------------------------------
def _conv1_kernel(x_ref, w1_ref, a_ref, st_ref):
    """conv1 (1x1, inplanes -> planes) in bf16 + BN1 partial statistics.

    x_ref : (1, Cin, TL) f32    w1_ref : (P, Cin) bf16
    a_ref : (1, P, TL)  bf16    st_ref : (1, 1, 2*P, 1) f32 [sum ; sumsq]
    """
    P = a_ref.shape[1]
    a = jnp.dot(w1_ref[...], x_ref[0].astype(jnp.bfloat16),
                preferred_element_type=jnp.float32)
    ab = a.astype(jnp.bfloat16)
    a_ref[0] = ab
    af = ab.astype(jnp.float32)           # stats on the rounded values (what
    st_ref[0, 0, :P, :] = jnp.sum(af, axis=1, keepdims=True)   # downstream sees)
    st_ref[0, 0, P:, :] = jnp.sum(af * af, axis=1, keepdims=True)


def _make_fused_spatial_kernel(H, W):
    """BN1 affine + ReLU, lane-axis roll+mask im2col, and the fused
         [ conv2 (3x3)  |  lpsc1(logpl(.))  +  centerconv2 ]
    contraction as ONE (P, 26*P) x (26*P, HW) bf16 MXU matmul, + BN2 partials.
    centerconv2's bias is dropped: it cancels exactly under batch-stat BN2.
    """
    HW = H * W

    def kernel(a_ref, s1_ref, h1_ref, wf_ref, col_ref, u_ref, st_ref, patch_ref):
        P = a_ref.shape[1]

        # BN1 affine + ReLU in f32 (lane-dense over pixels).
        t = jnp.maximum(a_ref[0].astype(jnp.float32) * s1_ref[...]
                        + h1_ref[...], 0.0)                          # (P, HW)

        pix = lax.broadcasted_iota(jnp.int32, (1, HW), 1)            # flat idx
        col = col_ref[...]                                           # idx % W

        def piece(o):
            """Window offset o of the 5x5 neighbourhood as a lane roll of the
            flat activation plus a border mask (no padded scratch, no
            tile-crossing reshapes)."""
            if o >= NOFF:                                 # phantom pad offset
                return jnp.zeros((P, HW), jnp.float32)
            ky, kx = OFFSETS[o]
            dy, dx = ky - PAD, kx - PAD
            if dy == 0 and dx == 0:
                return t
            off = dy * W + dx
            rolled = pltpu.roll(t, (-off) % HW, axis=1)
            valid = ((pix >= (-dy) * W) & (pix < (H - dy) * W) &
                     (col >= -dx) & (col < W - dx))
            return jnp.where(valid, rolled, 0.0)

        # im2col: write offsets in pairs so every bf16 store is a full
        # (2P, HW) 16-row-aligned lane-dense slab, cast to bf16 once per pair.
        for g in range(NOFF_PAD // 2):
            blk = jnp.concatenate([piece(2 * g), piece(2 * g + 1)], axis=0)
            patch_ref[2 * g * P:(2 * g + 2) * P, :] = blk.astype(jnp.bfloat16)

        # Single fused bf16 contraction (f32 accumulation on the MXU).
        u = jnp.dot(wf_ref[...], patch_ref[...],
                    preferred_element_type=jnp.float32)              # (P, HW)
        ub = u.astype(jnp.bfloat16)
        u_ref[0] = ub
        uf = ub.astype(jnp.float32)
        st_ref[0, 0, :P, :] = jnp.sum(uf, axis=1, keepdims=True)
        st_ref[0, 0, P:, :] = jnp.sum(uf * uf, axis=1, keepdims=True)

    return kernel


def _conv3_stats_kernel(u_ref, s2_ref, h2_ref, w3_ref, st_ref):
    """BN2 affine + ReLU -> conv3 (1x1, bf16) -> BN3 partial statistics ONLY.
    conv3's result is not written to HBM; the finalize kernel recomputes it
    (cheaper than a 4*planes-channel HBM round trip)."""
    C4 = w3_ref.shape[0]
    v = jnp.maximum(u_ref[0].astype(jnp.float32) * s2_ref[...]
                    + h2_ref[...], 0.0)
    w3out = jnp.dot(w3_ref[...], v.astype(jnp.bfloat16),
                    preferred_element_type=jnp.float32)
    st_ref[0, 0, :C4, :] = jnp.sum(w3out, axis=1, keepdims=True)
    st_ref[0, 0, C4:, :] = jnp.sum(w3out * w3out, axis=1, keepdims=True)


def _finalize_kernel(u_ref, x_ref, s2_ref, h2_ref, w3f_ref, h3_ref, y_ref):
    """BN2+ReLU -> conv3 (BN3 scale pre-folded into the weight) -> + shift
    -> + identity residual -> ReLU.  y aliases x's buffer."""
    v = jnp.maximum(u_ref[0].astype(jnp.float32) * s2_ref[...]
                    + h2_ref[...], 0.0)
    w3out = jnp.dot(w3f_ref[...], v.astype(jnp.bfloat16),
                    preferred_element_type=jnp.float32)
    y_ref[0] = jnp.maximum(w3out + h3_ref[...] + x_ref[0], 0.0)


# ---------------------------------------------------------------------------
# Host-side helpers.
# ---------------------------------------------------------------------------
def _vmem_limit_bytes():
    """Budget ~45% of the chip's physical VMEM (capped at 64 MiB, floored at
    32 MiB) so the double-buffered pipeline always has headroom — v7x has only
    64 MiB per TC, v5e/v6e have 128 MiB."""
    try:
        cap = int(pltpu.get_tpu_info().vmem_capacity_bytes)
    except Exception:
        cap = 128 * 1024 * 1024
    return int(min(64 * 1024 * 1024, max(32 * 1024 * 1024, cap * 45 // 100)))


def _cparams(n_grid_dims):
    return pltpu.CompilerParams(
        dimension_semantics=("parallel",) * n_grid_dims,
        vmem_limit_bytes=_vmem_limit_bytes(),
    )


def _pick_hw_tile(HW):
    """Largest multiple-of-128 divisor of HW that still leaves >= 2 pixel
    tiles (capped at 2048 lanes); falls back to the full HW when none exists
    (the BlockSpec full-dim exception then applies)."""
    cap = min(2048, max(128, HW // 2))
    best = HW
    t = 128
    while t <= cap:
        if HW % t == 0:
            best = t
        t += 128
    return best


def build_fused_weight(conv2_w, lpsc1_w, centerconv2_w):
    """Fused (P, 26*P) weight: for every 5x5 window offset, the out1 rows get
    the 3x3 conv2 weight (inner 3x3 only), the out2 rows get the log-polar bin
    weight scaled by 1/|bin| (avg-pool folded in) or the centerconv2 weight at
    the center offset; the 26th (phantom) offset block is zero.
    centerconv2's bias is omitted (cancels under batch-stat BN2)."""
    Ph, P = conv2_w.shape[:2]
    zero = jnp.zeros((Ph, P), jnp.float32)
    top, bot = [], []
    for o in range(NOFF_PAD):
        if o >= NOFF:
            top.append(zero)
            bot.append(zero)
            continue
        ky, kx = OFFSETS[o]
        if 1 <= ky <= 3 and 1 <= kx <= 3:
            top.append(conv2_w[:, :, ky - 1, kx - 1].astype(jnp.float32))
        else:
            top.append(zero)
        if (ky, kx) == (PAD, PAD):
            bot.append(centerconv2_w[:, :, 0, 0].astype(jnp.float32))
        else:
            b = _OFFSET_TO_BIN[(ky, kx)]
            bot.append(lpsc1_w[:, :, b // 3, b % 3].astype(jnp.float32)
                       / float(len(_BINS[b])))
    wf_top = jnp.concatenate(top, axis=1)            # (P//2, 26*P)  -> out1
    wf_bot = jnp.concatenate(bot, axis=1)            # (P//2, 26*P)  -> out2
    return jnp.concatenate([wf_top, wf_bot], axis=0)  # (P, 26*P)


def _bn_scale_shift(partials, gamma, beta, count):
    """partials: (..., 2C, 1) per-step [sum ; sumsq] -> per-channel affine."""
    twoC = partials.shape[-2]
    totals = partials.reshape(-1, twoC).sum(axis=0)
    C = gamma.shape[0]
    mean = totals[:C] / count
    var = jnp.maximum(totals[C:] / count - mean * mean, 0.0)
    scale = gamma.astype(jnp.float32) * lax.rsqrt(var + BN_EPS)
    shift = beta.astype(jnp.float32) - mean * scale
    return scale.reshape(-1, 1), shift.reshape(-1, 1)


def bottleneck_hl_forward(x_nchw, params, *, stride=1, downsample=None):
    """Pallas forward of BottleneckHL (NCHW in, NCHW out), training-mode BN."""
    # TODO(synk): stride > 1 and the external `downsample` module are not
    # implemented; only the identity-residual (stride=1) configuration is.
    assert stride == 1 and downsample is None
    N, Ci, H, W = x_nchw.shape
    P = params["conv1_w"].shape[0]                   # planes
    assert Ci == 4 * P, "identity residual requires inplanes == 4*planes"
    HW = H * W
    count = float(N * HW)
    TL = _pick_hw_tile(HW)
    T = HW // TL

    x = x_nchw.reshape(N, Ci, HW).astype(jnp.float32)       # NCHW -> (N,C,HW)
    w1 = params["conv1_w"][:, :, 0, 0].astype(jnp.bfloat16)         # (P, Ci)
    w3_f32 = params["conv3_w"][:, :, 0, 0].astype(jnp.float32)      # (4P, P)
    w3 = w3_f32.astype(jnp.bfloat16)
    wf = build_fused_weight(params["conv2_w"], params["lpsc1_w"],
                            params["centerconv2_w"]).astype(jnp.bfloat16)
    col_idx = jnp.asarray(
        np.tile(np.arange(W, dtype=np.int32), H).reshape(1, HW))

    # --- conv1 (bf16) + BN1 partial stats ----------------------------------
    a, st1 = pl.pallas_call(
        _conv1_kernel,
        grid=(N, T),
        in_specs=[pl.BlockSpec((1, Ci, TL), lambda n, j: (n, 0, j)),
                  pl.BlockSpec((P, Ci), lambda n, j: (0, 0))],
        out_specs=[pl.BlockSpec((1, P, TL), lambda n, j: (n, 0, j)),
                   pl.BlockSpec((1, 1, 2 * P, 1), lambda n, j: (n, j, 0, 0))],
        out_shape=(jax.ShapeDtypeStruct((N, P, HW), jnp.bfloat16),
                   jax.ShapeDtypeStruct((N, T, 2 * P, 1), jnp.float32)),
        compiler_params=_cparams(2),
    )(x, w1)
    s1, h1 = _bn_scale_shift(st1, params["bn1_gamma"], params["bn1_beta"], count)

    # --- BN1+ReLU + fused [conv2 | lpsc1 + centerconv2] + BN2 partials ------
    u, st2 = pl.pallas_call(
        _make_fused_spatial_kernel(H, W),
        grid=(N,),
        in_specs=[pl.BlockSpec((1, P, HW), lambda n: (n, 0, 0)),
                  pl.BlockSpec((P, 1), lambda n: (0, 0)),
                  pl.BlockSpec((P, 1), lambda n: (0, 0)),
                  pl.BlockSpec((P, NOFF_PAD * P), lambda n: (0, 0)),
                  pl.BlockSpec((1, HW), lambda n: (0, 0))],
        out_specs=[pl.BlockSpec((1, P, HW), lambda n: (n, 0, 0)),
                   pl.BlockSpec((1, 1, 2 * P, 1), lambda n: (n, 0, 0, 0))],
        out_shape=(jax.ShapeDtypeStruct((N, P, HW), jnp.bfloat16),
                   jax.ShapeDtypeStruct((N, 1, 2 * P, 1), jnp.float32)),
        scratch_shapes=[pltpu.VMEM((NOFF_PAD * P, HW), jnp.bfloat16)],
        compiler_params=_cparams(1),
    )(a, s1, h1, wf, col_idx)
    s2, h2 = _bn_scale_shift(st2, params["bn2_gamma"], params["bn2_beta"], count)

    # --- BN2+ReLU -> conv3 -> BN3 partial stats (conv3 output not stored) ---
    st3 = pl.pallas_call(
        _conv3_stats_kernel,
        grid=(N, T),
        in_specs=[pl.BlockSpec((1, P, TL), lambda n, j: (n, 0, j)),
                  pl.BlockSpec((P, 1), lambda n, j: (0, 0)),
                  pl.BlockSpec((P, 1), lambda n, j: (0, 0)),
                  pl.BlockSpec((4 * P, P), lambda n, j: (0, 0))],
        out_specs=pl.BlockSpec((1, 1, 8 * P, 1), lambda n, j: (n, j, 0, 0)),
        out_shape=jax.ShapeDtypeStruct((N, T, 8 * P, 1), jnp.float32),
        compiler_params=_cparams(2),
    )(u, s2, h2, w3)
    s3, h3 = _bn_scale_shift(st3, params["bn3_gamma"], params["bn3_beta"], count)
    w3f = (w3_f32 * s3).astype(jnp.bfloat16)   # fold BN3 scale into conv3 (exact)

    # --- finalize: BN2+ReLU -> conv3 -> (+BN3 shift) -> + residual -> ReLU --
    y = pl.pallas_call(
        _finalize_kernel,
        grid=(N, T),
        in_specs=[pl.BlockSpec((1, P, TL), lambda n, j: (n, 0, j)),
                  pl.BlockSpec((1, Ci, TL), lambda n, j: (n, 0, j)),
                  pl.BlockSpec((P, 1), lambda n, j: (0, 0)),
                  pl.BlockSpec((P, 1), lambda n, j: (0, 0)),
                  pl.BlockSpec((4 * P, P), lambda n, j: (0, 0)),
                  pl.BlockSpec((4 * P, 1), lambda n, j: (0, 0))],
        out_specs=pl.BlockSpec((1, Ci, TL), lambda n, j: (n, 0, j)),
        out_shape=jax.ShapeDtypeStruct((N, Ci, HW), jnp.float32),
        input_output_aliases={1: 0},          # y reuses x's buffer (last use)
        compiler_params=_cparams(2),
    )(u, x, s2, h2, w3f, h3)

    return y.reshape(N, Ci, H, W)                    # already NCHW


# ---------------------------------------------------------------------------
# Pure-JAX reference (NCHW, mirrors the PyTorch forward) for self-check.
# ---------------------------------------------------------------------------
def reference_forward(x_nchw, params):
    x = x_nchw.astype(jnp.float32)
    N, C, H, W = x.shape

    def bn(t, g, b):
        mean = jnp.mean(t, axis=(0, 2, 3), keepdims=True)
        var = jnp.mean((t - mean) ** 2, axis=(0, 2, 3), keepdims=True)
        return (t - mean) * lax.rsqrt(var + BN_EPS) * g[None, :, None, None] \
               + b[None, :, None, None]

    def conv1x1(t, w):
        return jnp.einsum("nchw,oc->nohw", t, w[:, :, 0, 0])

    out = jnp.maximum(bn(conv1x1(x, params["conv1_w"]),
                         params["bn1_gamma"], params["bn1_beta"]), 0.0)

    # conv2: 3x3, padding=1, stride=1, no bias
    tp3 = jnp.pad(out, ((0, 0), (0, 0), (1, 1), (1, 1)))
    out1 = sum(jnp.einsum("nchw,oc->nohw",
                          tp3[:, :, ky:ky + H, kx:kx + W],
                          params["conv2_w"][:, :, ky, kx])
               for ky in range(3) for kx in range(3))

    # lpsc1(logpl(out)) + centerconv2(out)  (with bias)
    tp5 = jnp.pad(out, ((0, 0), (0, 0), (PAD, PAD), (PAD, PAD)))
    out2 = jnp.zeros_like(out1)
    for b, offs in enumerate(_BINS):
        if not offs:
            continue                                  # empty bin -> zero map
        pooled = sum(tp5[:, :, ky:ky + H, kx:kx + W]
                     for (ky, kx) in offs) / float(len(offs))
        out2 = out2 + jnp.einsum("nchw,oc->nohw", pooled,
                                 params["lpsc1_w"][:, :, b // 3, b % 3])
    out2 = out2 + conv1x1(out, params["centerconv2_w"]) \
           + params["centerconv2_b"][None, :, None, None]

    u = jnp.concatenate([out1, out2], axis=1)
    v = jnp.maximum(bn(u, params["bn2_gamma"], params["bn2_beta"]), 0.0)
    w3out = conv1x1(v, params["conv3_w"])
    y = bn(w3out, params["bn3_gamma"], params["bn3_beta"]) + x
    return jnp.maximum(y, 0.0)


def init_params(key, inplanes, planes):
    ks = jax.random.split(key, 12)

    def nrm(k, shape, scale):
        return (scale * jax.random.normal(k, shape)).astype(jnp.float32)

    p2 = planes // 2
    return {
        "conv1_w": nrm(ks[0], (planes, inplanes, 1, 1), 0.2),
        "bn1_gamma": (1.0 + nrm(ks[1], (planes,), 0.1)).astype(jnp.float32),
        "bn1_beta": nrm(ks[2], (planes,), 0.1),
        "conv2_w": nrm(ks[3], (p2, planes, 3, 3), 0.2),
        "lpsc1_w": nrm(ks[4], (p2, planes, 4, 3), 0.2),
        "centerconv2_w": nrm(ks[5], (p2, planes, 1, 1), 0.2),
        "centerconv2_b": nrm(ks[6], (p2,), 0.1),
        "bn2_gamma": (1.0 + nrm(ks[7], (planes,), 0.1)).astype(jnp.float32),
        "bn2_beta": nrm(ks[8], (planes,), 0.1),
        "conv3_w": nrm(ks[9], (planes * 4, planes, 1, 1), 0.2),
        "bn3_gamma": (1.0 + nrm(ks[10], (planes * 4,), 0.1)).astype(jnp.float32),
        "bn3_beta": nrm(ks[11], (planes * 4,), 0.1),
    }


if __name__ == "__main__":
    key = jax.random.PRNGKey(0)
    kx_, kp_ = jax.random.split(key)
    N, planes, H, W = 2, 8, 16, 16
    inplanes = planes * 4                 # identity residual, stride=1
    x = jax.random.normal(kx_, (N, inplanes, H, W), dtype=jnp.float32)
    params = init_params(kp_, inplanes=inplanes, planes=planes)

    fwd = jax.jit(bottleneck_hl_forward)
    out = jax.block_until_ready(fwd(x, params))
    ref = jax.block_until_ready(reference_forward(x, params))

    assert out.shape == (N, inplanes, H, W)
    # Mixed precision (bf16 MXU operands / bf16 inter-stage tensors, f32
    # accumulation and BN math) vs a pure-f32 reference -> relaxed tolerance.
    np.testing.assert_allclose(np.asarray(out), np.asarray(ref),
                               rtol=3e-2, atol=6e-2)
    print("KERNEL_OK")
</pallas_src>

<mosaic_0001>
module attributes {stable_mosaic.version = 11 : i64} {
  func.func @_conv1_kernel(%arg0: i32, %arg1: i32, %arg2: memref<1x32x128xf32, #tpu.memory_space<vmem>>, %arg3: memref<8x32xbf16, #tpu.memory_space<vmem>>, %arg4: memref<1x8x128xbf16, #tpu.memory_space<vmem>>, %arg5: memref<1x1x16x1xf32, #tpu.memory_space<vmem>>) attributes {dimension_semantics = [#tpu.dimension_semantics<parallel>, #tpu.dimension_semantics<parallel>], iteration_bounds = array<i64: 2, 2>, scalar_prefetch = 0 : i64, scratch_operands = 0 : i64, tpu.core_type = #tpu.core_type<tc>, window_params = [{transform_indices = @transform_0, window_bounds = array<i64: 1, 32, 128>}, {pipeline_mode = #tpu.pipeline_mode<synchronous>, transform_indices = @transform_1, window_bounds = array<i64: 8, 32>}, {transform_indices = @transform_2, window_bounds = array<i64: 1, 8, 128>}, {transform_indices = @transform_3, window_bounds = array<i64: 1, 1, 16, 1>}]} {
    %c0 = arith.constant 0 : index
    %c0_0 = arith.constant 0 : index
    %0 = vector.load %arg3[%c0, %c0_0] : memref<8x32xbf16, #tpu.memory_space<vmem>>, vector<8x32xbf16>
    %c0_1 = arith.constant 0 : index
    %c0_2 = arith.constant 0 : index
    %c0_3 = arith.constant 0 : index
    %1 = vector.load %arg2[%c0_1, %c0_2, %c0_3] : memref<1x32x128xf32, #tpu.memory_space<vmem>>, vector<1x32x128xf32>
    %2 = vector.shape_cast %1 : vector<1x32x128xf32> to vector<32x128xf32>
    %3 = arith.truncf %2 : vector<32x128xf32> to vector<32x128xbf16>
    %cst = arith.constant dense<0.000000e+00> : vector<8x128xf32>
    %4 = tpu.matmul %0, %3, %cst {dimension_numbers = #tpu.dot_dimension_numbers<[1], [0], [0], [1], [0, 0, 1, 1], [], []>} : vector<8x32xbf16>, vector<32x128xbf16>, vector<8x128xf32> -> vector<8x128xf32>
    %5 = arith.truncf %4 : vector<8x128xf32> to vector<8x128xbf16>
    %c0_4 = arith.constant 0 : index
    %c0_5 = arith.constant 0 : index
    %c0_6 = arith.constant 0 : index
    %6 = vector.load %arg4[%c0_4, %c0_5, %c0_6] : memref<1x8x128xbf16, #tpu.memory_space<vmem>>, vector<1x8x128xbf16>
    %7 = vector.shape_cast %6 : vector<1x8x128xbf16> to vector<8x128xbf16>
    %8 = vector.shape_cast %5 : vector<8x128xbf16> to vector<1x8x128xbf16>
    tpu.vector_store %arg4[%c0_4, %c0_5, %c0_6], %8 {strides = array<i32>} : memref<1x8x128xbf16, #tpu.memory_space<vmem>>, vector<1x8x128xbf16>,
    %9 = arith.extf %5 : vector<8x128xbf16> to vector<8x128xf32>
    %cst_7 = arith.constant dense<0.000000e+00> : vector<8xf32>
    %10 = vector.multi_reduction <add>, %9, %cst_7 [1] : vector<8x128xf32> to vector<8xf32>
    %11 = vector.shape_cast %10 : vector<8xf32> to vector<8x1xf32>
    %c0_8 = arith.constant 0 : index
    %c0_9 = arith.constant 0 : index
    %c0_10 = arith.constant 0 : index
    %c0_11 = arith.constant 0 : index
    %12 = vector.load %arg5[%c0_8, %c0_9, %c0_10, %c0_11] : memref<1x1x16x1xf32, #tpu.memory_space<vmem>>, vector<1x1x8x1xf32>
    %13 = vector.shape_cast %12 : vector<1x1x8x1xf32> to vector<8x1xf32>
    %14 = vector.shape_cast %11 : vector<8x1xf32> to vector<1x1x8x1xf32>
    tpu.vector_store %arg5[%c0_8, %c0_9, %c0_10, %c0_11], %14 {strides = array<i32>} : memref<1x1x16x1xf32, #tpu.memory_space<vmem>>, vector<1x1x8x1xf32>,
    %15 = arith.mulf %9, %9 : vector<8x128xf32>
    %cst_12 = arith.constant dense<0.000000e+00> : vector<8xf32>
    %16 = vector.multi_reduction <add>, %15, %cst_12 [1] : vector<8x128xf32> to vector<8xf32>
    %17 = vector.shape_cast %16 : vector<8xf32> to vector<8x1xf32>
    %c0_13 = arith.constant 0 : index
    %c0_14 = arith.constant 0 : index
    %c8 = arith.constant 8 : index
    %c0_15 = arith.constant 0 : index
    %18 = vector.load %arg5[%c0_13, %c0_14, %c8, %c0_15] : memref<1x1x16x1xf32, #tpu.memory_space<vmem>>, vector<1x1x8x1xf32>
    %19 = vector.shape_cast %18 : vector<1x1x8x1xf32> to vector<8x1xf32>
    %20 = vector.shape_cast %17 : vector<8x1xf32> to vector<1x1x8x1xf32>
    tpu.vector_store %arg5[%c0_13, %c0_14, %c8, %c0_15], %20 {strides = array<i32>} : memref<1x1x16x1xf32, #tpu.memory_space<vmem>>, vector<1x1x8x1xf32>,
    return
  }
  func.func @transform_0(%arg0: i32, %arg1: i32) -> (i32, i32, i32) {
    %c0_i32 = arith.constant 0 : i32
    %c0_i32_0 = arith.constant 0 : i32
    return %arg0, %c0_i32, %arg1 : i32, i32, i32
  }
  func.func @transform_1(%arg0: i32, %arg1: i32) -> (i32, i32) {
    %c0_i32 = arith.constant 0 : i32
    %c0_i32_0 = arith.constant 0 : i32
    %c0_i32_1 = arith.constant 0 : i32
    return %c0_i32, %c0_i32_0 : i32, i32
  }
  func.func @transform_2(%arg0: i32, %arg1: i32) -> (i32, i32, i32) {
    %c0_i32 = arith.constant 0 : i32
    %c0_i32_0 = arith.constant 0 : i32
    return %arg0, %c0_i32, %arg1 : i32, i32, i32
  }
  func.func @transform_3(%arg0: i32, %arg1: i32) -> (i32, i32, i32, i32) {
    %c0_i32 = arith.constant 0 : i32
    %c0_i32_0 = arith.constant 0 : i32
    %c0_i32_1 = arith.constant 0 : i32
    return %arg0, %arg1, %c0_i32, %c0_i32_0 : i32, i32, i32, i32
  }
}

module attributes {stable_mosaic.version = 11 : i64} {
  func.func @_conv3_stats_kernel(%arg0: i32, %arg1: i32, %arg2: memref<1x8x128xbf16, #tpu.memory_space<vmem>>, %arg3: memref<8x1xf32, #tpu.memory_space<vmem>>, %arg4: memref<8x1xf32, #tpu.memory_space<vmem>>, %arg5: memref<32x8xbf16, #tpu.memory_space<vmem>>, %arg6: memref<1x1x64x1xf32, #tpu.memory_space<vmem>>) attributes {dimension_semantics = [#tpu.dimension_semantics<parallel>, #tpu.dimension_semantics<parallel>], iteration_bounds = array<i64: 2, 2>, scalar_prefetch = 0 : i64, scratch_operands = 0 : i64, tpu.core_type = #tpu.core_type<tc>, window_params = [{transform_indices = @transform_0, window_bounds = array<i64: 1, 8, 128>}, {pipeline_mode = #tpu.pipeline_mode<synchronous>, transform_indices = @transform_1, window_bounds = array<i64: 8, 1>}, {pipeline_mode = #tpu.pipeline_mode<synchronous>, transform_indices = @transform_2, window_bounds = array<i64: 8, 1>}, {pipeline_mode = #tpu.pipeline_mode<synchronous>, transform_indices = @transform_3, window_bounds = array<i64: 32, 8>}, {transform_indices = @transform_4, window_bounds = array<i64: 1, 1, 64, 1>}]} {
    %c0 = arith.constant 0 : index
    %c0_0 = arith.constant 0 : index
    %c0_1 = arith.constant 0 : index
    %0 = vector.load %arg2[%c0, %c0_0, %c0_1] : memref<1x8x128xbf16, #tpu.memory_space<vmem>>, vector<1x8x128xbf16>
    %1 = vector.shape_cast %0 : vector<1x8x128xbf16> to vector<8x128xbf16>
    %2 = arith.extf %1 : vector<8x128xbf16> to vector<8x128xf32>
    %c0_2 = arith.constant 0 : index
    %c0_3 = arith.constant 0 : index
    %3 = vector.load %arg3[%c0_2, %c0_3] : memref<8x1xf32, #tpu.memory_space<vmem>>, vector<8x1xf32>
    %4 = vector.broadcast %3 : vector<8x1xf32> to vector<8x128xf32>
    %5 = arith.mulf %2, %4 : vector<8x128xf32>
    %c0_4 = arith.constant 0 : index
    %c0_5 = arith.constant 0 : index
    %6 = vector.load %arg4[%c0_4, %c0_5] : memref<8x1xf32, #tpu.memory_space<vmem>>, vector<8x1xf32>
    %7 = vector.broadcast %6 : vector<8x1xf32> to vector<8x128xf32>
    %8 = arith.addf %5, %7 : vector<8x128xf32>
    %cst = arith.constant 0.000000e+00 : f32
    %9 = vector.broadcast %cst : f32 to vector<8x128xf32>
    %10 = arith.maximumf %8, %9 : vector<8x128xf32>
    %c0_6 = arith.constant 0 : index
    %c0_7 = arith.constant 0 : index
    %11 = vector.load %arg5[%c0_6, %c0_7] : memref<32x8xbf16, #tpu.memory_space<vmem>>, vector<32x8xbf16>
    %12 = arith.truncf %10 : vector<8x128xf32> to vector<8x128xbf16>
    %cst_8 = arith.constant dense<0.000000e+00> : vector<32x128xf32>
    %13 = tpu.matmul %11, %12, %cst_8 {dimension_numbers = #tpu.dot_dimension_numbers<[1], [0], [0], [1], [0, 0, 1, 1], [], []>} : vector<32x8xbf16>, vector<8x128xbf16>, vector<32x128xf32> -> vector<32x128xf32>
    %cst_9 = arith.constant dense<0.000000e+00> : vector<32xf32>
    %14 = vector.multi_reduction <add>, %13, %cst_9 [1] : vector<32x128xf32> to vector<32xf32>
    %15 = vector.shape_cast %14 : vector<32xf32> to vector<32x1xf32>
    %c0_10 = arith.constant 0 : index
    %c0_11 = arith.constant 0 : index
    %c0_12 = arith.constant 0 : index
    %c0_13 = arith.constant 0 : index
    %16 = vector.load %arg6[%c0_10, %c0_11, %c0_12, %c0_13] : memref<1x1x64x1xf32, #tpu.memory_space<vmem>>, vector<1x1x32x1xf32>
    %17 = vector.shape_cast %16 : vector<1x1x32x1xf32> to vector<32x1xf32>
    %18 = vector.shape_cast %15 : vector<32x1xf32> to vector<1x1x32x1xf32>
    tpu.vector_store %arg6[%c0_10, %c0_11, %c0_12, %c0_13], %18 {strides = array<i32>} : memref<1x1x64x1xf32, #tpu.memory_space<vmem>>, vector<1x1x32x1xf32>,
    %19 = arith.mulf %13, %13 : vector<32x128xf32>
    %cst_14 = arith.constant dense<0.000000e+00> : vector<32xf32>
    %20 = vector.multi_reduction <add>, %19, %cst_14 [1] : vector<32x128xf32> to vector<32xf32>
    %21 = vector.shape_cast %20 : vector<32xf32> to vector<32x1xf32>
    %c0_15 = arith.constant 0 : index
    %c0_16 = arith.constant 0 : index
    %c32 = arith.constant 32 : index
    %c0_17 = arith.constant 0 : index
    %22 = vector.load %arg6[%c0_15, %c0_16, %c32, %c0_17] : memref<1x1x64x1xf32, #tpu.memory_space<vmem>>, vector<1x1x32x1xf32>
    %23 = vector.shape_cast %22 : vector<1x1x32x1xf32> to vector<32x1xf32>
    %24 = vector.shape_cast %21 : vector<32x1xf32> to vector<1x1x32x1xf32>
    tpu.vector_store %arg6[%c0_15, %c0_16, %c32, %c0_17], %24 {strides = array<i32>} : memref<1x1x64x1xf32, #tpu.memory_space<vmem>>, vector<1x1x32x1xf32>,
    return
  }
  func.func @transform_0(%arg0: i32, %arg1: i32) -> (i32, i32, i32) {
    %c0_i32 = arith.constant 0 : i32
    %c0_i32_0 = arith.constant 0 : i32
    return %arg0, %c0_i32, %arg1 : i32, i32, i32
  }
  func.func @transform_1(%arg0: i32, %arg1: i32) -> (i32, i32) {
    %c0_i32 = arith.constant 0 : i32
    %c0_i32_0 = arith.constant 0 : i32
    %c0_i32_1 = arith.constant 0 : i32
    return %c0_i32, %c0_i32_0 : i32, i32
  }
  func.func @transform_2(%arg0: i32, %arg1: i32) -> (i32, i32) {
    %c0_i32 = arith.constant 0 : i32
    %c0_i32_0 = arith.constant 0 : i32
    %c0_i32_1 = arith.constant 0 : i32
    return %c0_i32, %c0_i32_0 : i32, i32
  }
  func.func @transform_3(%arg0: i32, %arg1: i32) -> (i32, i32) {
    %c0_i32 = arith.constant 0 : i32
    %c0_i32_0 = arith.constant 0 : i32
    %c0_i32_1 = arith.constant 0 : i32
    return %c0_i32, %c0_i32_0 : i32, i32
  }
  func.func @transform_4(%arg0: i32, %arg1: i32) -> (i32, i32, i32, i32) {
    %c0_i32 = arith.constant 0 : i32
    %c0_i32_0 = arith.constant 0 : i32
    %c0_i32_1 = arith.constant 0 : i32
    return %arg0, %arg1, %c0_i32, %c0_i32_0 : i32, i32, i32, i32
  }
}

module attributes {stable_mosaic.version = 11 : i64} {
  func.func @kernel(%arg0: i32, %arg1: memref<1x8x256xbf16, #tpu.memory_space<vmem>>, %arg2: memref<8x1xf32, #tpu.memory_space<vmem>>, %arg3: memref<8x1xf32, #tpu.memory_space<vmem>>, %arg4: memref<8x208xbf16, #tpu.memory_space<vmem>>, %arg5: memref<1x256xi32, #tpu.memory_space<vmem>>, %arg6: memref<1x8x256xbf16, #tpu.memory_space<vmem>>, %arg7: memref<1x1x16x1xf32, #tpu.memory_space<vmem>>, %arg8: memref<208x256xbf16, #tpu.memory_space<vmem>>) attributes {dimension_semantics = [#tpu.dimension_semantics<parallel>], iteration_bounds = array<i64: 2>, scalar_prefetch = 0 : i64, scratch_operands = 1 : i64, tpu.core_type = #tpu.core_type<tc>, window_params = [{transform_indices = @transform_0, window_bounds = array<i64: 1, 8, 256>}, {pipeline_mode = #tpu.pipeline_mode<synchronous>, transform_indices = @transform_1, window_bounds = array<i64: 8, 1>}, {pipeline_mode = #tpu.pipeline_mode<synchronous>, transform_indices = @transform_2, window_bounds = array<i64: 8, 1>}, {pipeline_mode = #tpu.pipeline_mode<synchronous>, transform_indices = @transform_3, window_bounds = array<i64: 8, 208>}, {pipeline_mode = #tpu.pipeline_mode<synchronous>, transform_indices = @transform_4, window_bounds = array<i64: 1, 256>}, {transform_indices = @transform_5, window_bounds = array<i64: 1, 8, 256>}, {transform_indices = @transform_6, window_bounds = array<i64: 1, 1, 16, 1>}]} {
    %c0 = arith.constant 0 : index
    %c0_0 = arith.constant 0 : index
    %c0_1 = arith.constant 0 : index
    %0 = vector.load %arg1[%c0, %c0_0, %c0_1] : memref<1x8x256xbf16, #tpu.memory_space<vmem>>, vector<1x8x256xbf16>
    %1 = vector.shape_cast %0 : vector<1x8x256xbf16> to vector<8x256xbf16>
    %2 = arith.extf %1 : vector<8x256xbf16> to vector<8x256xf32>
    %c0_2 = arith.constant 0 : index
    %c0_3 = arith.constant 0 : index
    %3 = vector.load %arg2[%c0_2, %c0_3] : memref<8x1xf32, #tpu.memory_space<vmem>>, vector<8x1xf32>
    %4 = vector.broadcast %3 : vector<8x1xf32> to vector<8x256xf32>
    %5 = arith.mulf %2, %4 : vector<8x256xf32>
    %c0_4 = arith.constant 0 : index
    %c0_5 = arith.constant 0 : index
    %6 = vector.load %arg3[%c0_4, %c0_5] : memref<8x1xf32, #tpu.memory_space<vmem>>, vector<8x1xf32>
    %7 = vector.broadcast %6 : vector<8x1xf32> to vector<8x256xf32>
    %8 = arith.addf %5, %7 : vector<8x256xf32>
    %cst = arith.constant 0.000000e+00 : f32
    %9 = vector.broadcast %cst : f32 to vector<8x256xf32>
    %10 = arith.maximumf %8, %9 : vector<8x256xf32>
    %11 = tpu.iota {dimensions = array<i32: 1>} : vector<1x256xi32>
    %c0_6 = arith.constant 0 : index
    %c0_7 = arith.constant 0 : index
    %12 = vector.load %arg5[%c0_6, %c0_7] : memref<1x256xi32, #tpu.memory_space<vmem>>, vector<1x256xi32>
    %c34_i32 = arith.constant 34 : i32
    %13 = tpu.dynamic_rotate %10 by %c34_i32 dim 1 : vector<8x256xf32>, i32 -> vector<8x256xf32>
    %c32_i32 = arith.constant 32 : i32
    %14 = vector.broadcast %c32_i32 : i32 to vector<1x256xi32>
    %15 = arith.cmpi sge, %11, %14 : vector<1x256xi32>
    %c288_i32 = arith.constant 288 : i32
    %16 = vector.broadcast %c288_i32 : i32 to vector<1x256xi32>
    %17 = arith.cmpi slt, %11, %16 : vector<1x256xi32>
    %18 = arith.andi %15, %17 : vector<1x256xi1>
    %c2_i32 = arith.constant 2 : i32
    %19 = vector.broadcast %c2_i32 : i32 to vector<1x256xi32>
    %20 = arith.cmpi sge, %12, %19 : vector<1x256xi32>
    %21 = arith.andi %18, %20 : vector<1x256xi1>
    %c18_i32 = arith.constant 18 : i32
    %22 = vector.broadcast %c18_i32 : i32 to vector<1x256xi32>
    %23 = arith.cmpi slt, %12, %22 : vector<1x256xi32>
    %24 = arith.andi %21, %23 : vector<1x256xi1>
    %cst_8 = arith.constant 0.000000e+00 : f32
    %25 = vector.shape_cast %24 : vector<1x256xi1> to vector<1x256xi1>
    %26 = vector.broadcast %25 : vector<1x256xi1> to vector<8x256xi1>
    %27 = vector.broadcast %cst_8 : f32 to vector<8x256xf32>
    %28 = arith.select %26, %13, %27 : vector<8x256xi1>, vector<8x256xf32>
    %c33_i32 = arith.constant 33 : i32
    %29 = tpu.dynamic_rotate %10 by %c33_i32 dim 1 : vector<8x256xf32>, i32 -> vector<8x256xf32>
    %c32_i32_9 = arith.constant 32 : i32
    %30 = vector.broadcast %c32_i32_9 : i32 to vector<1x256xi32>
    %31 = arith.cmpi sge, %11, %30 : vector<1x256xi32>
    %c288_i32_10 = arith.constant 288 : i32
    %32 = vector.broadcast %c288_i32_10 : i32 to vector<1x256xi32>
    %33 = arith.cmpi slt, %11, %32 : vector<1x256xi32>
    %34 = arith.andi %31, %33 : vector<1x256xi1>
    %c1_i32 = arith.constant 1 : i32
    %35 = vector.broadcast %c1_i32 : i32 to vector<1x256xi32>
    %36 = arith.cmpi sge, %12, %35 : vector<1x256xi32>
    %37 = arith.andi %34, %36 : vector<1x256xi1>
    %c17_i32 = arith.constant 17 : i32
    %38 = vector.broadcast %c17_i32 : i32 to vector<1x256xi32>
    %39 = arith.cmpi slt, %12, %38 : vector<1x256xi32>
    %40 = arith.andi %37, %39 : vector<1x256xi1>
    %cst_11 = arith.constant 0.000000e+00 : f32
    %41 = vector.shape_cast %40 : vector<1x256xi1> to vector<1x256xi1>
    %42 = vector.broadcast %41 : vector<1x256xi1> to vector<8x256xi1>
    %43 = vector.broadcast %cst_11 : f32 to vector<8x256xf32>
    %44 = arith.select %42, %29, %43 : vector<8x256xi1>, vector<8x256xf32>
    %45 = tpu.concatenate %28, %44 in 0 : vector<8x256xf32>, vector<8x256xf32> -> vector<16x256xf32>
    %46 = arith.truncf %45 : vector<16x256xf32> to vector<16x256xbf16>
    %c0_12 = arith.constant 0 : index
    %c0_13 = arith.constant 0 : index
    %47 = vector.load %arg8[%c0_12, %c0_13] : memref<208x256xbf16, #tpu.memory_space<vmem>>, vector<16x256xbf16>
    tpu.vector_store %arg8[%c0_12, %c0_13], %46 {strides = array<i32>} : memref<208x256xbf16, #tpu.memory_space<vmem>>, vector<16x256xbf16>,
    %c32_i32_14 = arith.constant 32 : i32
    %48 = tpu.dynamic_rotate %10 by %c32_i32_14 dim 1 : vector<8x256xf32>, i32 -> vector<8x256xf32>
    %c32_i32_15 = arith.constant 32 : i32
    %49 = vector.broadcast %c32_i32_15 : i32 to vector<1x256xi32>
    %50 = arith.cmpi sge, %11, %49 : vector<1x256xi32>
    %c288_i32_16 = arith.constant 288 : i32
    %51 = vector.broadcast %c288_i32_16 : i32 to vector<1x256xi32>
    %52 = arith.cmpi slt, %11, %51 : vector<1x256xi32>
    %53 = arith.andi %50, %52 : vector<1x256xi1>
    %c0_i32 = arith.constant 0 : i32
    %54 = vector.broadcast %c0_i32 : i32 to vector<1x256xi32>
    %55 = arith.cmpi sge, %12, %54 : vector<1x256xi32>
    %56 = arith.andi %53, %55 : vector<1x256xi1>
    %c16_i32 = arith.constant 16 : i32
    %57 = vector.broadcast %c16_i32 : i32 to vector<1x256xi32>
    %58 = arith.cmpi slt, %12, %57 : vector<1x256xi32>
    %59 = arith.andi %56, %58 : vector<1x256xi1>
    %cst_17 = arith.constant 0.000000e+00 : f32
    %60 = vector.shape_cast %59 : vector<1x256xi1> to vector<1x256xi1>
    %61 = vector.broadcast %60 : vector<1x256xi1> to vector<8x256xi1>
    %62 = vector.broadcast %cst_17 : f32 to vector<8x256xf32>
    %63 = arith.select %61, %48, %62 : vector<8x256xi1>, vector<8x256xf32>
    %c31_i32 = arith.constant 31 : i32
    %64 = tpu.dynamic_rotate %10 by %c31_i32 dim 1 : vector<8x256xf32>, i32 -> vector<8x256xf32>
    %c32_i32_18 = arith.constant 32 : i32
    %65 = vector.broadcast %c32_i32_18 : i32 to vector<1x256xi32>
    %66 = arith.cmpi sge, %11, %65 : vector<1x256xi32>
    %c288_i32_19 = arith.constant 288 : i32
    %67 = vector.broadcast %c288_i32_19 : i32 to vector<1x256xi32>
    %68 = arith.cmpi slt, %11, %67 : vector<1x256xi32>
    %69 = arith.andi %66, %68 : vector<1x256xi1>
    %c-1_i32 = arith.constant -1 : i32
    %70 = vector.broadcast %c-1_i32 : i32 to vector<1x256xi32>
    %71 = arith.cmpi sge, %12, %70 : vector<1x256xi32>
    %72 = arith.andi %69, %71 : vector<1x256xi1>
    %c15_i32 = arith.constant 15 : i32
    %73 = vector.broadcast %c15_i32 : i32 to vector<1x256xi32>
    %74 = arith.cmpi slt, %12, %73 : vector<1x256xi32>
    %75 = arith.andi %72, %74 : vector<1x256xi1>
    %cst_20 = arith.constant 0.000000e+00 : f32
    %76 = vector.shape_cast %75 : vector<1x256xi1> to vector<1x256xi1>
    %77 = vector.broadcast %76 : vector<1x256xi1> to vector<8x256xi1>
    %78 = vector.broadcast %cst_20 : f32 to vector<8x256xf32>
    %79 = arith.select %77, %64, %78 : vector<8x256xi1>, vector<8x256xf32>
    %80 = tpu.concatenate %63, %79 in 0 : vector<8x256xf32>, vector<8x256xf32> -> vector<16x256xf32>
    %81 = arith.truncf %80 : vector<16x256xf32> to vector<16x256xbf16>
    %c16 = arith.constant 16 : index
    %c0_21 = arith.constant 0 : index
    %82 = vector.load %arg8[%c16, %c0_21] : memref<208x256xbf16, #tpu.memory_space<vmem>>, vector<16x256xbf16>
    tpu.vector_store %arg8[%c16, %c0_21], %81 {strides = array<i32>} : memref<208x256xbf16, #tpu.memory_space<vmem>>, vector<16x256xbf16>,
    %c30_i32 = arith.constant 30 : i32
    %83 = tpu.dynamic_rotate %10 by %c30_i32 dim 1 : vector<8x256xf32>, i32 -> vector<8x256xf32>
    %c32_i32_22 = arith.constant 32 : i32
    %84 = vector.broadcast %c32_i32_22 : i32 to vector<1x256xi32>
    %85 = arith.cmpi sge, %11, %84 : vector<1x256xi32>
    %c288_i32_23 = arith.constant 288 : i32
    %86 = vector.broadcast %c288_i32_23 : i32 to vector<1x256xi32>
    %87 = arith.cmpi slt, %11, %86 : vector<1x256xi32>
    %88 = arith.andi %85, %87 : vector<1x256xi1>
    %c-2_i32 = arith.constant -2 : i32
    %89 = vector.broadcast %c-2_i32 : i32 to vector<1x256xi32>
    %90 = arith.cmpi sge, %12, %89 : vector<1x256xi32>
    %91 = arith.andi %88, %90 : vector<1x256xi1>
    %c14_i32 = arith.constant 14 : i32
    %92 = vector.broadcast %c14_i32 : i32 to vector<1x256xi32>
    %93 = arith.cmpi slt, %12, %92 : vector<1x256xi32>
    %94 = arith.andi %91, %93 : vector<1x256xi1>
    %cst_24 = arith.constant 0.000000e+00 : f32
    %95 = vector.shape_cast %94 : vector<1x256xi1> to vector<1x256xi1>
    %96 = vector.broadcast %95 : vector<1x256xi1> to vector<8x256xi1>
    %97 = vector.broadcast %cst_24 : f32 to vector<8x256xf32>
    %98 = arith.select %96, %83, %97 : vector<8x256xi1>, vector<8x256xf32>
    %c18_i32_25 = arith.constant 18 : i32
    %99 = tpu.dynamic_rotate %10 by %c18_i32_25 dim 1 : vector<8x256xf32>, i32 -> vector<8x256xf32>
    %c16_i32_26 = arith.constant 16 : i32
    %100 = vector.broadcast %c16_i32_26 : i32 to vector<1x256xi32>
    %101 = arith.cmpi sge, %11, %100 : vector<1x256xi32>
    %c272_i32 = arith.constant 272 : i32
    %102 = vector.broadcast %c272_i32 : i32 to vector<1x256xi32>
    %103 = arith.cmpi slt, %11, %102 : vector<1x256xi32>
    %104 = arith.andi %101, %103 : vector<1x256xi1>
    %c2_i32_27 = arith.constant 2 : i32
    %105 = vector.broadcast %c2_i32_27 : i32 to vector<1x256xi32>
    %106 = arith.cmpi sge, %12, %105 : vector<1x256xi32>
    %107 = arith.andi %104, %106 : vector<1x256xi1>
    %c18_i32_28 = arith.constant 18 : i32
    %108 = vector.broadcast %c18_i32_28 : i32 to vector<1x256xi32>
    %109 = arith.cmpi slt, %12, %108 : vector<1x256xi32>
    %110 = arith.andi %107, %109 : vector<1x256xi1>
    %cst_29 = arith.constant 0.000000e+00 : f32
    %111 = vector.shape_cast %110 : vector<1x256xi1> to vector<1x256xi1>
    %112 = vector.broadcast %111 : vector<1x256xi1> to vector<8x256xi1>
    %113 = vector.broadcast %cst_29 : f32 to vector<8x256xf32>
    %114 = arith.select %112, %99, %113 : vector<8x256xi1>, vector<8x256xf32>
    %115 = tpu.concatenate %98, %114 in 0 : vector<8x256xf32>, vector<8x256xf32> -> vector<16x256xf32>
    %116 = arith.truncf %115 : vector<16x256xf32> to vector<16x256xbf16>
    %c32 = arith.constant 32 : index
    %c0_30 = arith.constant 0 : index
    %117 = vector.load %arg8[%c32, %c0_30] : memref<208x256xbf16, #tpu.memory_space<vmem>>, vector<16x256xbf16>
    tpu.vector_store %arg8[%c32, %c0_30], %116 {strides = array<i32>} : memref<208x256xbf16, #tpu.memory_space<vmem>>, vector<16x256xbf16>,
    %c17_i32_31 = arith.constant 17 : i32
    %118 = tpu.dynamic_rotate %10 by %c17_i32_31 dim 1 : vector<8x256xf32>, i32 -> vector<8x256xf32>
    %c16_i32_32 = arith.constant 16 : i32
    %119 = vector.broadcast %c16_i32_32 : i32 to vector<1x256xi32>
    %120 = arith.cmpi sge, %11, %119 : vector<1x256xi32>
    %c272_i32_33 = arith.constant 272 : i32
    %121 = vector.broadcast %c272_i32_33 : i32 to vector<1x256xi32>
    %122 = arith.cmpi slt, %11, %121 : vector<1x256xi32>
    %123 = arith.andi %120, %122 : vector<1x256xi1>
    %c1_i32_34 = arith.constant 1 : i32
    %124 = vector.broadcast %c1_i32_34 : i32 to vector<1x256xi32>
    %125 = arith.cmpi sge, %12, %124 : vector<1x256xi32>
    %126 = arith.andi %123, %125 : vector<1x256xi1>
    %c17_i32_35 = arith.constant 17 : i32
    %127 = vector.broadcast %c17_i32_35 : i32 to vector<1x256xi32>
    %128 = arith.cmpi slt, %12, %127 : vector<1x256xi32>
    %129 = arith.andi %126, %128 : vector<1x256xi1>
    %cst_36 = arith.constant 0.000000e+00 : f32
    %130 = vector.shape_cast %129 : vector<1x256xi1> to vector<1x256xi1>
    %131 = vector.broadcast %130 : vector<1x256xi1> to vector<8x256xi1>
    %132 = vector.broadcast %cst_36 : f32 to vector<8x256xf32>
    %133 = arith.select %131, %118, %132 : vector<8x256xi1>, vector<8x256xf32>
    %c16_i32_37 = arith.constant 16 : i32
    %134 = tpu.dynamic_rotate %10 by %c16_i32_37 dim 1 : vector<8x256xf32>, i32 -> vector<8x256xf32>
    %c16_i32_38 = arith.constant 16 : i32
    %135 = vector.broadcast %c16_i32_38 : i32 to vector<1x256xi32>
    %136 = arith.cmpi sge, %11, %135 : vector<1x256xi32>
    %c272_i32_39 = arith.constant 272 : i32
    %137 = vector.broadcast %c272_i32_39 : i32 to vector<1x256xi32>
    %138 = arith.cmpi slt, %11, %137 : vector<1x256xi32>
    %139 = arith.andi %136, %138 : vector<1x256xi1>
    %c0_i32_40 = arith.constant 0 : i32
    %140 = vector.broadcast %c0_i32_40 : i32 to vector<1x256xi32>
    %141 = arith.cmpi sge, %12, %140 : vector<1x256xi32>
    %142 = arith.andi %139, %141 : vector<1x256xi1>
    %c16_i32_41 = arith.constant 16 : i32
    %143 = vector.broadcast %c16_i32_41 : i32 to vector<1x256xi32>
    %144 = arith.cmpi slt, %12, %143 : vector<1x256xi32>
    %145 = arith.andi %142, %144 : vector<1x256xi1>
    %cst_42 = arith.constant 0.000000e+00 : f32
    %146 = vector.shape_cast %145 : vector<1x256xi1> to vector<1x256xi1>
    %147 = vector.broadcast %146 : vector<1x256xi1> to vector<8x256xi1>
    %148 = vector.broadcast %cst_42 : f32 to vector<8x256xf32>
    %149 = arith.select %147, %134, %148 : vector<8x256xi1>, vector<8x256xf32>
    %150 = tpu.concatenate %133, %149 in 0 : vector<8x256xf32>, vector<8x256xf32> -> vector<16x256xf32>
    %151 = arith.truncf %150 : vector<16x256xf32> to vector<16x256xbf16>
    %c48 = arith.constant 48 : index
    %c0_43 = arith.constant 0 : index
    %152 = vector.load %arg8[%c48, %c0_43] : memref<208x256xbf16, #tpu.memory_space<vmem>>, vector<16x256xbf16>
    tpu.vector_store %arg8[%c48, %c0_43], %151 {strides = array<i32>} : memref<208x256xbf16, #tpu.memory_space<vmem>>, vector<16x256xbf16>,
    %c15_i32_44 = arith.constant 15 : i32
    %153 = tpu.dynamic_rotate %10 by %c15_i32_44 dim 1 : vector<8x256xf32>, i32 -> vector<8x256xf32>
    %c16_i32_45 = arith.constant 16 : i32
    %154 = vector.broadcast %c16_i32_45 : i32 to vector<1x256xi32>
    %155 = arith.cmpi sge, %11, %154 : vector<1x256xi32>
    %c272_i32_46 = arith.constant 272 : i32
    %156 = vector.broadcast %c272_i32_46 : i32 to vector<1x256xi32>
    %157 = arith.cmpi slt, %11, %156 : vector<1x256xi32>
    %158 = arith.andi %155, %157 : vector<1x256xi1>
    %c-1_i32_47 = arith.constant -1 : i32
    %159 = vector.broadcast %c-1_i32_47 : i32 to vector<1x256xi32>
    %160 = arith.cmpi sge, %12, %159 : vector<1x256xi32>
    %161 = arith.andi %158, %160 : vector<1x256xi1>
    %c15_i32_48 = arith.constant 15 : i32
    %162 = vector.broadcast %c15_i32_48 : i32 to vector<1x256xi32>
    %163 = arith.cmpi slt, %12, %162 : vector<1x256xi32>
    %164 = arith.andi %161, %163 : vector<1x256xi1>
    %cst_49 = arith.constant 0.000000e+00 : f32
    %165 = vector.shape_cast %164 : vector<1x256xi1> to vector<1x256xi1>
    %166 = vector.broadcast %165 : vector<1x256xi1> to vector<8x256xi1>
    %167 = vector.broadcast %cst_49 : f32 to vector<8x256xf32>
    %168 = arith.select %166, %153, %167 : vector<8x256xi1>, vector<8x256xf32>
    %c14_i32_50 = arith.constant 14 : i32
    %169 = tpu.dynamic_rotate %10 by %c14_i32_50 dim 1 : vector<8x256xf32>, i32 -> vector<8x256xf32>
    %c16_i32_51 = arith.constant 16 : i32
    %170 = vector.broadcast %c16_i32_51 : i32 to vector<1x256xi32>
    %171 = arith.cmpi sge, %11, %170 : vector<1x256xi32>
    %c272_i32_52 = arith.constant 272 : i32
    %172 = vector.broadcast %c272_i32_52 : i32 to vector<1x256xi32>
    %173 = arith.cmpi slt, %11, %172 : vector<1x256xi32>
    %174 = arith.andi %171, %173 : vector<1x256xi1>
    %c-2_i32_53 = arith.constant -2 : i32
    %175 = vector.broadcast %c-2_i32_53 : i32 to vector<1x256xi32>
    %176 = arith.cmpi sge, %12, %175 : vector<1x256xi32>
    %177 = arith.andi %174, %176 : vector<1x256xi1>
    %c14_i32_54 = arith.constant 14 : i32
    %178 = vector.broadcast %c14_i32_54 : i32 to vector<1x256xi32>
    %179 = arith.cmpi slt, %12, %178 : vector<1x256xi32>
    %180 = arith.andi %177, %179 : vector<1x256xi1>
    %cst_55 = arith.constant 0.000000e+00 : f32
    %181 = vector.shape_cast %180 : vector<1x256xi1> to vector<1x256xi1>
    %182 = vector.broadcast %181 : vector<1x256xi1> to vector<8x256xi1>
    %183 = vector.broadcast %cst_55 : f32 to vector<8x256xf32>
    %184 = arith.select %182, %169, %183 : vector<8x256xi1>, vector<8x256xf32>
    %185 = tpu.concatenate %168, %184 in 0 : vector<8x256xf32>, vector<8x256xf32> -> vector<16x256xf32>
    %186 = arith.truncf %185 : vector<16x256xf32> to vector<16x256xbf16>
    %c64 = arith.constant 64 : index
    %c0_56 = arith.constant 0 : index
    %187 = vector.load %arg8[%c64, %c0_56] : memref<208x256xbf16, #tpu.memory_space<vmem>>, vector<16x256xbf16>
    tpu.vector_store %arg8[%c64, %c0_56], %186 {strides = array<i32>} : memref<208x256xbf16, #tpu.memory_space<vmem>>, vector<16x256xbf16>,
    %c2_i32_57 = arith.constant 2 : i32
    %188 = tpu.dynamic_rotate %10 by %c2_i32_57 dim 1 : vector<8x256xf32>, i32 -> vector<8x256xf32>
    %c0_i32_58 = arith.constant 0 : i32
    %189 = vector.broadcast %c0_i32_58 : i32 to vector<1x256xi32>
    %190 = arith.cmpi sge, %11, %189 : vector<1x256xi32>
    %c256_i32 = arith.constant 256 : i32
    %191 = vector.broadcast %c256_i32 : i32 to vector<1x256xi32>
    %192 = arith.cmpi slt, %11, %191 : vector<1x256xi32>
    %193 = arith.andi %190, %192 : vector<1x256xi1>
    %c2_i32_59 = arith.constant 2 : i32
    %194 = vector.broadcast %c2_i32_59 : i32 to vector<1x256xi32>
    %195 = arith.cmpi sge, %12, %194 : vector<1x256xi32>
    %196 = arith.andi %193, %195 : vector<1x256xi1>
    %c18_i32_60 = arith.constant 18 : i32
    %197 = vector.broadcast %c18_i32_60 : i32 to vector<1x256xi32>
    %198 = arith.cmpi slt, %12, %197 : vector<1x256xi32>
    %199 = arith.andi %196, %198 : vector<1x256xi1>
    %cst_61 = arith.constant 0.000000e+00 : f32
    %200 = vector.shape_cast %199 : vector<1x256xi1> to vector<1x256xi1>
    %201 = vector.broadcast %200 : vector<1x256xi1> to vector<8x256xi1>
    %202 = vector.broadcast %cst_61 : f32 to vector<8x256xf32>
    %203 = arith.select %201, %188, %202 : vector<8x256xi1>, vector<8x256xf32>
    %c1_i32_62 = arith.constant 1 : i32
    %204 = tpu.dynamic_rotate %10 by %c1_i32_62 dim 1 : vector<8x256xf32>, i32 -> vector<8x256xf32>
    %c0_i32_63 = arith.constant 0 : i32
    %205 = vector.broadcast %c0_i32_63 : i32 to vector<1x256xi32>
    %206 = arith.cmpi sge, %11, %205 : vector<1x256xi32>
    %c256_i32_64 = arith.constant 256 : i32
    %207 = vector.broadcast %c256_i32_64 : i32 to vector<1x256xi32>
    %208 = arith.cmpi slt, %11, %207 : vector<1x256xi32>
    %209 = arith.andi %206, %208 : vector<1x256xi1>
    %c1_i32_65 = arith.constant 1 : i32
    %210 = vector.broadcast %c1_i32_65 : i32 to vector<1x256xi32>
    %211 = arith.cmpi sge, %12, %210 : vector<1x256xi32>
    %212 = arith.andi %209, %211 : vector<1x256xi1>
    %c17_i32_66 = arith.constant 17 : i32
    %213 = vector.broadcast %c17_i32_66 : i32 to vector<1x256xi32>
    %214 = arith.cmpi slt, %12, %213 : vector<1x256xi32>
    %215 = arith.andi %212, %214 : vector<1x256xi1>
    %cst_67 = arith.constant 0.000000e+00 : f32
    %216 = vector.shape_cast %215 : vector<1x256xi1> to vector<1x256xi1>
    %217 = vector.broadcast %216 : vector<1x256xi1> to vector<8x256xi1>
    %218 = vector.broadcast %cst_67 : f32 to vector<8x256xf32>
    %219 = arith.select %217, %204, %218 : vector<8x256xi1>, vector<8x256xf32>
    %220 = tpu.concatenate %203, %219 in 0 : vector<8x256xf32>, vector<8x256xf32> -> vector<16x256xf32>
    %221 = arith.truncf %220 : vector<16x256xf32> to vector<16x256xbf16>
    %c80 = arith.constant 80 : index
    %c0_68 = arith.constant 0 : index
    %222 = vector.load %arg8[%c80, %c0_68] : memref<208x256xbf16, #tpu.memory_space<vmem>>, vector<16x256xbf16>
    tpu.vector_store %arg8[%c80, %c0_68], %221 {strides = array<i32>} : memref<208x256xbf16, #tpu.memory_space<vmem>>, vector<16x256xbf16>,
    %c255_i32 = arith.constant 255 : i32
    %223 = tpu.dynamic_rotate %10 by %c255_i32 dim 1 : vector<8x256xf32>, i32 -> vector<8x256xf32>
    %c0_i32_69 = arith.constant 0 : i32
    %224 = vector.broadcast %c0_i32_69 : i32 to vector<1x256xi32>
    %225 = arith.cmpi sge, %11, %224 : vector<1x256xi32>
    %c256_i32_70 = arith.constant 256 : i32
    %226 = vector.broadcast %c256_i32_70 : i32 to vector<1x256xi32>
    %227 = arith.cmpi slt, %11, %226 : vector<1x256xi32>
    %228 = arith.andi %225, %227 : vector<1x256xi1>
    %c-1_i32_71 = arith.constant -1 : i32
    %229 = vector.broadcast %c-1_i32_71 : i32 to vector<1x256xi32>
    %230 = arith.cmpi sge, %12, %229 : vector<1x256xi32>
    %231 = arith.andi %228, %230 : vector<1x256xi1>
    %c15_i32_72 = arith.constant 15 : i32
    %232 = vector.broadcast %c15_i32_72 : i32 to vector<1x256xi32>
    %233 = arith.cmpi slt, %12, %232 : vector<1x256xi32>
    %234 = arith.andi %231, %233 : vector<1x256xi1>
    %cst_73 = arith.constant 0.000000e+00 : f32
    %235 = vector.shape_cast %234 : vector<1x256xi1> to vector<1x256xi1>
    %236 = vector.broadcast %235 : vector<1x256xi1> to vector<8x256xi1>
    %237 = vector.broadcast %cst_73 : f32 to vector<8x256xf32>
    %238 = arith.select %236, %223, %237 : vector<8x256xi1>, vector<8x256xf32>
    %239 = tpu.concatenate %10, %238 in 0 : vector<8x256xf32>, vector<8x256xf32> -> vector<16x256xf32>
    %240 = arith.truncf %239 : vector<16x256xf32> to vector<16x256xbf16>
    %c96 = arith.constant 96 : index
    %c0_74 = arith.constant 0 : index
    %241 = vector.load %arg8[%c96, %c0_74] : memref<208x256xbf16, #tpu.memory_space<vmem>>, vector<16x256xbf16>
    tpu.vector_store %arg8[%c96, %c0_74], %240 {strides = array<i32>} : memref<208x256xbf16, #tpu.memory_space<vmem>>, vector<16x256xbf16>,
    %c254_i32 = arith.constant 254 : i32
    %242 = tpu.dynamic_rotate %10 by %c254_i32 dim 1 : vector<8x256xf32>, i32 -> vector<8x256xf32>
    %c0_i32_75 = arith.constant 0 : i32
    %243 = vector.broadcast %c0_i32_75 : i32 to vector<1x256xi32>
    %244 = arith.cmpi sge, %11, %243 : vector<1x256xi32>
    %c256_i32_76 = arith.constant 256 : i32
    %245 = vector.broadcast %c256_i32_76 : i32 to vector<1x256xi32>
    %246 = arith.cmpi slt, %11, %245 : vector<1x256xi32>
    %247 = arith.andi %244, %246 : vector<1x256xi1>
    %c-2_i32_77 = arith.constant -2 : i32
    %248 = vector.broadcast %c-2_i32_77 : i32 to vector<1x256xi32>
    %249 = arith.cmpi sge, %12, %248 : vector<1x256xi32>
    %250 = arith.andi %247, %249 : vector<1x256xi1>
    %c14_i32_78 = arith.constant 14 : i32
    %251 = vector.broadcast %c14_i32_78 : i32 to vector<1x256xi32>
    %252 = arith.cmpi slt, %12, %251 : vector<1x256xi32>
    %253 = arith.andi %250, %252 : vector<1x256xi1>
    %cst_79 = arith.constant 0.000000e+00 : f32
    %254 = vector.shape_cast %253 : vector<1x256xi1> to vector<1x256xi1>
    %255 = vector.broadcast %254 : vector<1x256xi1> to vector<8x256xi1>
    %256 = vector.broadcast %cst_79 : f32 to vector<8x256xf32>
    %257 = arith.select %255, %242, %256 : vector<8x256xi1>, vector<8x256xf32>
    %c242_i32 = arith.constant 242 : i32
    %258 = tpu.dynamic_rotate %10 by %c242_i32 dim 1 : vector<8x256xf32>, i32 -> vector<8x256xf32>
    %c-16_i32 = arith.constant -16 : i32
    %259 = vector.broadcast %c-16_i32 : i32 to vector<1x256xi32>
    %260 = arith.cmpi sge, %11, %259 : vector<1x256xi32>
    %c240_i32 = arith.constant 240 : i32
    %261 = vector.broadcast %c240_i32 : i32 to vector<1x256xi32>
    %262 = arith.cmpi slt, %11, %261 : vector<1x256xi32>
    %263 = arith.andi %260, %262 : vector<1x256xi1>
    %c2_i32_80 = arith.constant 2 : i32
    %264 = vector.broadcast %c2_i32_80 : i32 to vector<1x256xi32>
    %265 = arith.cmpi sge, %12, %264 : vector<1x256xi32>
    %266 = arith.andi %263, %265 : vector<1x256xi1>
    %c18_i32_81 = arith.constant 18 : i32
    %267 = vector.broadcast %c18_i32_81 : i32 to vector<1x256xi32>
    %268 = arith.cmpi slt, %12, %267 : vector<1x256xi32>
    %269 = arith.andi %266, %268 : vector<1x256xi1>
    %cst_82 = arith.constant 0.000000e+00 : f32
    %270 = vector.shape_cast %269 : vector<1x256xi1> to vector<1x256xi1>
    %271 = vector.broadcast %270 : vector<1x256xi1> to vector<8x256xi1>
    %272 = vector.broadcast %cst_82 : f32 to vector<8x256xf32>
    %273 = arith.select %271, %258, %272 : vector<8x256xi1>, vector<8x256xf32>
    %274 = tpu.concatenate %257, %273 in 0 : vector<8x256xf32>, vector<8x256xf32> -> vector<16x256xf32>
    %275 = arith.truncf %274 : vector<16x256xf32> to vector<16x256xbf16>
    %c112 = arith.constant 112 : index
    %c0_83 = arith.constant 0 : index
    %276 = vector.load %arg8[%c112, %c0_83] : memref<208x256xbf16, #tpu.memory_space<vmem>>, vector<16x256xbf16>
    tpu.vector_store %arg8[%c112, %c0_83], %275 {strides = array<i32>} : memref<208x256xbf16, #tpu.memory_space<vmem>>, vector<16x256xbf16>,
    %c241_i32 = arith.constant 241 : i32
    %277 = tpu.dynamic_rotate %10 by %c241_i32 dim 1 : vector<8x256xf32>, i32 -> vector<8x256xf32>
    %c-16_i32_84 = arith.constant -16 : i32
    %278 = vector.broadcast %c-16_i32_84 : i32 to vector<1x256xi32>
    %279 = arith.cmpi sge, %11, %278 : vector<1x256xi32>
    %c240_i32_85 = arith.constant 240 : i32
    %280 = vector.broadcast %c240_i32_85 : i32 to vector<1x256xi32>
    %281 = arith.cmpi slt, %11, %280 : vector<1x256xi32>
    %282 = arith.andi %279, %281 : vector<1x256xi1>
    %c1_i32_86 = arith.constant 1 : i32
    %283 = vector.broadcast %c1_i32_86 : i32 to vector<1x256xi32>
    %284 = arith.cmpi sge, %12, %283 : vector<1x256xi32>
    %285 = arith.andi %282, %284 : vector<1x256xi1>
    %c17_i32_87 = arith.constant 17 : i32
    %286 = vector.broadcast %c17_i32_87 : i32 to vector<1x256xi32>
    %287 = arith.cmpi slt, %12, %286 : vector<1x256xi32>
    %288 = arith.andi %285, %287 : vector<1x256xi1>
    %cst_88 = arith.constant 0.000000e+00 : f32
    %289 = vector.shape_cast %288 : vector<1x256xi1> to vector<1x256xi1>
    %290 = vector.broadcast %289 : vector<1x256xi1> to vector<8x256xi1>
    %291 = vector.broadcast %cst_88 : f32 to vector<8x256xf32>
    %292 = arith.select %290, %277, %291 : vector<8x256xi1>, vector<8x256xf32>
    %c240_i32_89 = arith.constant 240 : i32
    %293 = tpu.dynamic_rotate %10 by %c240_i32_89 dim 1 : vector<8x256xf32>, i32 -> vector<8x256xf32>
    %c-16_i32_90 = arith.constant -16 : i32
    %294 = vector.broadcast %c-16_i32_90 : i32 to vector<1x256xi32>
    %295 = arith.cmpi sge, %11, %294 : vector<1x256xi32>
    %c240_i32_91 = arith.constant 240 : i32
    %296 = vector.broadcast %c240_i32_91 : i32 to vector<1x256xi32>
    %297 = arith.cmpi slt, %11, %296 : vector<1x256xi32>
    %298 = arith.andi %295, %297 : vector<1x256xi1>
    %c0_i32_92 = arith.constant 0 : i32
    %299 = vector.broadcast %c0_i32_92 : i32 to vector<1x256xi32>
    %300 = arith.cmpi sge, %12, %299 : vector<1x256xi32>
    %301 = arith.andi %298, %300 : vector<1x256xi1>
    %c16_i32_93 = arith.constant 16 : i32
    %302 = vector.broadcast %c16_i32_93 : i32 to vector<1x256xi32>
    %303 = arith.cmpi slt, %12, %302 : vector<1x256xi32>
    %304 = arith.andi %301, %303 : vector<1x256xi1>
    %cst_94 = arith.constant 0.000000e+00 : f32
    %305 = vector.shape_cast %304 : vector<1x256xi1> to vector<1x256xi1>
    %306 = vector.broadcast %305 : vector<1x256xi1> to vector<8x256xi1>
    %307 = vector.broadcast %cst_94 : f32 to vector<8x256xf32>
    %308 = arith.select %306, %293, %307 : vector<8x256xi1>, vector<8x256xf32>
    %309 = tpu.concatenate %292, %308 in 0 : vector<8x256xf32>, vector<8x256xf32> -> vector<16x256xf32>
    %310 = arith.truncf %309 : vector<16x256xf32> to vector<16x256xbf16>
    %c128 = arith.constant 128 : index
    %c0_95 = arith.constant 0 : index
    %311 = vector.load %arg8[%c128, %c0_95] : memref<208x256xbf16, #tpu.memory_space<vmem>>, vector<16x256xbf16>
    tpu.vector_store %arg8[%c128, %c0_95], %310 {strides = array<i32>} : memref<208x256xbf16, #tpu.memory_space<vmem>>, vector<16x256xbf16>,
    %c239_i32 = arith.constant 239 : i32
    %312 = tpu.dynamic_rotate %10 by %c239_i32 dim 1 : vector<8x256xf32>, i32 -> vector<8x256xf32>
    %c-16_i32_96 = arith.constant -16 : i32
    %313 = vector.broadcast %c-16_i32_96 : i32 to vector<1x256xi32>
    %314 = arith.cmpi sge, %11, %313 : vector<1x256xi32>
    %c240_i32_97 = arith.constant 240 : i32
    %315 = vector.broadcast %c240_i32_97 : i32 to vector<1x256xi32>
    %316 = arith.cmpi slt, %11, %315 : vector<1x256xi32>
    %317 = arith.andi %314, %316 : vector<1x256xi1>
    %c-1_i32_98 = arith.constant -1 : i32
    %318 = vector.broadcast %c-1_i32_98 : i32 to vector<1x256xi32>
    %319 = arith.cmpi sge, %12, %318 : vector<1x256xi32>
    %320 = arith.andi %317, %319 : vector<1x256xi1>
    %c15_i32_99 = arith.constant 15 : i32
    %321 = vector.broadcast %c15_i32_99 : i32 to vector<1x256xi32>
    %322 = arith.cmpi slt, %12, %321 : vector<1x256xi32>
    %323 = arith.andi %320, %322 : vector<1x256xi1>
    %cst_100 = arith.constant 0.000000e+00 : f32
    %324 = vector.shape_cast %323 : vector<1x256xi1> to vector<1x256xi1>
    %325 = vector.broadcast %324 : vector<1x256xi1> to vector<8x256xi1>
    %326 = vector.broadcast %cst_100 : f32 to vector<8x256xf32>
    %327 = arith.select %325, %312, %326 : vector<8x256xi1>, vector<8x256xf32>
    %c238_i32 = arith.constant 238 : i32
    %328 = tpu.dynamic_rotate %10 by %c238_i32 dim 1 : vector<8x256xf32>, i32 -> vector<8x256xf32>
    %c-16_i32_101 = arith.constant -16 : i32
    %329 = vector.broadcast %c-16_i32_101 : i32 to vector<1x256xi32>
    %330 = arith.cmpi sge, %11, %329 : vector<1x256xi32>
    %c240_i32_102 = arith.constant 240 : i32
    %331 = vector.broadcast %c240_i32_102 : i32 to vector<1x256xi32>
    %332 = arith.cmpi slt, %11, %331 : vector<1x256xi32>
    %333 = arith.andi %330, %332 : vector<1x256xi1>
    %c-2_i32_103 = arith.constant -2 : i32
    %334 = vector.broadcast %c-2_i32_103 : i32 to vector<1x256xi32>
    %335 = arith.cmpi sge, %12, %334 : vector<1x256xi32>
    %336 = arith.andi %333, %335 : vector<1x256xi1>
    %c14_i32_104 = arith.constant 14 : i32
    %337 = vector.broadcast %c14_i32_104 : i32 to vector<1x256xi32>
    %338 = arith.cmpi slt, %12, %337 : vector<1x256xi32>
    %339 = arith.andi %336, %338 : vector<1x256xi1>
    %cst_105 = arith.constant 0.000000e+00 : f32
    %340 = vector.shape_cast %339 : vector<1x256xi1> to vector<1x256xi1>
    %341 = vector.broadcast %340 : vector<1x256xi1> to vector<8x256xi1>
    %342 = vector.broadcast %cst_105 : f32 to vector<8x256xf32>
    %343 = arith.select %341, %328, %342 : vector<8x256xi1>, vector<8x256xf32>
    %344 = tpu.concatenate %327, %343 in 0 : vector<8x256xf32>, vector<8x256xf32> -> vector<16x256xf32>
    %345 = arith.truncf %344 : vector<16x256xf32> to vector<16x256xbf16>
    %c144 = arith.constant 144 : index
    %c0_106 = arith.constant 0 : index
    %346 = vector.load %arg8[%c144, %c0_106] : memref<208x256xbf16, #tpu.memory_space<vmem>>, vector<16x256xbf16>
    tpu.vector_store %arg8[%c144, %c0_106], %345 {strides = array<i32>} : memref<208x256xbf16, #tpu.memory_space<vmem>>, vector<16x256xbf16>,
    %c226_i32 = arith.constant 226 : i32
    %347 = tpu.dynamic_rotate %10 by %c226_i32 dim 1 : vector<8x256xf32>, i32 -> vector<8x256xf32>
    %c-32_i32 = arith.constant -32 : i32
    %348 = vector.broadcast %c-32_i32 : i32 to vector<1x256xi32>
    %349 = arith.cmpi sge, %11, %348 : vector<1x256xi32>
    %c224_i32 = arith.constant 224 : i32
    %350 = vector.broadcast %c224_i32 : i32 to vector<1x256xi32>
    %351 = arith.cmpi slt, %11, %350 : vector<1x256xi32>
    %352 = arith.andi %349, %351 : vector<1x256xi1>
    %c2_i32_107 = arith.constant 2 : i32
    %353 = vector.broadcast %c2_i32_107 : i32 to vector<1x256xi32>
    %354 = arith.cmpi sge, %12, %353 : vector<1x256xi32>
    %355 = arith.andi %352, %354 : vector<1x256xi1>
    %c18_i32_108 = arith.constant 18 : i32
    %356 = vector.broadcast %c18_i32_108 : i32 to vector<1x256xi32>
    %357 = arith.cmpi slt, %12, %356 : vector<1x256xi32>
    %358 = arith.andi %355, %357 : vector<1x256xi1>
    %cst_109 = arith.constant 0.000000e+00 : f32
    %359 = vector.shape_cast %358 : vector<1x256xi1> to vector<1x256xi1>
    %360 = vector.broadcast %359 : vector<1x256xi1> to vector<8x256xi1>
    %361 = vector.broadcast %cst_109 : f32 to vector<8x256xf32>
    %362 = arith.select %360, %347, %361 : vector<8x256xi1>, vector<8x256xf32>
    %c225_i32 = arith.constant 225 : i32
    %363 = tpu.dynamic_rotate %10 by %c225_i32 dim 1 : vector<8x256xf32>, i32 -> vector<8x256xf32>
    %c-32_i32_110 = arith.constant -32 : i32
    %364 = vector.broadcast %c-32_i32_110 : i32 to vector<1x256xi32>
    %365 = arith.cmpi sge, %11, %364 : vector<1x256xi32>
    %c224_i32_111 = arith.constant 224 : i32
    %366 = vector.broadcast %c224_i32_111 : i32 to vector<1x256xi32>
    %367 = arith.cmpi slt, %11, %366 : vector<1x256xi32>
    %368 = arith.andi %365, %367 : vector<1x256xi1>
    %c1_i32_112 = arith.constant 1 : i32
    %369 = vector.broadcast %c1_i32_112 : i32 to vector<1x256xi32>
    %370 = arith.cmpi sge, %12, %369 : vector<1x256xi32>
    %371 = arith.andi %368, %370 : vector<1x256xi1>
    %c17_i32_113 = arith.constant 17 : i32
    %372 = vector.broadcast %c17_i32_113 : i32 to vector<1x256xi32>
    %373 = arith.cmpi slt, %12, %372 : vector<1x256xi32>
    %374 = arith.andi %371, %373 : vector<1x256xi1>
    %cst_114 = arith.constant 0.000000e+00 : f32
    %375 = vector.shape_cast %374 : vector<1x256xi1> to vector<1x256xi1>
    %376 = vector.broadcast %375 : vector<1x256xi1> to vector<8x256xi1>
    %377 = vector.broadcast %cst_114 : f32 to vector<8x256xf32>
    %378 = arith.select %376, %363, %377 : vector<8x256xi1>, vector<8x256xf32>
    %379 = tpu.concatenate %362, %378 in 0 : vector<8x256xf32>, vector<8x256xf32> -> vector<16x256xf32>
    %380 = arith.truncf %379 : vector<16x256xf32> to vector<16x256xbf16>
    %c160 = arith.constant 160 : index
    %c0_115 = arith.constant 0 : index
    %381 = vector.load %arg8[%c160, %c0_115] : memref<208x256xbf16, #tpu.memory_space<vmem>>, vector<16x256xbf16>
    tpu.vector_store %arg8[%c160, %c0_115], %380 {strides = array<i32>} : memref<208x256xbf16, #tpu.memory_space<vmem>>, vector<16x256xbf16>,
    %c224_i32_116 = arith.constant 224 : i32
    %382 = tpu.dynamic_rotate %10 by %c224_i32_116 dim 1 : vector<8x256xf32>, i32 -> vector<8x256xf32>
    %c-32_i32_117 = arith.constant -32 : i32
    %383 = vector.broadcast %c-32_i32_117 : i32 to vector<1x256xi32>
    %384 = arith.cmpi sge, %11, %383 : vector<1x256xi32>
    %c224_i32_118 = arith.constant 224 : i32
    %385 = vector.broadcast %c224_i32_118 : i32 to vector<1x256xi32>
    %386 = arith.cmpi slt, %11, %385 : vector<1x256xi32>
    %387 = arith.andi %384, %386 : vector<1x256xi1>
    %c0_i32_119 = arith.constant 0 : i32
    %388 = vector.broadcast %c0_i32_119 : i32 to vector<1x256xi32>
    %389 = arith.cmpi sge, %12, %388 : vector<1x256xi32>
    %390 = arith.andi %387, %389 : vector<1x256xi1>
    %c16_i32_120 = arith.constant 16 : i32
    %391 = vector.broadcast %c16_i32_120 : i32 to vector<1x256xi32>
    %392 = arith.cmpi slt, %12, %391 : vector<1x256xi32>
    %393 = arith.andi %390, %392 : vector<1x256xi1>
    %cst_121 = arith.constant 0.000000e+00 : f32
    %394 = vector.shape_cast %393 : vector<1x256xi1> to vector<1x256xi1>
    %395 = vector.broadcast %394 : vector<1x256xi1> to vector<8x256xi1>
    %396 = vector.broadcast %cst_121 : f32 to vector<8x256xf32>
    %397 = arith.select %395, %382, %396 : vector<8x256xi1>, vector<8x256xf32>
    %c223_i32 = arith.constant 223 : i32
    %398 = tpu.dynamic_rotate %10 by %c223_i32 dim 1 : vector<8x256xf32>, i32 -> vector<8x256xf32>
    %c-32_i32_122 = arith.constant -32 : i32
    %399 = vector.broadcast %c-32_i32_122 : i32 to vector<1x256xi32>
    %400 = arith.cmpi sge, %11, %399 : vector<1x256xi32>
    %c224_i32_123 = arith.constant 224 : i32
    %401 = vector.broadcast %c224_i32_123 : i32 to vector<1x256xi32>
    %402 = arith.cmpi slt, %11, %401 : vector<1x256xi32>
    %403 = arith.andi %400, %402 : vector<1x256xi1>
    %c-1_i32_124 = arith.constant -1 : i32
    %404 = vector.broadcast %c-1_i32_124 : i32 to vector<1x256xi32>
    %405 = arith.cmpi sge, %12, %404 : vector<1x256xi32>
    %406 = arith.andi %403, %405 : vector<1x256xi1>
    %c15_i32_125 = arith.constant 15 : i32
    %407 = vector.broadcast %c15_i32_125 : i32 to vector<1x256xi32>
    %408 = arith.cmpi slt, %12, %407 : vector<1x256xi32>
    %409 = arith.andi %406, %408 : vector<1x256xi1>
    %cst_126 = arith.constant 0.000000e+00 : f32
    %410 = vector.shape_cast %409 : vector<1x256xi1> to vector<1x256xi1>
    %411 = vector.broadcast %410 : vector<1x256xi1> to vector<8x256xi1>
    %412 = vector.broadcast %cst_126 : f32 to vector<8x256xf32>
    %413 = arith.select %411, %398, %412 : vector<8x256xi1>, vector<8x256xf32>
    %414 = tpu.concatenate %397, %413 in 0 : vector<8x256xf32>, vector<8x256xf32> -> vector<16x256xf32>
    %415 = arith.truncf %414 : vector<16x256xf32> to vector<16x256xbf16>
    %c176 = arith.constant 176 : index
    %c0_127 = arith.constant 0 : index
    %416 = vector.load %arg8[%c176, %c0_127] : memref<208x256xbf16, #tpu.memory_space<vmem>>, vector<16x256xbf16>
    tpu.vector_store %arg8[%c176, %c0_127], %415 {strides = array<i32>} : memref<208x256xbf16, #tpu.memory_space<vmem>>, vector<16x256xbf16>,
    %c222_i32 = arith.constant 222 : i32
    %417 = tpu.dynamic_rotate %10 by %c222_i32 dim 1 : vector<8x256xf32>, i32 -> vector<8x256xf32>
    %c-32_i32_128 = arith.constant -32 : i32
    %418 = vector.broadcast %c-32_i32_128 : i32 to vector<1x256xi32>
    %419 = arith.cmpi sge, %11, %418 : vector<1x256xi32>
    %c224_i32_129 = arith.constant 224 : i32
    %420 = vector.broadcast %c224_i32_129 : i32 to vector<1x256xi32>
    %421 = arith.cmpi slt, %11, %420 : vector<1x256xi32>
    %422 = arith.andi %419, %421 : vector<1x256xi1>
    %c-2_i32_130 = arith.constant -2 : i32
    %423 = vector.broadcast %c-2_i32_130 : i32 to vector<1x256xi32>
    %424 = arith.cmpi sge, %12, %423 : vector<1x256xi32>
    %425 = arith.andi %422, %424 : vector<1x256xi1>
    %c14_i32_131 = arith.constant 14 : i32
    %426 = vector.broadcast %c14_i32_131 : i32 to vector<1x256xi32>
    %427 = arith.cmpi slt, %12, %426 : vector<1x256xi32>
    %428 = arith.andi %425, %427 : vector<1x256xi1>
    %cst_132 = arith.constant 0.000000e+00 : f32
    %429 = vector.shape_cast %428 : vector<1x256xi1> to vector<1x256xi1>
    %430 = vector.broadcast %429 : vector<1x256xi1> to vector<8x256xi1>
    %431 = vector.broadcast %cst_132 : f32 to vector<8x256xf32>
    %432 = arith.select %430, %417, %431 : vector<8x256xi1>, vector<8x256xf32>
    %cst_133 = arith.constant 0.000000e+00 : f32
    %433 = vector.broadcast %cst_133 : f32 to vector<8x256xf32>
    %434 = tpu.concatenate %432, %433 in 0 : vector<8x256xf32>, vector<8x256xf32> -> vector<16x256xf32>
    %435 = arith.truncf %434 : vector<16x256xf32> to vector<16x256xbf16>
    %c192 = arith.constant 192 : index
    %c0_134 = arith.constant 0 : index
    %436 = vector.load %arg8[%c192, %c0_134] : memref<208x256xbf16, #tpu.memory_space<vmem>>, vector<16x256xbf16>
    tpu.vector_store %arg8[%c192, %c0_134], %435 {strides = array<i32>} : memref<208x256xbf16, #tpu.memory_space<vmem>>, vector<16x256xbf16>,
    %c0_135 = arith.constant 0 : index
    %c0_136 = arith.constant 0 : index
    %437 = vector.load %arg4[%c0_135, %c0_136] : memref<8x208xbf16, #tpu.memory_space<vmem>>, vector<8x208xbf16>
    %c0_137 = arith.constant 0 : index
    %c0_138 = arith.constant 0 : index
    %438 = vector.load %arg8[%c0_137, %c0_138] : memref<208x256xbf16, #tpu.memory_space<vmem>>, vector<208x256xbf16>
    %cst_139 = arith.constant dense<0.000000e+00> : vector<8x256xf32>
    %439 = tpu.matmul %437, %438, %cst_139 {dimension_numbers = #tpu.dot_dimension_numbers<[1], [0], [0], [1], [0, 0, 1, 1], [], []>} : vector<8x208xbf16>, vector<208x256xbf16>, vector<8x256xf32> -> vector<8x256xf32>
    %440 = arith.truncf %439 : vector<8x256xf32> to vector<8x256xbf16>
    %c0_140 = arith.constant 0 : index
    %c0_141 = arith.constant 0 : index
    %c0_142 = arith.constant 0 : index
    %441 = vector.load %arg6[%c0_140, %c0_141, %c0_142] : memref<1x8x256xbf16, #tpu.memory_space<vmem>>, vector<1x8x256xbf16>
    %442 = vector.shape_cast %441 : vector<1x8x256xbf16> to vector<8x256xbf16>
    %443 = vector.shape_cast %440 : vector<8x256xbf16> to vector<1x8x256xbf16>
    tpu.vector_store %arg6[%c0_140, %c0_141, %c0_142], %443 {strides = array<i32>} : memref<1x8x256xbf16, #tpu.memory_space<vmem>>, vector<1x8x256xbf16>,
    %444 = arith.extf %440 : vector<8x256xbf16> to vector<8x256xf32>
    %cst_143 = arith.constant dense<0.000000e+00> : vector<8xf32>
    %445 = vector.multi_reduction <add>, %444, %cst_143 [1] : vector<8x256xf32> to vector<8xf32>
    %446 = vector.shape_cast %445 : vector<8xf32> to vector<8x1xf32>
    %c0_144 = arith.constant 0 : index
    %c0_145 = arith.constant 0 : index
    %c0_146 = arith.constant 0 : index
    %c0_147 = arith.constant 0 : index
    %447 = vector.load %arg7[%c0_144, %c0_145, %c0_146, %c0_147] : memref<1x1x16x1xf32, #tpu.memory_space<vmem>>, vector<1x1x8x1xf32>
    %448 = vector.shape_cast %447 : vector<1x1x8x1xf32> to vector<8x1xf32>
    %449 = vector.shape_cast %446 : vector<8x1xf32> to vector<1x1x8x1xf32>
    tpu.vector_store %arg7[%c0_144, %c0_145, %c0_146, %c0_147], %449 {strides = array<i32>} : memref<1x1x16x1xf32, #tpu.memory_space<vmem>>, vector<1x1x8x1xf32>,
    %450 = arith.mulf %444, %444 : vector<8x256xf32>
    %cst_148 = arith.constant dense<0.000000e+00> : vector<8xf32>
    %451 = vector.multi_reduction <add>, %450, %cst_148 [1] : vector<8x256xf32> to vector<8xf32>
    %452 = vector.shape_cast %451 : vector<8xf32> to vector<8x1xf32>
    %c0_149 = arith.constant 0 : index
    %c0_150 = arith.constant 0 : index
    %c8 = arith.constant 8 : index
    %c0_151 = arith.constant 0 : index
    %453 = vector.load %arg7[%c0_149, %c0_150, %c8, %c0_151] : memref<1x1x16x1xf32, #tpu.memory_space<vmem>>, vector<1x1x8x1xf32>
    %454 = vector.shape_cast %453 : vector<1x1x8x1xf32> to vector<8x1xf32>
    %455 = vector.shape_cast %452 : vector<8x1xf32> to vector<1x1x8x1xf32>
    tpu.vector_store %arg7[%c0_149, %c0_150, %c8, %c0_151], %455 {strides = array<i32>} : memref<1x1x16x1xf32, #tpu.memory_space<vmem>>, vector<1x1x8x1xf32>,
    return
  }
  func.func @transform_0(%arg0: i32) -> (i32, i32, i32) {
    %c0_i32 = arith.constant 0 : i32
    %c0_i32_0 = arith.constant 0 : i32
    %c0_i32_1 = arith.constant 0 : i32
    return %arg0, %c0_i32, %c0_i32_0 : i32, i32, i32
  }
  func.func @transform_1(%arg0: i32) -> (i32, i32) {
    %c0_i32 = arith.constant 0 : i32
    %c0_i32_0 = arith.constant 0 : i32
    %c0_i32_1 = arith.constant 0 : i32
    return %c0_i32, %c0_i32_0 : i32, i32
  }
  func.func @transform_2(%arg0: i32) -> (i32, i32) {
    %c0_i32 = arith.constant 0 : i32
    %c0_i32_0 = arith.constant 0 : i32
    %c0_i32_1 = arith.constant 0 : i32
    return %c0_i32, %c0_i32_0 : i32, i32
  }
  func.func @transform_3(%arg0: i32) -> (i32, i32) {
    %c0_i32 = arith.constant 0 : i32
    %c0_i32_0 = arith.constant 0 : i32
    %c0_i32_1 = arith.constant 0 : i32
    return %c0_i32, %c0_i32_0 : i32, i32
  }
  func.func @transform_4(%arg0: i32) -> (i32, i32) {
    %c0_i32 = arith.constant 0 : i32
    %c0_i32_0 = arith.constant 0 : i32
    %c0_i32_1 = arith.constant 0 : i32
    return %c0_i32, %c0_i32_0 : i32, i32
  }
  func.func @transform_5(%arg0: i32) -> (i32, i32, i32) {
    %c0_i32 = arith.constant 0 : i32
    %c0_i32_0 = arith.constant 0 : i32
    %c0_i32_1 = arith.constant 0 : i32
    return %arg0, %c0_i32, %c0_i32_0 : i32, i32, i32
  }
  func.func @transform_6(%arg0: i32) -> (i32, i32, i32, i32) {
    %c0_i32 = arith.constant 0 : i32
    %c0_i32_0 = arith.constant 0 : i32
    %c0_i32_1 = arith.constant 0 : i32
    %c0_i32_2 = arith.constant 0 : i32
    return %arg0, %c0_i32, %c0_i32_0, %c0_i32_1 : i32, i32, i32, i32
  }
}

module attributes {stable_mosaic.version = 11 : i64} {
  func.func @_finalize_kernel(%arg0: i32, %arg1: i32, %arg2: memref<1x8x128xbf16, #tpu.memory_space<vmem>>, %arg3: memref<1x32x128xf32, #tpu.memory_space<vmem>>, %arg4: memref<8x1xf32, #tpu.memory_space<vmem>>, %arg5: memref<8x1xf32, #tpu.memory_space<vmem>>, %arg6: memref<32x8xbf16, #tpu.memory_space<vmem>>, %arg7: memref<32x1xf32, #tpu.memory_space<vmem>>, %arg8: memref<1x32x128xf32, #tpu.memory_space<vmem>>) attributes {dimension_semantics = [#tpu.dimension_semantics<parallel>, #tpu.dimension_semantics<parallel>], iteration_bounds = array<i64: 2, 2>, scalar_prefetch = 0 : i64, scratch_operands = 0 : i64, tpu.core_type = #tpu.core_type<tc>, window_params = [{transform_indices = @transform_0, window_bounds = array<i64: 1, 8, 128>}, {transform_indices = @transform_1, window_bounds = array<i64: 1, 32, 128>}, {pipeline_mode = #tpu.pipeline_mode<synchronous>, transform_indices = @transform_2, window_bounds = array<i64: 8, 1>}, {pipeline_mode = #tpu.pipeline_mode<synchronous>, transform_indices = @transform_3, window_bounds = array<i64: 8, 1>}, {pipeline_mode = #tpu.pipeline_mode<synchronous>, transform_indices = @transform_4, window_bounds = array<i64: 32, 8>}, {pipeline_mode = #tpu.pipeline_mode<synchronous>, transform_indices = @transform_5, window_bounds = array<i64: 32, 1>}, {transform_indices = @transform_6, window_bounds = array<i64: 1, 32, 128>}]} {
    %c0 = arith.constant 0 : index
    %c0_0 = arith.constant 0 : index
    %c0_1 = arith.constant 0 : index
    %0 = vector.load %arg2[%c0, %c0_0, %c0_1] : memref<1x8x128xbf16, #tpu.memory_space<vmem>>, vector<1x8x128xbf16>
    %1 = vector.shape_cast %0 : vector<1x8x128xbf16> to vector<8x128xbf16>
    %2 = arith.extf %1 : vector<8x128xbf16> to vector<8x128xf32>
    %c0_2 = arith.constant 0 : index
    %c0_3 = arith.constant 0 : index
    %3 = vector.load %arg4[%c0_2, %c0_3] : memref<8x1xf32, #tpu.memory_space<vmem>>, vector<8x1xf32>
    %4 = vector.broadcast %3 : vector<8x1xf32> to vector<8x128xf32>
    %5 = arith.mulf %2, %4 : vector<8x128xf32>
    %c0_4 = arith.constant 0 : index
    %c0_5 = arith.constant 0 : index
    %6 = vector.load %arg5[%c0_4, %c0_5] : memref<8x1xf32, #tpu.memory_space<vmem>>, vector<8x1xf32>
    %7 = vector.broadcast %6 : vector<8x1xf32> to vector<8x128xf32>
    %8 = arith.addf %5, %7 : vector<8x128xf32>
    %cst = arith.constant 0.000000e+00 : f32
    %9 = vector.broadcast %cst : f32 to vector<8x128xf32>
    %10 = arith.maximumf %8, %9 : vector<8x128xf32>
    %c0_6 = arith.constant 0 : index
    %c0_7 = arith.constant 0 : index
    %11 = vector.load %arg6[%c0_6, %c0_7] : memref<32x8xbf16, #tpu.memory_space<vmem>>, vector<32x8xbf16>
    %12 = arith.truncf %10 : vector<8x128xf32> to vector<8x128xbf16>
    %cst_8 = arith.constant dense<0.000000e+00> : vector<32x128xf32>
    %13 = tpu.matmul %11, %12, %cst_8 {dimension_numbers = #tpu.dot_dimension_numbers<[1], [0], [0], [1], [0, 0, 1, 1], [], []>} : vector<32x8xbf16>, vector<8x128xbf16>, vector<32x128xf32> -> vector<32x128xf32>
    %c0_9 = arith.constant 0 : index
    %c0_10 = arith.constant 0 : index
    %14 = vector.load %arg7[%c0_9, %c0_10] : memref<32x1xf32, #tpu.memory_space<vmem>>, vector<32x1xf32>
    %15 = vector.broadcast %14 : vector<32x1xf32> to vector<32x128xf32>
    %16 = arith.addf %13, %15 : vector<32x128xf32>
    %c0_11 = arith.constant 0 : index
    %c0_12 = arith.constant 0 : index
    %c0_13 = arith.constant 0 : index
    %17 = vector.load %arg3[%c0_11, %c0_12, %c0_13] : memref<1x32x128xf32, #tpu.memory_space<vmem>>, vector<1x32x128xf32>
    %18 = vector.shape_cast %17 : vector<1x32x128xf32> to vector<32x128xf32>
    %19 = arith.addf %16, %18 : vector<32x128xf32>
    %cst_14 = arith.constant 0.000000e+00 : f32
    %20 = vector.broadcast %cst_14 : f32 to vector<32x128xf32>
    %21 = arith.maximumf %19, %20 : vector<32x128xf32>
    %c0_15 = arith.constant 0 : index
    %c0_16 = arith.constant 0 : index
    %c0_17 = arith.constant 0 : index
    %22 = vector.load %arg8[%c0_15, %c0_16, %c0_17] : memref<1x32x128xf32, #tpu.memory_space<vmem>>, vector<1x32x128xf32>
    %23 = vector.shape_cast %22 : vector<1x32x128xf32> to vector<32x128xf32>
    %24 = vector.shape_cast %21 : vector<32x128xf32> to vector<1x32x128xf32>
    tpu.vector_store %arg8[%c0_15, %c0_16, %c0_17], %24 {strides = array<i32>} : memref<1x32x128xf32, #tpu.memory_space<vmem>>, vector<1x32x128xf32>,
    return
  }
  func.func @transform_0(%arg0: i32, %arg1: i32) -> (i32, i32, i32) {
    %c0_i32 = arith.constant 0 : i32
    %c0_i32_0 = arith.constant 0 : i32
    return %arg0, %c0_i32, %arg1 : i32, i32, i32
  }
  func.func @transform_1(%arg0: i32, %arg1: i32) -> (i32, i32, i32) {
    %c0_i32 = arith.constant 0 : i32
    %c0_i32_0 = arith.constant 0 : i32
    return %arg0, %c0_i32, %arg1 : i32, i32, i32
  }
  func.func @transform_2(%arg0: i32, %arg1: i32) -> (i32, i32) {
    %c0_i32 = arith.constant 0 : i32
    %c0_i32_0 = arith.constant 0 : i32
    %c0_i32_1 = arith.constant 0 : i32
    return %c0_i32, %c0_i32_0 : i32, i32
  }
  func.func @transform_3(%arg0: i32, %arg1: i32) -> (i32, i32) {
    %c0_i32 = arith.constant 0 : i32
    %c0_i32_0 = arith.constant 0 : i32
    %c0_i32_1 = arith.constant 0 : i32
    return %c0_i32, %c0_i32_0 : i32, i32
  }
  func.func @transform_4(%arg0: i32, %arg1: i32) -> (i32, i32) {
    %c0_i32 = arith.constant 0 : i32
    %c0_i32_0 = arith.constant 0 : i32
    %c0_i32_1 = arith.constant 0 : i32
    return %c0_i32, %c0_i32_0 : i32, i32
  }
  func.func @transform_5(%arg0: i32, %arg1: i32) -> (i32, i32) {
    %c0_i32 = arith.constant 0 : i32
    %c0_i32_0 = arith.constant 0 : i32
    %c0_i32_1 = arith.constant 0 : i32
    return %c0_i32, %c0_i32_0 : i32, i32
  }
  func.func @transform_6(%arg0: i32, %arg1: i32) -> (i32, i32, i32) {
    %c0_i32 = arith.constant 0 : i32
    %c0_i32_0 = arith.constant 0 : i32
    return %arg0, %c0_i32, %arg1 : i32, i32, i32
  }
}

</mosaic_0001>

<llo_original>
// kernel: bottleneck_hl_forward.6
$region0: #{bottleneck_hl_forward.6}
  #allocation0 [shape = 'u32[]', space=smem, size = 0x4, offset = 0x4, fixed_abs, tag = 'smem constant byte address 0x4 - core index']
  #allocation1 [shape = 'u32[144,128]{1,0:T(1,128)}', space=vmem, size = 0x12000, scoped, tag = 'internal scratch']
  %s0 = inlined_call_operand.vmem [shape: bf16[2,8,256], index: 0, kind: input, shape index: {}]
  %s1 = inlined_call_operand.vmem [shape: f32[8,1], index: 1, kind: input, shape index: {}]
  %s2 = inlined_call_operand.vmem [shape: f32[8,1], index: 2, kind: input, shape index: {}]
  %s3 = inlined_call_operand.vmem [shape: bf16[32,8], index: 3, kind: input, shape index: {}]
  %s4 = inlined_call_operand.vmem [shape: f32[2,2,64,1], index: 4, kind: output, shape index: {}]
  %s5 = sld [smem:[#allocation0]]
  $region49: #{bottleneck_hl_forward.6} parent=0
    _
  %s7 = ssub.s32 1, %s5
  %s8 = scalar_select 0, %s7, %s5
  loop: start=0, step=1, limit=6
  $region2: #{bottleneck_hl_forward.6} parent=0 // loop_pre_header
    _
  $region3: #{bottleneck_hl_forward.6} parent=0 // loop_header
    %s10 = sphi 0, %s14
    %p11 = scmp.ge.s32.totalorder %s10, 6
    %s17 = sphi 0, %s29
    %s18 = sphi 0, %s25
    %s19 = sphi 0, %s17
    %s20 = sphi 0, %s18
    %s21 = sphi 0, %s19
    %s22 = sphi 0, %s20
    %s34 = sphi 0, %s36
    %s37 = sphi 0, %s34
    %s38 = sphi 0, %s37
    %s54 = sphi 0, %s38
    %s58 = sphi 0, %s58
    %s60 = sphi 0, %s58
    %s61 = sphi 0, %s60
    %s75 = sphi 0, %s61
    %s79 = sphi 0, %s79
    %s81 = sphi 0, %s79
    %s82 = sphi 0, %s81
    %s96 = sphi 0, %s82
    %s100 = sphi 0, %s100
    %s102 = sphi 0, %s100
    %s103 = sphi 0, %s102
    %s117 = sphi 0, %s103
    %s125 = sphi 0, %s127
    %s128 = sphi 0, %s125
    %s129 = sphi 0, %s128
    %s145 = sphi 0, %s129
  $region4: #{bottleneck_hl_forward.6} parent=0 // loop_header_branch
    %13 = sbr.rel (%p11) target = $region8
  $region5: #{bottleneck_hl_forward.6} parent=0 // loop_body
    %s15 = ssub.s32 %s10, 1
    %s16 = ssub.s32 %s10, 2
    %s23 = sadd.s32 1, %s18
    %p24 = scmp.ge.s32.totalorder %s23, 2
    %s25 = scalar_select %p24, 0, %s23
    %s26 = sadd.s32 1, %s17
    %s27 = scalar_select %p24, %s26, %s17
    %p28 = scmp.ge.s32.totalorder %s27, 2
    %s29 = scalar_select %p28, 0, %s27
    %s30 = ssub.s32 %s17, %s29
    %s31 = ssub.s32 %s18, %s25
    %s32 = sor.u32 %s30, %s31
    %p33 = scmp.eq.s32.totalorder %s32, 0
    %s35 = sadd.s32 %s34, 1
    %s36 = scalar_select %p33, %s34, %s35
    %p39 = pneg %p33
    %p40 = scmp.eq.s32.totalorder %s10, 3
    %p41 = por %p39, %p40
    %p42 = scmp.ne.s32.totalorder %s34, %s37
    %p43 = scmp.eq.s32.totalorder %s10, 0
    %p44 = por %p42, %p43
    %p45 = scmp.ne.s32.totalorder %s34, %s37
    %p46 = scmp.eq.s32.totalorder %s15, 3
    %p47 = por %p45, %p46
    %p48 = scmp.ne.s32.totalorder %s37, %s38
    %p49 = scmp.eq.s32.totalorder %s15, 0
    %p50 = por %p48, %p49
    %p51 = scmp.ne.s32.totalorder %s37, %s38
    %p52 = scmp.eq.s32.totalorder %s16, 3
    %p53 = por %p51, %p52
    %p55 = scmp.ne.s32.totalorder %s38, %s54
    %p56 = scmp.eq.s32.totalorder %s16, 0
    %p57 = por %p55, %p56
    %s59 = sadd.s32 %s58, 1
    %p62 = scmp.eq.s32.totalorder %s10, 3
    %p63 = scmp.ne.s32.totalorder %s58, %s60
    %p64 = scmp.eq.s32.totalorder %s10, 0
    %p65 = por %p63, %p64
    %p66 = scmp.ne.s32.totalorder %s58, %s60
    %p67 = scmp.eq.s32.totalorder %s15, 3
    %p68 = por %p66, %p67
    %p69 = scmp.ne.s32.totalorder %s60, %s61
    %p70 = scmp.eq.s32.totalorder %s15, 0
    %p71 = por %p69, %p70
    %p72 = scmp.ne.s32.totalorder %s60, %s61
    %p73 = scmp.eq.s32.totalorder %s16, 3
    %p74 = por %p72, %p73
    %p76 = scmp.ne.s32.totalorder %s61, %s75
    %p77 = scmp.eq.s32.totalorder %s16, 0
    %p78 = por %p76, %p77
    %s80 = sadd.s32 %s79, 1
    %p83 = scmp.eq.s32.totalorder %s10, 3
    %p84 = scmp.ne.s32.totalorder %s79, %s81
    %p85 = scmp.eq.s32.totalorder %s10, 0
    %p86 = por %p84, %p85
    %p87 = scmp.ne.s32.totalorder %s79, %s81
    %p88 = scmp.eq.s32.totalorder %s15, 3
    %p89 = por %p87, %p88
    %p90 = scmp.ne.s32.totalorder %s81, %s82
    %p91 = scmp.eq.s32.totalorder %s15, 0
    %p92 = por %p90, %p91
    %p93 = scmp.ne.s32.totalorder %s81, %s82
    %p94 = scmp.eq.s32.totalorder %s16, 3
    %p95 = por %p93, %p94
    %p97 = scmp.ne.s32.totalorder %s82, %s96
    %p98 = scmp.eq.s32.totalorder %s16, 0
    %p99 = por %p97, %p98
    %s101 = sadd.s32 %s100, 1
    %p104 = scmp.eq.s32.totalorder %s10, 3
    %p105 = scmp.ne.s32.totalorder %s100, %s102
    %p106 = scmp.eq.s32.totalorder %s10, 0
    %p107 = por %p105, %p106
    %p108 = scmp.ne.s32.totalorder %s100, %s102
    %p109 = scmp.eq.s32.totalorder %s15, 3
    %p110 = por %p108, %p109
    %p111 = scmp.ne.s32.totalorder %s102, %s103
    %p112 = scmp.eq.s32.totalorder %s15, 0
    %p113 = por %p111, %p112
    %p114 = scmp.ne.s32.totalorder %s102, %s103
    %p115 = scmp.eq.s32.totalorder %s16, 3
    %p116 = por %p114, %p115
    %p118 = scmp.ne.s32.totalorder %s103, %s117
    %p119 = scmp.eq.s32.totalorder %s16, 0
    %p120 = por %p118, %p119
    %s121 = ssub.s32 %s17, %s29
    %s122 = ssub.s32 %s18, %s25
    %s123 = sor.u32 %s121, %s122
    %p124 = scmp.eq.s32.totalorder %s123, 0
    %s126 = sadd.s32 %s125, 1
    %s127 = scalar_select %p124, %s125, %s126
    %p130 = pneg %p124
    %p131 = scmp.eq.s32.totalorder %s10, 3
    %p132 = por %p130, %p131
    %p133 = scmp.ne.s32.totalorder %s125, %s128
    %p134 = scmp.eq.s32.totalorder %s10, 0
    %p135 = por %p133, %p134
    %p136 = scmp.ne.s32.totalorder %s125, %s128
    %p137 = scmp.eq.s32.totalorder %s15, 3
    %p138 = por %p136, %p137
    %p139 = scmp.ne.s32.totalorder %s128, %s129
    %p140 = scmp.eq.s32.totalorder %s15, 0
    %p141 = por %p139, %p140
    %p142 = scmp.ne.s32.totalorder %s128, %s129
    %p143 = scmp.eq.s32.totalorder %s16, 3
    %p144 = por %p142, %p143
    %p146 = scmp.ne.s32.totalorder %s129, %s145
    %p147 = scmp.eq.s32.totalorder %s16, 0
    %p148 = por %p146, %p147
    %p149 = scmp.le.s32.totalorder 1, %s10
    %p150 = scmp.lt.s32.totalorder %s10, 5
    %p151 = pnand %p149, %p150
    %p152 = pneg %p151
    // Predicated region
    $region9: #{bottleneck_hl_forward.6} parent=5 // pred_check
      _
    $region10: #{bottleneck_hl_forward.6} parent=5 // pred_check_branch
      %154 = sbr.rel (%p151) target = $region12
    $region11: #{bottleneck_hl_forward.6} parent=5 // pred_region
      %s155 = ssub.s32 %s10, 1
      // Predicated region
      $region13: #{bottleneck_hl_forward.6} parent=11 // pred_check
        %p156 = pneg %p71
      $region14: #{bottleneck_hl_forward.6} parent=11 // pred_check_branch
        %158 = sbr.rel (%p156) target = $region16
      $region15: #{bottleneck_hl_forward.6} parent=11 // pred_region
        _
      $region16: #{bottleneck_hl_forward.6} parent=11 // pred_fallthru
        _
      // Predicated region
      $region17: #{bottleneck_hl_forward.6} parent=11 // pred_check
        %p159 = pneg %p92
      $region18: #{bottleneck_hl_forward.6} parent=11 // pred_check_branch
        %161 = sbr.rel (%p159) target = $region20
      $region19: #{bottleneck_hl_forward.6} parent=11 // pred_region
        _
      $region20: #{bottleneck_hl_forward.6} parent=11 // pred_fallthru
        _
      // Predicated region
      $region21: #{bottleneck_hl_forward.6} parent=11 // pred_check
        %p162 = pneg %p113
      $region22: #{bottleneck_hl_forward.6} parent=11 // pred_check_branch
        %164 = sbr.rel (%p162) target = $region24
      $region23: #{bottleneck_hl_forward.6} parent=11 // pred_region
        _
      $region24: #{bottleneck_hl_forward.6} parent=11 // pred_fallthru
        _
    $region12: #{bottleneck_hl_forward.6} parent=5 // pred_fallthru
      _
    %p165 = scmp.lt.s32.totalorder %s10, 4
    // Predicated region
    $region25: #{bottleneck_hl_forward.6} parent=5 // pred_check
      %p166 = pneg %p165
    $region26: #{bottleneck_hl_forward.6} parent=5 // pred_check_branch
      %168 = sbr.rel (%p166) target = $region28
    $region27: #{bottleneck_hl_forward.6} parent=5 // pred_region
      // Predicated region
      $region29: #{bottleneck_hl_forward.6} parent=27 // pred_check
        %p169 = pneg %p44
      $region30: #{bottleneck_hl_forward.6} parent=27 // pred_check_branch
        %171 = sbr.rel (%p169) target = $region32
      $region31: #{bottleneck_hl_forward.6} parent=27 // pred_region
        %p172 = scmp.lt.s32.totalorder %s17, 1
        %s173 = scalar_select %p172, %s17, 1
        %p174 = scmp.lt.s32.totalorder %s18, 1
        %s175 = scalar_select %p174, %s18, 1
        %s176 = smul.addr %s173, 2
        %s177 = sadd.s32 %s175, %s176
        %s178 = smul.addr %s177, 4
        %s179 = scalar_lea.vmem %s0, %s178
      $region32: #{bottleneck_hl_forward.6} parent=27 // pred_fallthru
        _
    $region28: #{bottleneck_hl_forward.6} parent=5 // pred_fallthru
      _
    %p180 = scmp.le.s32.totalorder 1, %s10
    %p181 = scmp.lt.s32.totalorder %s10, 5
    %p182 = pnand %p180, %p181
    %p183 = pneg %p182
    // Predicated region
    $region33: #{bottleneck_hl_forward.6} parent=5 // pred_check
      _
    $region34: #{bottleneck_hl_forward.6} parent=5 // pred_check_branch
      %185 = sbr.rel (%p182) target = $region36
    $region35: #{bottleneck_hl_forward.6} parent=5 // pred_region
      %s186 = ssub.s32 %s10, 1
      %p187 = scmp.lt.s32.totalorder %s19, 1
      %s188 = scalar_select %p187, %s19, 1
      %p189 = scmp.lt.s32.totalorder %s20, 1
      %s190 = scalar_select %p189, %s20, 1
      %s191 = smul.addr %s188, 2
      %s192 = sadd.s32 %s190, %s191
      %s193 = smul.addr %s192, 4
      %s194 = scalar_lea.vmem %s0, %s193
      %p195 = pneg %p50
      %p196 = pneg %p47
      %p197 = pneg %p71
      %p198 = pneg %p68
      %p199 = pneg %p92
      %p200 = pneg %p89
      %p201 = pneg %p113
      %p202 = pneg %p110
      %p203 = pneg %p141
      %p204 = pneg %p138
      %p205 = scmp.lt.s32.totalorder %s19, 1
      %s206 = scalar_select %p205, %s19, 1
      %p207 = scmp.lt.s32.totalorder %s20, 1
      %s208 = scalar_select %p207, %s20, 1
      %s209 = smul.addr %s208, 8
      %s210 = smul.addr %s206, 16
      %s211 = sadd.s32 %s209, %s210
      %s212 = smul.addr %s211, 8
      %s213 = scalar_lea.vmem %s4, %s212
      %p214 = scmp.lt.s32.totalorder %s19, 1
      %s215 = scalar_select %p214, %s19, 1
      %p216 = scmp.lt.s32.totalorder %s20, 1
      %s217 = scalar_select %p216, %s20, 1
      %s218 = smul.addr %s215, 2
      %s219 = sadd.s32 %s217, %s218
      %s220 = smul.addr %s219, 4
      %s221 = scalar_lea.vmem %s0, %s220
      %p222 = scmp.lt.s32.totalorder %s19, 1
      %s223 = scalar_select %p222, %s19, 1
      %p224 = scmp.lt.s32.totalorder %s20, 1
      %s225 = scalar_select %p224, %s20, 1
      %s226 = smul.addr %s225, 8
      %s227 = smul.addr %s223, 16
      %s228 = sadd.s32 %s226, %s227
      %s229 = smul.addr %s228, 8
      %s230 = scalar_lea.vmem %s4, %s229
      %v232 = vld [vmem:[%s221] sm:$0xf]
      %v233 = vunpack.c.l.bf16 %v232
      %v234 = vld [vmem:[%s1] sm:$0xff]
      %236 = vset.pattern.permute.xlu0 0
      %237 = vperm.xlu0 %236, %v234
      %v238 = vpop.permute.xlu0 %237
      %v240 = vmul.f32 %v233, %v238
      %v241 = vld [vmem:[%s2] sm:$0xff]
      %243 = vset.pattern.permute.xlu0 0
      %244 = vperm.xlu0 %243, %v241
      %v245 = vpop.permute.xlu0 %244
      %v247 = vadd.f32 %v240, %v245
      %v248 = vmax.f32 %v247, 0.0
      %v249 = vld [vmem:[%s3] sm:$0xf]
      %v250 = vld [vmem:[%s3 + $0x4] sm:$0xf]
      %v251 = vld [vmem:[%s3 + $0x8] sm:$0xf]
      %v252 = vld [vmem:[%s3 + $0xc] sm:$0xf]
      %v253 = vpack.c.bf16 %v248, %v248
      %v258 = vunpack.c.l.b16 %v249
      %v259 = vunpack.c.l.b16 %v250
      %v260 = vunpack.c.l.b16 %v251
      %v261 = vunpack.c.l.b16 %v252
      %v262 = vpack.c.b16 %v259, %v258
      %v263 = vpack.c.b16 %v261, %v260
      %vm264 = vcmask 64512
      %v266 = vsel %vm264, %v262, 0
      %v269 = vsel %vm264, %v263, 0
      %vm271 = vcmask 1043456
      %v273 = vsel %vm271, %v253, 0
      %275 = vmatprep.subr.bf16.mxu0 0
      %276 = vmatpush1.bf16.msra.mxu0 %v273
      %277 = vmatprep.subr.bf16.mxu0 0
      %278 = vmatpush1.bf16.msra.mxu0 0
      %279 = vmatprep.subr.bf16.mxu0 0
      %280 = vmatpush1.bf16.msra.mxu0 0
      %281 = vmatprep.subr.bf16.mxu0 0
      %282 = vmatpush1.bf16.msra.mxu0 0
      %283 = vmatprep.subr.bf16.mxu0 0
      %284 = vmatpush1.bf16.msra.mxu0 0
      %285 = vmatprep.subr.bf16.mxu0 0
      %286 = vmatpush1.bf16.msra.mxu0 0
      %287 = vmatprep.subr.bf16.mxu0 0
      %288 = vmatpush1.bf16.msra.mxu0 0
      %289 = vmatprep.subr.bf16.mxu0 0
      %290 = vmatpush1.bf16.msra.mxu0 0
      %291 = vmatprep.subr.bf16.mxu0 0
      %292 = vmatpush1.bf16.msra.mxu0 0
      %293 = vmatprep.subr.bf16.mxu0 0
      %294 = vmatpush1.bf16.msra.mxu0 0
      %295 = vmatprep.subr.bf16.mxu0 0
      %296 = vmatpush1.bf16.msra.mxu0 0
      %297 = vmatprep.subr.bf16.mxu0 0
      %298 = vmatpush1.bf16.msra.mxu0 0
      %299 = vmatprep.subr.bf16.mxu0 0
      %300 = vmatpush1.bf16.msra.mxu0 0
      %301 = vmatprep.subr.bf16.mxu0 0
      %302 = vmatpush1.bf16.msra.mxu0 0
      %303 = vmatprep.subr.bf16.mxu0 0
      %304 = vmatpush1.bf16.msra.mxu0 0
      %305 = vmatprep.subr.bf16.mxu0 0
      %306 = vmatpush1.bf16.msra.mxu0 0
      %307 = vmatprep.mubr.bf16.mxu0 0
      %308 = vmatmul.mubr.bf16.gmra.mrb[0].mxu0 %v266
      %v309 = vpop.f32.mrb[0].mxu0
      %v310 = vadd.f32 0.0, %v309
      %v311 = vpop.f32.mrb[0].mxu0
      %v312 = vpop.f32.mrb[0].mxu0
      %v313 = vadd.f32 0.0, %v312
      %v314 = vpop.f32.mrb[0].mxu0
      %315 = vmatprep.mubr.bf16.mxu0 0
      %316 = vmatmul.mubr.bf16.gmra.mrb[0].mxu0 %v269
      %v317 = vpop.f32.mrb[0].mxu0
      %v318 = vadd.f32 0.0, %v317
      %v319 = vpop.f32.mrb[0].mxu0
      %v320 = vpop.f32.mrb[0].mxu0
      %v321 = vadd.f32 0.0, %v320
      %v322 = vpop.f32.mrb[0].mxu0
      %323 = vdwg.mxu0
      %324 = vadd.xlane.f32.xlu0 %v310
      %v325 = vpop.xlane.xlu0 %324
      %326 = vadd.xlane.f32.xlu0 %v313
      %v327 = vpop.xlane.xlu0 %326
      %328 = vadd.xlane.f32.xlu0 %v318
      %v329 = vpop.xlane.xlu0 %328
      %330 = vadd.xlane.f32.xlu0 %v321
      %v331 = vpop.xlane.xlu0 %330
      %vm332 = vcmask 7168
      %333 = vst.msk [vmem:[%s230] sm:$0xff] %vm332, %v325
      %334 = vst.msk [vmem:[%s230 + $0x8] sm:$0xff] %vm332, %v327
      %335 = vst.msk [vmem:[%s230 + $0x10] sm:$0xff] %vm332, %v329
      %336 = vst.msk [vmem:[%s230 + $0x18] sm:$0xff] %vm332, %v331
      %v337 = vmul.f32 %v310, %v310
      %v338 = vmul.f32 %v313, %v313
      %v339 = vmul.f32 %v318, %v318
      %v340 = vmul.f32 %v321, %v321
      %341 = vadd.xlane.f32.xlu0 %v337
      %v342 = vpop.xlane.xlu0 %341
      %343 = vadd.xlane.f32.xlu0 %v338
      %v344 = vpop.xlane.xlu0 %343
      %345 = vadd.xlane.f32.xlu0 %v339
      %v346 = vpop.xlane.xlu0 %345
      %347 = vadd.xlane.f32.xlu0 %v340
      %v348 = vpop.xlane.xlu0 %347
      %349 = vst.msk [vmem:[%s230 + $0x20] sm:$0xff] %vm332, %v342
      %350 = vst.msk [vmem:[%s230 + $0x28] sm:$0xff] %vm332, %v344
      %351 = vst.msk [vmem:[%s230 + $0x30] sm:$0xff] %vm332, %v346
      %352 = vst.msk [vmem:[%s230 + $0x38] sm:$0xff] %vm332, %v348
      %p353 = scmp.lt.s32.totalorder %s19, 1
      %s354 = scalar_select %p353, %s19, 1
      %p355 = scmp.lt.s32.totalorder %s20, 1
      %s356 = scalar_select %p355, %s20, 1
      %s357 = smul.addr %s356, 8
      %s358 = smul.addr %s354, 16
      %s359 = sadd.s32 %s357, %s358
      %s360 = smul.addr %s359, 8
      %s361 = scalar_lea.vmem %s4, %s360
      // Predicated region
      $region37: #{bottleneck_hl_forward.6} parent=35 // pred_check
        %p362 = pneg %p138
      $region38: #{bottleneck_hl_forward.6} parent=35 // pred_check_branch
        %364 = sbr.rel (%p362) target = $region40
      $region39: #{bottleneck_hl_forward.6} parent=35 // pred_region
        _
      $region40: #{bottleneck_hl_forward.6} parent=35 // pred_fallthru
        _
    $region36: #{bottleneck_hl_forward.6} parent=5 // pred_fallthru
      _
    %p365 = scmp.le.s32.totalorder 2, %s10
    // Predicated region
    $region41: #{bottleneck_hl_forward.6} parent=5 // pred_check
      %p366 = pneg %p365
    $region42: #{bottleneck_hl_forward.6} parent=5 // pred_check_branch
      %368 = sbr.rel (%p366) target = $region44
    $region43: #{bottleneck_hl_forward.6} parent=5 // pred_region
      %s369 = ssub.s32 %s10, 2
      // Predicated region
      $region45: #{bottleneck_hl_forward.6} parent=43 // pred_check
        %p370 = pneg %p144
      $region46: #{bottleneck_hl_forward.6} parent=43 // pred_check_branch
        %372 = sbr.rel (%p370) target = $region48
      $region47: #{bottleneck_hl_forward.6} parent=43 // pred_region
        %p373 = scmp.lt.s32.totalorder %s21, 1
        %s374 = scalar_select %p373, %s21, 1
        %p375 = scmp.lt.s32.totalorder %s22, 1
        %s376 = scalar_select %p375, %s22, 1
        %s377 = smul.addr %s376, 8
        %s378 = smul.addr %s374, 16
        %s379 = sadd.s32 %s377, %s378
        %s380 = smul.addr %s379, 8
        %s381 = scalar_lea.vmem %s4, %s380
      $region48: #{bottleneck_hl_forward.6} parent=43 // pred_fallthru
        _
    $region44: #{bottleneck_hl_forward.6} parent=5 // pred_fallthru
      _
  $region6: #{bottleneck_hl_forward.6} parent=0 // loop_footer
    %s14 = sadd.s32 1, %s10
  $region7: #{bottleneck_hl_forward.6} parent=0 // loop_footer_branch
    %9 = sbr.rel target = $region3
  $region8: #{bottleneck_hl_forward.6} parent=0 // loop_exit
    _

// kernel: bottleneck_hl_forward.4
$region0: #{bottleneck_hl_forward.4}
  #allocation0 [shape = 'u32[]', space=smem, size = 0x4, offset = 0x4, fixed_abs, tag = 'smem constant byte address 0x4 - core index']
  #allocation1 [shape = 'u32[144,128]{1,0:T(1,128)}', space=vmem, size = 0x12000, scoped, tag = 'internal scratch']
  %s0 = inlined_call_operand.vmem [shape: f32[2,32,256], index: 0, kind: input, shape index: {}]
  %s1 = inlined_call_operand.vmem [shape: bf16[8,32], index: 1, kind: input, shape index: {}]
  %s2 = inlined_call_operand.vmem [shape: bf16[2,8,256], index: 2, kind: output, shape index: {0}]
  %s3 = inlined_call_operand.vmem [shape: f32[2,2,16,1], index: 3, kind: output, shape index: {1}]
  %4 = xla_tuple %s2, %s3
  %s5 = sld [smem:[#allocation0]]
  $region87: #{bottleneck_hl_forward.4} parent=0
    _
  %s7 = ssub.s32 1, %s5
  %s8 = scalar_select 0, %s7, %s5
  $region1: #{bottleneck_hl_forward.4} parent=0
    #allocation2 [shape = 'u8[32768]{0}', space=vmem, size = 0x8000, scoped, tag = 'input window, operand 0']
    loop: start=0, step=1, limit=6
    $region2: #{bottleneck_hl_forward.4} parent=1 // loop_pre_header
      _
    $region3: #{bottleneck_hl_forward.4} parent=1 // loop_header
      %s10 = sphi 0, %s14
      %p11 = scmp.ge.s32.totalorder %s10, 6
      %s17 = sphi 0, %s29
      %s18 = sphi 0, %s25
      %s19 = sphi 0, %s17
      %s20 = sphi 0, %s18
      %s21 = sphi 0, %s19
      %s22 = sphi 0, %s20
      %s34 = sphi 0, %s36
      %s37 = sphi 0, %s34
      %s38 = sphi 0, %s37
      %s54 = sphi 0, %s38
      %s58 = sphi 0, %s58
      %s60 = sphi 0, %s58
      %s61 = sphi 0, %s60
      %s75 = sphi 0, %s61
      %s83 = sphi 0, %s85
      %s86 = sphi 0, %s83
      %s87 = sphi 0, %s86
      %s103 = sphi 0, %s87
      %s111 = sphi 0, %s113
      %s114 = sphi 0, %s111
      %s115 = sphi 0, %s114
      %s131 = sphi 0, %s115
    $region4: #{bottleneck_hl_forward.4} parent=1 // loop_header_branch
      %13 = sbr.rel (%p11) target = $region8
    $region5: #{bottleneck_hl_forward.4} parent=1 // loop_body
      %s15 = ssub.s32 %s10, 1
      %s16 = ssub.s32 %s10, 2
      %s23 = sadd.s32 1, %s18
      %p24 = scmp.ge.s32.totalorder %s23, 2
      %s25 = scalar_select %p24, 0, %s23
      %s26 = sadd.s32 1, %s17
      %s27 = scalar_select %p24, %s26, %s17
      %p28 = scmp.ge.s32.totalorder %s27, 2
      %s29 = scalar_select %p28, 0, %s27
      %s30 = ssub.s32 %s17, %s29
      %s31 = ssub.s32 %s18, %s25
      %s32 = sor.u32 %s30, %s31
      %p33 = scmp.eq.s32.totalorder %s32, 0
      %s35 = sadd.s32 %s34, 1
      %s36 = scalar_select %p33, %s34, %s35
      %p39 = pneg %p33
      %p40 = scmp.eq.s32.totalorder %s10, 3
      %p41 = por %p39, %p40
      %p42 = scmp.ne.s32.totalorder %s34, %s37
      %p43 = scmp.eq.s32.totalorder %s10, 0
      %p44 = por %p42, %p43
      %p45 = scmp.ne.s32.totalorder %s34, %s37
      %p46 = scmp.eq.s32.totalorder %s15, 3
      %p47 = por %p45, %p46
      %p48 = scmp.ne.s32.totalorder %s37, %s38
      %p49 = scmp.eq.s32.totalorder %s15, 0
      %p50 = por %p48, %p49
      %p51 = scmp.ne.s32.totalorder %s37, %s38
      %p52 = scmp.eq.s32.totalorder %s16, 3
      %p53 = por %p51, %p52
      %p55 = scmp.ne.s32.totalorder %s38, %s54
      %p56 = scmp.eq.s32.totalorder %s16, 0
      %p57 = por %p55, %p56
      %s59 = sadd.s32 %s58, 1
      %p62 = scmp.eq.s32.totalorder %s10, 3
      %p63 = scmp.ne.s32.totalorder %s58, %s60
      %p64 = scmp.eq.s32.totalorder %s10, 0
      %p65 = por %p63, %p64
      %p66 = scmp.ne.s32.totalorder %s58, %s60
      %p67 = scmp.eq.s32.totalorder %s15, 3
      %p68 = por %p66, %p67
      %p69 = scmp.ne.s32.totalorder %s60, %s61
      %p70 = scmp.eq.s32.totalorder %s15, 0
      %p71 = por %p69, %p70
      %p72 = scmp.ne.s32.totalorder %s60, %s61
      %p73 = scmp.eq.s32.totalorder %s16, 3
      %p74 = por %p72, %p73
      %p76 = scmp.ne.s32.totalorder %s61, %s75
      %p77 = scmp.eq.s32.totalorder %s16, 0
      %p78 = por %p76, %p77
      %s79 = ssub.s32 %s17, %s29
      %s80 = ssub.s32 %s18, %s25
      %s81 = sor.u32 %s79, %s80
      %p82 = scmp.eq.s32.totalorder %s81, 0
      %s84 = sadd.s32 %s83, 1
      %s85 = scalar_select %p82, %s83, %s84
      %p88 = pneg %p82
      %p89 = scmp.eq.s32.totalorder %s10, 3
      %p90 = por %p88, %p89
      %p91 = scmp.ne.s32.totalorder %s83, %s86
      %p92 = scmp.eq.s32.totalorder %s10, 0
      %p93 = por %p91, %p92
      %p94 = scmp.ne.s32.totalorder %s83, %s86
      %p95 = scmp.eq.s32.totalorder %s15, 3
      %p96 = por %p94, %p95
      %p97 = scmp.ne.s32.totalorder %s86, %s87
      %p98 = scmp.eq.s32.totalorder %s15, 0
      %p99 = por %p97, %p98
      %p100 = scmp.ne.s32.totalorder %s86, %s87
      %p101 = scmp.eq.s32.totalorder %s16, 3
      %p102 = por %p100, %p101
      %p104 = scmp.ne.s32.totalorder %s87, %s103
      %p105 = scmp.eq.s32.totalorder %s16, 0
      %p106 = por %p104, %p105
      %s107 = ssub.s32 %s17, %s29
      %s108 = ssub.s32 %s18, %s25
      %s109 = sor.u32 %s107, %s108
      %p110 = scmp.eq.s32.totalorder %s109, 0
      %s112 = sadd.s32 %s111, 1
      %s113 = scalar_select %p110, %s111, %s112
      %p116 = pneg %p110
      %p117 = scmp.eq.s32.totalorder %s10, 3
      %p118 = por %p116, %p117
      %p119 = scmp.ne.s32.totalorder %s111, %s114
      %p120 = scmp.eq.s32.totalorder %s10, 0
      %p121 = por %p119, %p120
      %p122 = scmp.ne.s32.totalorder %s111, %s114
      %p123 = scmp.eq.s32.totalorder %s15, 3
      %p124 = por %p122, %p123
      %p125 = scmp.ne.s32.totalorder %s114, %s115
      %p126 = scmp.eq.s32.totalorder %s15, 0
      %p127 = por %p125, %p126
      %p128 = scmp.ne.s32.totalorder %s114, %s115
      %p129 = scmp.eq.s32.totalorder %s16, 3
      %p130 = por %p128, %p129
      %p132 = scmp.ne.s32.totalorder %s115, %s131
      %p133 = scmp.eq.s32.totalorder %s16, 0
      %p134 = por %p132, %p133
      %p135 = scmp.le.s32.totalorder 1, %s10
      %p136 = scmp.lt.s32.totalorder %s10, 5
      %p137 = pnand %p135, %p136
      %p138 = pneg %p137
      // Predicated region
      $region9: #{bottleneck_hl_forward.4} parent=5 // pred_check
        _
      $region10: #{bottleneck_hl_forward.4} parent=5 // pred_check_branch
        %140 = sbr.rel (%p137) target = $region12
      $region11: #{bottleneck_hl_forward.4} parent=5 // pred_region
        %s141 = ssub.s32 %s10, 1
        // Predicated region
        $region13: #{bottleneck_hl_forward.4} parent=11 // pred_check
          %p142 = pneg %p71
        $region14: #{bottleneck_hl_forward.4} parent=11 // pred_check_branch
          %144 = sbr.rel (%p142) target = $region16
        $region15: #{bottleneck_hl_forward.4} parent=11 // pred_region
          _
        $region16: #{bottleneck_hl_forward.4} parent=11 // pred_fallthru
          _
      $region12: #{bottleneck_hl_forward.4} parent=5 // pred_fallthru
        _
      %p145 = scmp.lt.s32.totalorder %s10, 4
      // Predicated region
      $region17: #{bottleneck_hl_forward.4} parent=5 // pred_check
        %p146 = pneg %p145
      $region18: #{bottleneck_hl_forward.4} parent=5 // pred_check_branch
        %148 = sbr.rel (%p146) target = $region20
      $region19: #{bottleneck_hl_forward.4} parent=5 // pred_region
        // Predicated region
        $region21: #{bottleneck_hl_forward.4} parent=19 // pred_check
          %p149 = pneg %p44
        $region22: #{bottleneck_hl_forward.4} parent=19 // pred_check_branch
          %151 = sbr.rel (%p149) target = $region24
        $region23: #{bottleneck_hl_forward.4} parent=19 // pred_region
          %s152 = sand.u32 %s34, 1
          %s153 = sand.u32 %s34, 1
          %s154 = smul.addr %s153, 32
          %s155 = scalar_lea.vmem [#allocation2], %s154
          %s156 = smul.addr %s17, 8
          %s157 = sadd.s32 %s18, %s156
          %s158 = smul.addr %s157, 8
          %s159 = scalar_lea.vmem %s0, %s158
          // Predicated region
          $region25: #{bottleneck_hl_forward.4} parent=23 // pred_check
            _
          $region26: #{bottleneck_hl_forward.4} parent=23 // pred_check_branch
            %161 = sbr.rel (0) target = $region28
          $region27: #{bottleneck_hl_forward.4} parent=23 // pred_region
            // Predicated region
            $region29: #{bottleneck_hl_forward.4} parent=27 // pred_check
              _
            $region30: #{bottleneck_hl_forward.4} parent=27 // pred_check_branch
              %163 = sbr.rel (0) target = $region32
            $region31: #{bottleneck_hl_forward.4} parent=27 // pred_region
              // Predicated region
              $region44: #{bottleneck_hl_forward.4} parent=31 // pred_check
                _
              $region45: #{bottleneck_hl_forward.4} parent=31 // pred_check_branch
                %184 = sbr.rel (0) target = $region47
              $region46: #{bottleneck_hl_forward.4} parent=31 // pred_region
                loop: start=0, step=1, limit=1
                $region48: #{bottleneck_hl_forward.4} parent=46 // loop_pre_header
                  _
                $region49: #{bottleneck_hl_forward.4} parent=46 // loop_header
                  %s186 = sphi 0, %s190
                  %p187 = scmp.ge.s32.totalorder %s186, 1
                  %s191 = sphi %s159, %s159
                  %s192 = sphi %s155, %s155
                $region50: #{bottleneck_hl_forward.4} parent=46 // loop_header_branch
                  %189 = sbr.rel (%p187) target = $region54
                $region51: #{bottleneck_hl_forward.4} parent=46 // loop_body
                  %v193 = vld [vmem:[%s191] sm:$0xff]
                  %194 = vst [vmem:[%s192] sm:$0xff] %v193
                  %v195 = vld [vmem:[%s191 + $0x10] sm:$0xff]
                  %196 = vst [vmem:[%s192 + $0x8] sm:$0xff] %v195
                  %v197 = vld [vmem:[%s191 + $0x20] sm:$0xff]
                  %198 = vst [vmem:[%s192 + $0x10] sm:$0xff] %v197
                  %v199 = vld [vmem:[%s191 + $0x30] sm:$0xff]
                  %200 = vst [vmem:[%s192 + $0x18] sm:$0xff] %v199
                $region52: #{bottleneck_hl_forward.4} parent=46 // loop_footer
                  %s190 = sadd.s32 1, %s186
                $region53: #{bottleneck_hl_forward.4} parent=46 // loop_footer_branch
                  %185 = sbr.rel target = $region49
                $region54: #{bottleneck_hl_forward.4} parent=46 // loop_exit
                  _
              $region47: #{bottleneck_hl_forward.4} parent=31 // pred_fallthru
                _
              // Predicated region
              $region55: #{bottleneck_hl_forward.4} parent=31 // pred_check
                _
              $region56: #{bottleneck_hl_forward.4} parent=31 // pred_check_branch
                %202 = sbr.rel target = $region58
              $region57: #{bottleneck_hl_forward.4} parent=31 // pred_region
                _
              $region58: #{bottleneck_hl_forward.4} parent=31 // pred_fallthru
                _
            $region32: #{bottleneck_hl_forward.4} parent=27 // pred_fallthru
              _
            // Predicated region
            $region33: #{bottleneck_hl_forward.4} parent=27 // pred_check
              _
            $region34: #{bottleneck_hl_forward.4} parent=27 // pred_check_branch
              %165 = sbr.rel target = $region36
            $region35: #{bottleneck_hl_forward.4} parent=27 // pred_region
              loop: start=0, step=1, limit=1
              $region37: #{bottleneck_hl_forward.4} parent=35 // loop_pre_header
                _
              $region38: #{bottleneck_hl_forward.4} parent=35 // loop_header
                %s168 = sphi 0, %s172
                %p169 = scmp.ge.s32.totalorder %s168, 1
                %s173 = sphi %s159, %s159
                %s174 = sphi %s155, %s155
              $region39: #{bottleneck_hl_forward.4} parent=35 // loop_header_branch
                %171 = sbr.rel (%p169) target = $region43
              $region40: #{bottleneck_hl_forward.4} parent=35 // loop_body
                %v175 = vld [vmem:[%s173] sm:$0xff]
                %176 = vst [vmem:[%s174] sm:$0xff] %v175
                %v177 = vld [vmem:[%s173 + $0x10] sm:$0xff]
                %178 = vst [vmem:[%s174 + $0x8] sm:$0xff] %v177
                %v179 = vld [vmem:[%s173 + $0x20] sm:$0xff]
                %180 = vst [vmem:[%s174 + $0x10] sm:$0xff] %v179
                %v181 = vld [vmem:[%s173 + $0x30] sm:$0xff]
                %182 = vst [vmem:[%s174 + $0x18] sm:$0xff] %v181
              $region41: #{bottleneck_hl_forward.4} parent=35 // loop_footer
                %s172 = sadd.s32 1, %s168
              $region42: #{bottleneck_hl_forward.4} parent=35 // loop_footer_branch
                %167 = sbr.rel target = $region38
              $region43: #{bottleneck_hl_forward.4} parent=35 // loop_exit
                _
            $region36: #{bottleneck_hl_forward.4} parent=27 // pred_fallthru
              _
          $region28: #{bottleneck_hl_forward.4} parent=23 // pred_fallthru
            _
          %203 = vnop
        $region24: #{bottleneck_hl_forward.4} parent=19 // pred_fallthru
          _
      $region20: #{bottleneck_hl_forward.4} parent=5 // pred_fallthru
        _
      %p204 = scmp.le.s32.totalorder 1, %s10
      %p205 = scmp.lt.s32.totalorder %s10, 5
      %p206 = pnand %p204, %p205
      %p207 = pneg %p206
      // Predicated region
      $region59: #{bottleneck_hl_forward.4} parent=5 // pred_check
        _
      $region60: #{bottleneck_hl_forward.4} parent=5 // pred_check_branch
        %209 = sbr.rel (%p206) target = $region62
      $region61: #{bottleneck_hl_forward.4} parent=5 // pred_region
        %s210 = ssub.s32 %s10, 1
        %s211 = sand.u32 %s37, 1
        %s212 = sand.u32 %s37, 1
        %s213 = smul.addr %s212, 32
        %s214 = scalar_lea.vmem [#allocation2], %s213
        // Predicated region
        $region63: #{bottleneck_hl_forward.4} parent=61 // pred_check
          %p215 = pneg %p50
        $region64: #{bottleneck_hl_forward.4} parent=61 // pred_check_branch
          %217 = sbr.rel (%p215) target = $region66
        $region65: #{bottleneck_hl_forward.4} parent=61 // pred_region
          _
        $region66: #{bottleneck_hl_forward.4} parent=61 // pred_fallthru
          _
        %s218 = sand.u32 %s37, 1
        %s219 = sand.u32 %s37, 1
        %s220 = smul.addr %s219, 32
        %s221 = scalar_lea.vmem [#allocation2], %s220
        %p222 = pneg %p50
        %p223 = pneg %p47
        %p224 = pneg %p71
        %p225 = pneg %p68
        %p226 = pneg %p99
        %p227 = pneg %p96
        %p228 = scmp.lt.s32.totalorder %s19, 1
        %s229 = scalar_select %p228, %s19, 1
        %p230 = scmp.lt.s32.totalorder %s20, 1
        %s231 = scalar_select %p230, %s20, 1
        %s232 = smul.addr %s229, 2
        %s233 = sadd.s32 %s231, %s232
        %s234 = smul.addr %s233, 4
        %s235 = scalar_lea.vmem %s2, %s234
        %p236 = pneg %p127
        %p237 = pneg %p124
        %p238 = scmp.lt.s32.totalorder %s19, 1
        %s239 = scalar_select %p238, %s19, 1
        %p240 = scmp.lt.s32.totalorder %s20, 1
        %s241 = scalar_select %p240, %s20, 1
        %s242 = smul.addr %s241, 2
        %s243 = smul.addr %s239, 4
        %s244 = sadd.s32 %s242, %s243
        %s245 = smul.addr %s244, 8
        %s246 = scalar_lea.vmem %s3, %s245
        %p247 = scmp.lt.s32.totalorder %s19, 1
        %s248 = scalar_select %p247, %s19, 1
        %p249 = scmp.lt.s32.totalorder %s20, 1
        %s250 = scalar_select %p249, %s20, 1
        %s251 = smul.addr %s248, 2
        %s252 = sadd.s32 %s250, %s251
        %s253 = smul.addr %s252, 4
        %s254 = scalar_lea.vmem %s2, %s253
        %p255 = scmp.lt.s32.totalorder %s19, 1
        %s256 = scalar_select %p255, %s19, 1
        %p257 = scmp.lt.s32.totalorder %s20, 1
        %s258 = scalar_select %p257, %s20, 1
        %s259 = smul.addr %s258, 2
        %s260 = smul.addr %s256, 4
        %s261 = sadd.s32 %s259, %s260
        %s262 = smul.addr %s261, 8
        %s263 = scalar_lea.vmem %s3, %s262
        %v265 = vld [vmem:[%s1] sm:$0xf]
        %v266 = vld [vmem:[%s214] sm:$0xff]
        %v267 = vld [vmem:[%s214 + $0x8] sm:$0xff]
        %v268 = vld [vmem:[%s214 + $0x10] sm:$0xff]
        %v269 = vld [vmem:[%s214 + $0x18] sm:$0xff]
        %v270 = vpack.c.bf16 %v267, %v266
        %v271 = vpack.c.bf16 %v269, %v268
        %vm272 = vcmask 261120
        %v274 = vsel %vm272, %v265, 0
        %276 = vmatprep.subr.bf16.mxu0 0
        %277 = vmatpush1.bf16.msra.mxu0 %v270
        %278 = vmatprep.subr.bf16.mxu0 0
        %279 = vmatpush1.bf16.msra.mxu0 %v271
        %280 = vmatprep.subr.bf16.mxu0 0
        %281 = vmatpush1.bf16.msra.mxu0 0
        %282 = vmatprep.subr.bf16.mxu0 0
        %283 = vmatpush1.bf16.msra.mxu0 0
        %284 = vmatprep.subr.bf16.mxu0 0
        %285 = vmatpush1.bf16.msra.mxu0 0
        %286 = vmatprep.subr.bf16.mxu0 0
        %287 = vmatpush1.bf16.msra.mxu0 0
        %288 = vmatprep.subr.bf16.mxu0 0
        %289 = vmatpush1.bf16.msra.mxu0 0
        %290 = vmatprep.subr.bf16.mxu0 0
        %291 = vmatpush1.bf16.msra.mxu0 0
        %292 = vmatprep.subr.bf16.mxu0 0
        %293 = vmatpush1.bf16.msra.mxu0 0
        %294 = vmatprep.subr.bf16.mxu0 0
        %295 = vmatpush1.bf16.msra.mxu0 0
        %296 = vmatprep.subr.bf16.mxu0 0
        %297 = vmatpush1.bf16.msra.mxu0 0
        %298 = vmatprep.subr.bf16.mxu0 0
        %299 = vmatpush1.bf16.msra.mxu0 0
        %300 = vmatprep.subr.bf16.mxu0 0
        %301 = vmatpush1.bf16.msra.mxu0 0
        %302 = vmatprep.subr.bf16.mxu0 0
        %303 = vmatpush1.bf16.msra.mxu0 0
        %304 = vmatprep.subr.bf16.mxu0 0
        %305 = vmatpush1.bf16.msra.mxu0 0
        %306 = vmatprep.subr.bf16.mxu0 0
        %307 = vmatpush1.bf16.msra.mxu0 0
        %308 = vmatprep.mubr.bf16.mxu0 0
        %309 = vmatmul.mubr.bf16.gmra.mrb[0].mxu0 %v274
        %v310 = vpop.f32.mrb[0].mxu0
        %v311 = vadd.f32 0.0, %v310
        %v312 = vpop.f32.mrb[0].mxu0
        %v313 = vpop.f32.mrb[0].mxu0
        %v314 = vpop.f32.mrb[0].mxu0
        %315 = vdwg.mxu0
        %v316 = vpack.c.bf16 %v311, %v311
        %317 = vst [vmem:[%s254] sm:$0xf] %v316
        %v318 = vunpack.c.l.bf16 %v316
        %319 = vadd.xlane.f32.xlu0 %v318
        %v320 = vpop.xlane.xlu0 %319
        %vm321 = vcmask 7168
        %322 = vst.msk [vmem:[%s263] sm:$0xff] %vm321, %v320
        %v323 = vmul.f32 %v318, %v318
        %324 = vadd.xlane.f32.xlu0 %v323
        %v325 = vpop.xlane.xlu0 %324
        %326 = vst.msk [vmem:[%s263 + $0x8] sm:$0xff] %vm321, %v325
        %p327 = scmp.lt.s32.totalorder %s19, 1
        %s328 = scalar_select %p327, %s19, 1
        %p329 = scmp.lt.s32.totalorder %s20, 1
        %s330 = scalar_select %p329, %s20, 1
        %s331 = smul.addr %s328, 2
        %s332 = sadd.s32 %s330, %s331
        %s333 = smul.addr %s332, 4
        %s334 = scalar_lea.vmem %s2, %s333
        %p335 = scmp.lt.s32.totalorder %s19, 1
        %s336 = scalar_select %p335, %s19, 1
        %p337 = scmp.lt.s32.totalorder %s20, 1
        %s338 = scalar_select %p337, %s20, 1
        %s339 = smul.addr %s338, 2
        %s340 = smul.addr %s336, 4
        %s341 = sadd.s32 %s339, %s340
        %s342 = smul.addr %s341, 8
        %s343 = scalar_lea.vmem %s3, %s342
        // Predicated region
        $region67: #{bottleneck_hl_forward.4} parent=61 // pred_check
          %p344 = pneg %p96
        $region68: #{bottleneck_hl_forward.4} parent=61 // pred_check_branch
          %346 = sbr.rel (%p344) target = $region70
        $region69: #{bottleneck_hl_forward.4} parent=61 // pred_region
          _
        $region70: #{bottleneck_hl_forward.4} parent=61 // pred_fallthru
          _
        // Predicated region
        $region71: #{bottleneck_hl_forward.4} parent=61 // pred_check
          %p347 = pneg %p124
        $region72: #{bottleneck_hl_forward.4} parent=61 // pred_check_branch
          %349 = sbr.rel (%p347) target = $region74
        $region73: #{bottleneck_hl_forward.4} parent=61 // pred_region
          _
        $region74: #{bottleneck_hl_forward.4} parent=61 // pred_fallthru
          _
      $region62: #{bottleneck_hl_forward.4} parent=5 // pred_fallthru
        _
      %p350 = scmp.le.s32.totalorder 2, %s10
      // Predicated region
      $region75: #{bottleneck_hl_forward.4} parent=5 // pred_check
        %p351 = pneg %p350
      $region76: #{bottleneck_hl_forward.4} parent=5 // pred_check_branch
        %353 = sbr.rel (%p351) target = $region78
      $region77: #{bottleneck_hl_forward.4} parent=5 // pred_region
        %s354 = ssub.s32 %s10, 2
        // Predicated region
        $region79: #{bottleneck_hl_forward.4} parent=77 // pred_check
          %p355 = pneg %p102
        $region80: #{bottleneck_hl_forward.4} parent=77 // pred_check_branch
          %357 = sbr.rel (%p355) target = $region82
        $region81: #{bottleneck_hl_forward.4} parent=77 // pred_region
          %p358 = scmp.lt.s32.totalorder %s21, 1
          %s359 = scalar_select %p358, %s21, 1
          %p360 = scmp.lt.s32.totalorder %s22, 1
          %s361 = scalar_select %p360, %s22, 1
          %s362 = smul.addr %s359, 2
          %s363 = sadd.s32 %s361, %s362
          %s364 = smul.addr %s363, 4
          %s365 = scalar_lea.vmem %s2, %s364
        $region82: #{bottleneck_hl_forward.4} parent=77 // pred_fallthru
          _
        // Predicated region
        $region83: #{bottleneck_hl_forward.4} parent=77 // pred_check
          %p366 = pneg %p130
        $region84: #{bottleneck_hl_forward.4} parent=77 // pred_check_branch
          %368 = sbr.rel (%p366) target = $region86
        $region85: #{bottleneck_hl_forward.4} parent=77 // pred_region
          %p369 = scmp.lt.s32.totalorder %s21, 1
          %s370 = scalar_select %p369, %s21, 1
          %p371 = scmp.lt.s32.totalorder %s22, 1
          %s372 = scalar_select %p371, %s22, 1
          %s373 = smul.addr %s372, 2
          %s374 = smul.addr %s370, 4
          %s375 = sadd.s32 %s373, %s374
          %s376 = smul.addr %s375, 8
          %s377 = scalar_lea.vmem %s3, %s376
        $region86: #{bottleneck_hl_forward.4} parent=77 // pred_fallthru
          _
      $region78: #{bottleneck_hl_forward.4} parent=5 // pred_fallthru
        _
    $region6: #{bottleneck_hl_forward.4} parent=1 // loop_footer
      %s14 = sadd.s32 1, %s10
    $region7: #{bottleneck_hl_forward.4} parent=1 // loop_footer_branch
      %9 = sbr.rel target = $region3
    $region8: #{bottleneck_hl_forward.4} parent=1 // loop_exit
      _

// kernel: bottleneck_hl_forward.7
$region0: #{bottleneck_hl_forward.7}
  #allocation0 [shape = 'u32[]', space=smem, size = 0x4, offset = 0x4, fixed_abs, tag = 'smem constant byte address 0x4 - core index']
  #allocation1 [shape = 'u32[144,128]{1,0:T(1,128)}', space=vmem, size = 0x12000, scoped, tag = 'internal scratch']
  %s0 = inlined_call_operand.vmem [shape: bf16[2,8,256], index: 0, kind: input, shape index: {}]
  %s1 = inlined_call_operand.vmem [shape: f32[2,32,256], index: 1, kind: input, shape index: {}, may-alias: {1,6}]
  %s2 = inlined_call_operand.vmem [shape: f32[8,1], index: 2, kind: input, shape index: {}]
  %s3 = inlined_call_operand.vmem [shape: f32[8,1], index: 3, kind: input, shape index: {}]
  %s4 = inlined_call_operand.vmem [shape: bf16[32,8], index: 4, kind: input, shape index: {}]
  %s5 = inlined_call_operand.vmem [shape: f32[32,1], index: 5, kind: input, shape index: {}]
  %s6 = inlined_call_operand.vmem [shape: f32[2,32,256], index: 6, kind: output, shape index: {}, may-alias: {1,6}]
  %s7 = sld [smem:[#allocation0]]
  $region129: #{bottleneck_hl_forward.7} parent=0
    _
  %s9 = ssub.s32 1, %s7
  %s10 = scalar_select 0, %s9, %s7
  $region1: #{bottleneck_hl_forward.7} parent=0
    #allocation2 [shape = 'u8[32768]{0}', space=vmem, size = 0x8000, scoped, tag = 'input window, operand 1']
    #allocation3 [shape = 'u8[32768]{0}', space=vmem, size = 0x8000, scoped, tag = 'output window, operand 0']
    loop: start=0, step=1, limit=6
    $region2: #{bottleneck_hl_forward.7} parent=1 // loop_pre_header
      _
    $region3: #{bottleneck_hl_forward.7} parent=1 // loop_header
      %s12 = sphi 0, %s16
      %p13 = scmp.ge.s32.totalorder %s12, 6
      %s19 = sphi 0, %s31
      %s20 = sphi 0, %s27
      %s21 = sphi 0, %s19
      %s22 = sphi 0, %s20
      %s23 = sphi 0, %s21
      %s24 = sphi 0, %s22
      %s36 = sphi 0, %s38
      %s39 = sphi 0, %s36
      %s40 = sphi 0, %s39
      %s56 = sphi 0, %s40
      %s64 = sphi 0, %s66
      %s67 = sphi 0, %s64
      %s68 = sphi 0, %s67
      %s84 = sphi 0, %s68
      %s88 = sphi 0, %s88
      %s90 = sphi 0, %s88
      %s91 = sphi 0, %s90
      %s105 = sphi 0, %s91
      %s109 = sphi 0, %s109
      %s111 = sphi 0, %s109
      %s112 = sphi 0, %s111
      %s126 = sphi 0, %s112
      %s130 = sphi 0, %s130
      %s132 = sphi 0, %s130
      %s133 = sphi 0, %s132
      %s147 = sphi 0, %s133
      %s151 = sphi 0, %s151
      %s153 = sphi 0, %s151
      %s154 = sphi 0, %s153
      %s168 = sphi 0, %s154
      %s176 = sphi 0, %s178
      %s179 = sphi 0, %s176
      %s180 = sphi 0, %s179
      %s196 = sphi 0, %s180
    $region4: #{bottleneck_hl_forward.7} parent=1 // loop_header_branch
      %15 = sbr.rel (%p13) target = $region8
    $region5: #{bottleneck_hl_forward.7} parent=1 // loop_body
      %s17 = ssub.s32 %s12, 1
      %s18 = ssub.s32 %s12, 2
      %s25 = sadd.s32 1, %s20
      %p26 = scmp.ge.s32.totalorder %s25, 2
      %s27 = scalar_select %p26, 0, %s25
      %s28 = sadd.s32 1, %s19
      %s29 = scalar_select %p26, %s28, %s19
      %p30 = scmp.ge.s32.totalorder %s29, 2
      %s31 = scalar_select %p30, 0, %s29
      %s32 = ssub.s32 %s19, %s31
      %s33 = ssub.s32 %s20, %s27
      %s34 = sor.u32 %s32, %s33
      %p35 = scmp.eq.s32.totalorder %s34, 0
      %s37 = sadd.s32 %s36, 1
      %s38 = scalar_select %p35, %s36, %s37
      %p41 = pneg %p35
      %p42 = scmp.eq.s32.totalorder %s12, 3
      %p43 = por %p41, %p42
      %p44 = scmp.ne.s32.totalorder %s36, %s39
      %p45 = scmp.eq.s32.totalorder %s12, 0
      %p46 = por %p44, %p45
      %p47 = scmp.ne.s32.totalorder %s36, %s39
      %p48 = scmp.eq.s32.totalorder %s17, 3
      %p49 = por %p47, %p48
      %p50 = scmp.ne.s32.totalorder %s39, %s40
      %p51 = scmp.eq.s32.totalorder %s17, 0
      %p52 = por %p50, %p51
      %p53 = scmp.ne.s32.totalorder %s39, %s40
      %p54 = scmp.eq.s32.totalorder %s18, 3
      %p55 = por %p53, %p54
      %p57 = scmp.ne.s32.totalorder %s40, %s56
      %p58 = scmp.eq.s32.totalorder %s18, 0
      %p59 = por %p57, %p58
      %s60 = ssub.s32 %s19, %s31
      %s61 = ssub.s32 %s20, %s27
      %s62 = sor.u32 %s60, %s61
      %p63 = scmp.eq.s32.totalorder %s62, 0
      %s65 = sadd.s32 %s64, 1
      %s66 = scalar_select %p63, %s64, %s65
      %p69 = pneg %p63
      %p70 = scmp.eq.s32.totalorder %s12, 3
      %p71 = por %p69, %p70
      %p72 = scmp.ne.s32.totalorder %s64, %s67
      %p73 = scmp.eq.s32.totalorder %s12, 0
      %p74 = por %p72, %p73
      %p75 = scmp.ne.s32.totalorder %s64, %s67
      %p76 = scmp.eq.s32.totalorder %s17, 3
      %p77 = por %p75, %p76
      %p78 = scmp.ne.s32.totalorder %s67, %s68
      %p79 = scmp.eq.s32.totalorder %s17, 0
      %p80 = por %p78, %p79
      %p81 = scmp.ne.s32.totalorder %s67, %s68
      %p82 = scmp.eq.s32.totalorder %s18, 3
      %p83 = por %p81, %p82
      %p85 = scmp.ne.s32.totalorder %s68, %s84
      %p86 = scmp.eq.s32.totalorder %s18, 0
      %p87 = por %p85, %p86
      %s89 = sadd.s32 %s88, 1
      %p92 = scmp.eq.s32.totalorder %s12, 3
      %p93 = scmp.ne.s32.totalorder %s88, %s90
      %p94 = scmp.eq.s32.totalorder %s12, 0
      %p95 = por %p93, %p94
      %p96 = scmp.ne.s32.totalorder %s88, %s90
      %p97 = scmp.eq.s32.totalorder %s17, 3
      %p98 = por %p96, %p97
      %p99 = scmp.ne.s32.totalorder %s90, %s91
      %p100 = scmp.eq.s32.totalorder %s17, 0
      %p101 = por %p99, %p100
      %p102 = scmp.ne.s32.totalorder %s90, %s91
      %p103 = scmp.eq.s32.totalorder %s18, 3
      %p104 = por %p102, %p103
      %p106 = scmp.ne.s32.totalorder %s91, %s105
      %p107 = scmp.eq.s32.totalorder %s18, 0
      %p108 = por %p106, %p107
      %s110 = sadd.s32 %s109, 1
      %p113 = scmp.eq.s32.totalorder %s12, 3
      %p114 = scmp.ne.s32.totalorder %s109, %s111
      %p115 = scmp.eq.s32.totalorder %s12, 0
      %p116 = por %p114, %p115
      %p117 = scmp.ne.s32.totalorder %s109, %s111
      %p118 = scmp.eq.s32.totalorder %s17, 3
      %p119 = por %p117, %p118
      %p120 = scmp.ne.s32.totalorder %s111, %s112
      %p121 = scmp.eq.s32.totalorder %s17, 0
      %p122 = por %p120, %p121
      %p123 = scmp.ne.s32.totalorder %s111, %s112
      %p124 = scmp.eq.s32.totalorder %s18, 3
      %p125 = por %p123, %p124
      %p127 = scmp.ne.s32.totalorder %s112, %s126
      %p128 = scmp.eq.s32.totalorder %s18, 0
      %p129 = por %p127, %p128
      %s131 = sadd.s32 %s130, 1
      %p134 = scmp.eq.s32.totalorder %s12, 3
      %p135 = scmp.ne.s32.totalorder %s130, %s132
      %p136 = scmp.eq.s32.totalorder %s12, 0
      %p137 = por %p135, %p136
      %p138 = scmp.ne.s32.totalorder %s130, %s132
      %p139 = scmp.eq.s32.totalorder %s17, 3
      %p140 = por %p138, %p139
      %p141 = scmp.ne.s32.totalorder %s132, %s133
      %p142 = scmp.eq.s32.totalorder %s17, 0
      %p143 = por %p141, %p142
      %p144 = scmp.ne.s32.totalorder %s132, %s133
      %p145 = scmp.eq.s32.totalorder %s18, 3
      %p146 = por %p144, %p145
      %p148 = scmp.ne.s32.totalorder %s133, %s147
      %p149 = scmp.eq.s32.totalorder %s18, 0
      %p150 = por %p148, %p149
      %s152 = sadd.s32 %s151, 1
      %p155 = scmp.eq.s32.totalorder %s12, 3
      %p156 = scmp.ne.s32.totalorder %s151, %s153
      %p157 = scmp.eq.s32.totalorder %s12, 0
      %p158 = por %p156, %p157
      %p159 = scmp.ne.s32.totalorder %s151, %s153
      %p160 = scmp.eq.s32.totalorder %s17, 3
      %p161 = por %p159, %p160
      %p162 = scmp.ne.s32.totalorder %s153, %s154
      %p163 = scmp.eq.s32.totalorder %s17, 0
      %p164 = por %p162, %p163
      %p165 = scmp.ne.s32.totalorder %s153, %s154
      %p166 = scmp.eq.s32.totalorder %s18, 3
      %p167 = por %p165, %p166
      %p169 = scmp.ne.s32.totalorder %s154, %s168
      %p170 = scmp.eq.s32.totalorder %s18, 0
      %p171 = por %p169, %p170
      %s172 = ssub.s32 %s19, %s31
      %s173 = ssub.s32 %s20, %s27
      %s174 = sor.u32 %s172, %s173
      %p175 = scmp.eq.s32.totalorder %s174, 0
      %s177 = sadd.s32 %s176, 1
      %s178 = scalar_select %p175, %s176, %s177
      %p181 = pneg %p175
      %p182 = scmp.eq.s32.totalorder %s12, 3
      %p183 = por %p181, %p182
      %p184 = scmp.ne.s32.totalorder %s176, %s179
      %p185 = scmp.eq.s32.totalorder %s12, 0
      %p186 = por %p184, %p185
      %p187 = scmp.ne.s32.totalorder %s176, %s179
      %p188 = scmp.eq.s32.totalorder %s17, 3
      %p189 = por %p187, %p188
      %p190 = scmp.ne.s32.totalorder %s179, %s180
      %p191 = scmp.eq.s32.totalorder %s17, 0
      %p192 = por %p190, %p191
      %p193 = scmp.ne.s32.totalorder %s179, %s180
      %p194 = scmp.eq.s32.totalorder %s18, 3
      %p195 = por %p193, %p194
      %p197 = scmp.ne.s32.totalorder %s180, %s196
      %p198 = scmp.eq.s32.totalorder %s18, 0
      %p199 = por %p197, %p198
      %p200 = scmp.le.s32.totalorder 1, %s12
      %p201 = scmp.lt.s32.totalorder %s12, 5
      %p202 = pnand %p200, %p201
      %p203 = pneg %p202
      // Predicated region
      $region9: #{bottleneck_hl_forward.7} parent=5 // pred_check
        _
      $region10: #{bottleneck_hl_forward.7} parent=5 // pred_check_branch
        %205 = sbr.rel (%p202) target = $region12
      $region11: #{bottleneck_hl_forward.7} parent=5 // pred_region
        %s206 = ssub.s32 %s12, 1
        // Predicated region
        $region13: #{bottleneck_hl_forward.7} parent=11 // pred_check
          %p207 = pneg %p101
        $region14: #{bottleneck_hl_forward.7} parent=11 // pred_check_branch
          %209 = sbr.rel (%p207) target = $region16
        $region15: #{bottleneck_hl_forward.7} parent=11 // pred_region
          _
        $region16: #{bottleneck_hl_forward.7} parent=11 // pred_fallthru
          _
        // Predicated region
        $region17: #{bottleneck_hl_forward.7} parent=11 // pred_check
          %p210 = pneg %p122
        $region18: #{bottleneck_hl_forward.7} parent=11 // pred_check_branch
          %212 = sbr.rel (%p210) target = $region20
        $region19: #{bottleneck_hl_forward.7} parent=11 // pred_region
          _
        $region20: #{bottleneck_hl_forward.7} parent=11 // pred_fallthru
          _
        // Predicated region
        $region21: #{bottleneck_hl_forward.7} parent=11 // pred_check
          %p213 = pneg %p143
        $region22: #{bottleneck_hl_forward.7} parent=11 // pred_check_branch
          %215 = sbr.rel (%p213) target = $region24
        $region23: #{bottleneck_hl_forward.7} parent=11 // pred_region
          _
        $region24: #{bottleneck_hl_forward.7} parent=11 // pred_fallthru
          _
        // Predicated region
        $region25: #{bottleneck_hl_forward.7} parent=11 // pred_check
          %p216 = pneg %p164
        $region26: #{bottleneck_hl_forward.7} parent=11 // pred_check_branch
          %218 = sbr.rel (%p216) target = $region28
        $region27: #{bottleneck_hl_forward.7} parent=11 // pred_region
          _
        $region28: #{bottleneck_hl_forward.7} parent=11 // pred_fallthru
          _
      $region12: #{bottleneck_hl_forward.7} parent=5 // pred_fallthru
        _
      %p219 = scmp.lt.s32.totalorder %s12, 4
      // Predicated region
      $region29: #{bottleneck_hl_forward.7} parent=5 // pred_check
        %p220 = pneg %p219
      $region30: #{bottleneck_hl_forward.7} parent=5 // pred_check_branch
        %222 = sbr.rel (%p220) target = $region32
      $region31: #{bottleneck_hl_forward.7} parent=5 // pred_region
        // Predicated region
        $region33: #{bottleneck_hl_forward.7} parent=31 // pred_check
          %p223 = pneg %p46
        $region34: #{bottleneck_hl_forward.7} parent=31 // pred_check_branch
          %225 = sbr.rel (%p223) target = $region36
        $region35: #{bottleneck_hl_forward.7} parent=31 // pred_region
          %p226 = scmp.lt.s32.totalorder %s19, 1
          %s227 = scalar_select %p226, %s19, 1
          %p228 = scmp.lt.s32.totalorder %s20, 1
          %s229 = scalar_select %p228, %s20, 1
          %s230 = smul.addr %s227, 2
          %s231 = sadd.s32 %s229, %s230
          %s232 = smul.addr %s231, 4
          %s233 = scalar_lea.vmem %s0, %s232
        $region36: #{bottleneck_hl_forward.7} parent=31 // pred_fallthru
          _
        // Predicated region
        $region37: #{bottleneck_hl_forward.7} parent=31 // pred_check
          %p234 = pneg %p74
        $region38: #{bottleneck_hl_forward.7} parent=31 // pred_check_branch
          %236 = sbr.rel (%p234) target = $region40
        $region39: #{bottleneck_hl_forward.7} parent=31 // pred_region
          %s237 = sand.u32 %s64, 1
          %s238 = sand.u32 %s64, 1
          %s239 = smul.addr %s238, 32
          %s240 = scalar_lea.vmem [#allocation2], %s239
          %s241 = smul.addr %s19, 8
          %s242 = sadd.s32 %s20, %s241
          %s243 = smul.addr %s242, 8
          %s244 = scalar_lea.vmem %s1, %s243
          // Predicated region
          $region41: #{bottleneck_hl_forward.7} parent=39 // pred_check
            _
          $region42: #{bottleneck_hl_forward.7} parent=39 // pred_check_branch
            %246 = sbr.rel (0) target = $region44
          $region43: #{bottleneck_hl_forward.7} parent=39 // pred_region
            // Predicated region
            $region45: #{bottleneck_hl_forward.7} parent=43 // pred_check
              _
            $region46: #{bottleneck_hl_forward.7} parent=43 // pred_check_branch
              %248 = sbr.rel (0) target = $region48
            $region47: #{bottleneck_hl_forward.7} parent=43 // pred_region
              // Predicated region
              $region60: #{bottleneck_hl_forward.7} parent=47 // pred_check
                _
              $region61: #{bottleneck_hl_forward.7} parent=47 // pred_check_branch
                %269 = sbr.rel (0) target = $region63
              $region62: #{bottleneck_hl_forward.7} parent=47 // pred_region
                loop: start=0, step=1, limit=1
                $region64: #{bottleneck_hl_forward.7} parent=62 // loop_pre_header
                  _
                $region65: #{bottleneck_hl_forward.7} parent=62 // loop_header
                  %s271 = sphi 0, %s275
                  %p272 = scmp.ge.s32.totalorder %s271, 1
                  %s276 = sphi %s244, %s244
                  %s277 = sphi %s240, %s240
                $region66: #{bottleneck_hl_forward.7} parent=62 // loop_header_branch
                  %274 = sbr.rel (%p272) target = $region70
                $region67: #{bottleneck_hl_forward.7} parent=62 // loop_body
                  %v278 = vld [vmem:[%s276] sm:$0xff]
                  %279 = vst [vmem:[%s277] sm:$0xff] %v278
                  %v280 = vld [vmem:[%s276 + $0x10] sm:$0xff]
                  %281 = vst [vmem:[%s277 + $0x8] sm:$0xff] %v280
                  %v282 = vld [vmem:[%s276 + $0x20] sm:$0xff]
                  %283 = vst [vmem:[%s277 + $0x10] sm:$0xff] %v282
                  %v284 = vld [vmem:[%s276 + $0x30] sm:$0xff]
                  %285 = vst [vmem:[%s277 + $0x18] sm:$0xff] %v284
                $region68: #{bottleneck_hl_forward.7} parent=62 // loop_footer
                  %s275 = sadd.s32 1, %s271
                $region69: #{bottleneck_hl_forward.7} parent=62 // loop_footer_branch
                  %270 = sbr.rel target = $region65
                $region70: #{bottleneck_hl_forward.7} parent=62 // loop_exit
                  _
              $region63: #{bottleneck_hl_forward.7} parent=47 // pred_fallthru
                _
              // Predicated region
              $region71: #{bottleneck_hl_forward.7} parent=47 // pred_check
                _
              $region72: #{bottleneck_hl_forward.7} parent=47 // pred_check_branch
                %287 = sbr.rel target = $region74
              $region73: #{bottleneck_hl_forward.7} parent=47 // pred_region
                _
              $region74: #{bottleneck_hl_forward.7} parent=47 // pred_fallthru
                _
            $region48: #{bottleneck_hl_forward.7} parent=43 // pred_fallthru
              _
            // Predicated region
            $region49: #{bottleneck_hl_forward.7} parent=43 // pred_check
              _
            $region50: #{bottleneck_hl_forward.7} parent=43 // pred_check_branch
              %250 = sbr.rel target = $region52
            $region51: #{bottleneck_hl_forward.7} parent=43 // pred_region
              loop: start=0, step=1, limit=1
              $region53: #{bottleneck_hl_forward.7} parent=51 // loop_pre_header
                _
              $region54: #{bottleneck_hl_forward.7} parent=51 // loop_header
                %s253 = sphi 0, %s257
                %p254 = scmp.ge.s32.totalorder %s253, 1
                %s258 = sphi %s244, %s244
                %s259 = sphi %s240, %s240
              $region55: #{bottleneck_hl_forward.7} parent=51 // loop_header_branch
                %256 = sbr.rel (%p254) target = $region59
              $region56: #{bottleneck_hl_forward.7} parent=51 // loop_body
                %v260 = vld [vmem:[%s258] sm:$0xff]
                %261 = vst [vmem:[%s259] sm:$0xff] %v260
                %v262 = vld [vmem:[%s258 + $0x10] sm:$0xff]
                %263 = vst [vmem:[%s259 + $0x8] sm:$0xff] %v262
                %v264 = vld [vmem:[%s258 + $0x20] sm:$0xff]
                %265 = vst [vmem:[%s259 + $0x10] sm:$0xff] %v264
                %v266 = vld [vmem:[%s258 + $0x30] sm:$0xff]
                %267 = vst [vmem:[%s259 + $0x18] sm:$0xff] %v266
              $region57: #{bottleneck_hl_forward.7} parent=51 // loop_footer
                %s257 = sadd.s32 1, %s253
              $region58: #{bottleneck_hl_forward.7} parent=51 // loop_footer_branch
                %252 = sbr.rel target = $region54
              $region59: #{bottleneck_hl_forward.7} parent=51 // loop_exit
                _
            $region52: #{bottleneck_hl_forward.7} parent=43 // pred_fallthru
              _
          $region44: #{bottleneck_hl_forward.7} parent=39 // pred_fallthru
            _
          %288 = vnop
        $region40: #{bottleneck_hl_forward.7} parent=31 // pred_fallthru
          _
      $region32: #{bottleneck_hl_forward.7} parent=5 // pred_fallthru
        _
      %p289 = scmp.le.s32.totalorder 1, %s12
      %p290 = scmp.lt.s32.totalorder %s12, 5
      %p291 = pnand %p289, %p290
      %p292 = pneg %p291
      // Predicated region
      $region75: #{bottleneck_hl_forward.7} parent=5 // pred_check
        _
      $region76: #{bottleneck_hl_forward.7} parent=5 // pred_check_branch
        %294 = sbr.rel (%p291) target = $region78
      $region77: #{bottleneck_hl_forward.7} parent=5 // pred_region
        %s295 = ssub.s32 %s12, 1
        %s296 = sand.u32 %s67, 1
        %s297 = sand.u32 %s67, 1
        %s298 = smul.addr %s297, 32
        %s299 = scalar_lea.vmem [#allocation2], %s298
        // Predicated region
        $region79: #{bottleneck_hl_forward.7} parent=77 // pred_check
          %p300 = pneg %p80
        $region80: #{bottleneck_hl_forward.7} parent=77 // pred_check_branch
          %302 = sbr.rel (%p300) target = $region82
        $region81: #{bottleneck_hl_forward.7} parent=77 // pred_region
          _
        $region82: #{bottleneck_hl_forward.7} parent=77 // pred_fallthru
          _
        %p303 = scmp.lt.s32.totalorder %s21, 1
        %s304 = scalar_select %p303, %s21, 1
        %p305 = scmp.lt.s32.totalorder %s22, 1
        %s306 = scalar_select %p305, %s22, 1
        %s307 = smul.addr %s304, 2
        %s308 = sadd.s32 %s306, %s307
        %s309 = smul.addr %s308, 4
        %s310 = scalar_lea.vmem %s0, %s309
        %p311 = pneg %p52
        %p312 = pneg %p49
        %s313 = sand.u32 %s67, 1
        %s314 = sand.u32 %s67, 1
        %s315 = smul.addr %s314, 32
        %s316 = scalar_lea.vmem [#allocation2], %s315
        %p317 = pneg %p80
        %p318 = pneg %p77
        %p319 = pneg %p101
        %p320 = pneg %p98
        %p321 = pneg %p122
        %p322 = pneg %p119
        %p323 = pneg %p143
        %p324 = pneg %p140
        %p325 = pneg %p164
        %p326 = pneg %p161
        %p327 = pneg %p192
        %p328 = pneg %p189
        %s329 = sand.u32 %s179, 1
        %s330 = sand.u32 %s179, 1
        %s331 = smul.addr %s330, 32
        %s332 = scalar_lea.vmem [#allocation3], %s331
        %p333 = scmp.lt.s32.totalorder %s21, 1
        %s334 = scalar_select %p333, %s21, 1
        %p335 = scmp.lt.s32.totalorder %s22, 1
        %s336 = scalar_select %p335, %s22, 1
        %s337 = smul.addr %s334, 2
        %s338 = sadd.s32 %s336, %s337
        %s339 = smul.addr %s338, 4
        %s340 = scalar_lea.vmem %s0, %s339
        %v342 = vld [vmem:[%s340] sm:$0xf]
        %v343 = vunpack.c.l.bf16 %v342
        %v344 = vld [vmem:[%s2] sm:$0xff]
        %346 = vset.pattern.permute.xlu0 0
        %347 = vperm.xlu0 %346, %v344
        %v348 = vpop.permute.xlu0 %347
        %v350 = vmul.f32 %v343, %v348
        %v351 = vld [vmem:[%s3] sm:$0xff]
        %353 = vset.pattern.permute.xlu0 0
        %354 = vperm.xlu0 %353, %v351
        %v355 = vpop.permute.xlu0 %354
        %v357 = vadd.f32 %v350, %v355
        %v358 = vmax.f32 %v357, 0.0
        %v359 = vld [vmem:[%s4] sm:$0xf]
        %v360 = vld [vmem:[%s4 + $0x4] sm:$0xf]
        %v361 = vld [vmem:[%s4 + $0x8] sm:$0xf]
        %v362 = vld [vmem:[%s4 + $0xc] sm:$0xf]
        %v363 = vpack.c.bf16 %v358, %v358
        %v364 = vld [vmem:[%s5] sm:$0xff]
        %v365 = vld [vmem:[%s5 + $0x8] sm:$0xff]
        %v366 = vld [vmem:[%s5 + $0x10] sm:$0xff]
        %v367 = vld [vmem:[%s5 + $0x18] sm:$0xff]
        %369 = vset.pattern.permute.xlu0 0
        %370 = vperm.xlu0 %369, %v364
        %v371 = vpop.permute.xlu0 %370
        %374 = vset.pattern.permute.xlu0 0
        %375 = vperm.xlu0 %374, %v365
        %v376 = vpop.permute.xlu0 %375
        %379 = vset.pattern.permute.xlu0 0
        %380 = vperm.xlu0 %379, %v366
        %v381 = vpop.permute.xlu0 %380
        %384 = vset.pattern.permute.xlu0 0
        %385 = vperm.xlu0 %384, %v367
        %v386 = vpop.permute.xlu0 %385
        %v392 = vunpack.c.l.b16 %v359
        %v393 = vunpack.c.l.b16 %v360
        %v394 = vunpack.c.l.b16 %v361
        %v395 = vunpack.c.l.b16 %v362
        %v396 = vpack.c.b16 %v393, %v392
        %v397 = vpack.c.b16 %v395, %v394
        %vm398 = vcmask 64512
        %v400 = vsel %vm398, %v396, 0
        %v403 = vsel %vm398, %v397, 0
        %vm405 = vcmask 1043456
        %v407 = vsel %vm405, %v363, 0
        %409 = vmatprep.subr.bf16.mxu0 0
        %410 = vmatpush1.bf16.msra.mxu0 %v407
        %411 = vmatprep.subr.bf16.mxu0 0
        %412 = vmatpush1.bf16.msra.mxu0 0
        %413 = vmatprep.subr.bf16.mxu0 0
        %414 = vmatpush1.bf16.msra.mxu0 0
        %415 = vmatprep.subr.bf16.mxu0 0
        %416 = vmatpush1.bf16.msra.mxu0 0
        %417 = vmatprep.subr.bf16.mxu0 0
        %418 = vmatpush1.bf16.msra.mxu0 0
        %419 = vmatprep.subr.bf16.mxu0 0
        %420 = vmatpush1.bf16.msra.mxu0 0
        %421 = vmatprep.subr.bf16.mxu0 0
        %422 = vmatpush1.bf16.msra.mxu0 0
        %423 = vmatprep.subr.bf16.mxu0 0
        %424 = vmatpush1.bf16.msra.mxu0 0
        %425 = vmatprep.subr.bf16.mxu0 0
        %426 = vmatpush1.bf16.msra.mxu0 0
        %427 = vmatprep.subr.bf16.mxu0 0
        %428 = vmatpush1.bf16.msra.mxu0 0
        %429 = vmatprep.subr.bf16.mxu0 0
        %430 = vmatpush1.bf16.msra.mxu0 0
        %431 = vmatprep.subr.bf16.mxu0 0
        %432 = vmatpush1.bf16.msra.mxu0 0
        %433 = vmatprep.subr.bf16.mxu0 0
        %434 = vmatpush1.bf16.msra.mxu0 0
        %435 = vmatprep.subr.bf16.mxu0 0
        %436 = vmatpush1.bf16.msra.mxu0 0
        %437 = vmatprep.subr.bf16.mxu0 0
        %438 = vmatpush1.bf16.msra.mxu0 0
        %439 = vmatprep.subr.bf16.mxu0 0
        %440 = vmatpush1.bf16.msra.mxu0 0
        %441 = vmatprep.mubr.bf16.mxu0 0
        %442 = vmatmul.mubr.bf16.gmra.mrb[0].mxu0 %v400
        %v443 = vpop.f32.mrb[0].mxu0
        %v444 = vadd.f32 %v371, %v443
        %v445 = vpop.f32.mrb[0].mxu0
        %v446 = vpop.f32.mrb[0].mxu0
        %v447 = vadd.f32 %v376, %v446
        %v448 = vpop.f32.mrb[0].mxu0
        %449 = vmatprep.mubr.bf16.mxu0 0
        %450 = vmatmul.mubr.bf16.gmra.mrb[0].mxu0 %v403
        %v451 = vpop.f32.mrb[0].mxu0
        %v452 = vadd.f32 %v381, %v451
        %v453 = vpop.f32.mrb[0].mxu0
        %v454 = vpop.f32.mrb[0].mxu0
        %v455 = vadd.f32 %v386, %v454
        %v456 = vpop.f32.mrb[0].mxu0
        %457 = vdwg.mxu0
        %v458 = vld [vmem:[%s299] sm:$0xff]
        %v459 = vld [vmem:[%s299 + $0x8] sm:$0xff]
        %v460 = vld [vmem:[%s299 + $0x10] sm:$0xff]
        %v461 = vld [vmem:[%s299 + $0x18] sm:$0xff]
        %v462 = vadd.f32 %v444, %v458
        %v463 = vadd.f32 %v447, %v459
        %v464 = vadd.f32 %v452, %v460
        %v465 = vadd.f32 %v455, %v461
        %v466 = vmax.f32 %v462, 0.0
        %v467 = vmax.f32 %v463, 0.0
        %v468 = vmax.f32 %v464, 0.0
        %v469 = vmax.f32 %v465, 0.0
        %470 = vst [vmem:[%s332] sm:$0xff] %v466
        %471 = vst [vmem:[%s332 + $0x8] sm:$0xff] %v467
        %472 = vst [vmem:[%s332 + $0x10] sm:$0xff] %v468
        %473 = vst [vmem:[%s332 + $0x18] sm:$0xff] %v469
        %s474 = sand.u32 %s179, 1
        %s475 = sand.u32 %s179, 1
        %s476 = smul.addr %s475, 32
        %s477 = scalar_lea.vmem [#allocation3], %s476
        // Predicated region
        $region83: #{bottleneck_hl_forward.7} parent=77 // pred_check
          %p478 = pneg %p189
        $region84: #{bottleneck_hl_forward.7} parent=77 // pred_check_branch
          %480 = sbr.rel (%p478) target = $region86
        $region85: #{bottleneck_hl_forward.7} parent=77 // pred_region
          %s481 = smul.addr %s21, 8
          %s482 = sadd.s32 %s22, %s481
          %s483 = smul.addr %s482, 8
          %s484 = scalar_lea.vmem %s6, %s483
          // Predicated region
          $region87: #{bottleneck_hl_forward.7} parent=85 // pred_check
            _
          $region88: #{bottleneck_hl_forward.7} parent=85 // pred_check_branch
            %486 = sbr.rel (0) target = $region90
          $region89: #{bottleneck_hl_forward.7} parent=85 // pred_region
            // Predicated region
            $region91: #{bottleneck_hl_forward.7} parent=89 // pred_check
              _
            $region92: #{bottleneck_hl_forward.7} parent=89 // pred_check_branch
              %488 = sbr.rel (0) target = $region94
            $region93: #{bottleneck_hl_forward.7} parent=89 // pred_region
              // Predicated region
              $region106: #{bottleneck_hl_forward.7} parent=93 // pred_check
                _
              $region107: #{bottleneck_hl_forward.7} parent=93 // pred_check_branch
                %509 = sbr.rel (0) target = $region109
              $region108: #{bottleneck_hl_forward.7} parent=93 // pred_region
                loop: start=0, step=1, limit=1
                $region110: #{bottleneck_hl_forward.7} parent=108 // loop_pre_header
                  _
                $region111: #{bottleneck_hl_forward.7} parent=108 // loop_header
                  %s511 = sphi 0, %s515
                  %p512 = scmp.ge.s32.totalorder %s511, 1
                  %s516 = sphi %s477, %s477
                  %s517 = sphi %s484, %s484
                $region112: #{bottleneck_hl_forward.7} parent=108 // loop_header_branch
                  %514 = sbr.rel (%p512) target = $region116
                $region113: #{bottleneck_hl_forward.7} parent=108 // loop_body
                  %v518 = vld [vmem:[%s516] sm:$0xff]
                  %519 = vst [vmem:[%s517] sm:$0xff] %v518
                  %v520 = vld [vmem:[%s516 + $0x8] sm:$0xff]
                  %521 = vst [vmem:[%s517 + $0x10] sm:$0xff] %v520
                  %v522 = vld [vmem:[%s516 + $0x10] sm:$0xff]
                  %523 = vst [vmem:[%s517 + $0x20] sm:$0xff] %v522
                  %v524 = vld [vmem:[%s516 + $0x18] sm:$0xff]
                  %525 = vst [vmem:[%s517 + $0x30] sm:$0xff] %v524
                $region114: #{bottleneck_hl_forward.7} parent=108 // loop_footer
                  %s515 = sadd.s32 1, %s511
                $region115: #{bottleneck_hl_forward.7} parent=108 // loop_footer_branch
                  %510 = sbr.rel target = $region111
                $region116: #{bottleneck_hl_forward.7} parent=108 // loop_exit
                  _
              $region109: #{bottleneck_hl_forward.7} parent=93 // pred_fallthru
                _
              // Predicated region
              $region117: #{bottleneck_hl_forward.7} parent=93 // pred_check
                _
              $region118: #{bottleneck_hl_forward.7} parent=93 // pred_check_branch
                %527 = sbr.rel target = $region120
              $region119: #{bottleneck_hl_forward.7} parent=93 // pred_region
                _
              $region120: #{bottleneck_hl_forward.7} parent=93 // pred_fallthru
                _
            $region94: #{bottleneck_hl_forward.7} parent=89 // pred_fallthru
              _
            // Predicated region
            $region95: #{bottleneck_hl_forward.7} parent=89 // pred_check
              _
            $region96: #{bottleneck_hl_forward.7} parent=89 // pred_check_branch
              %490 = sbr.rel target = $region98
            $region97: #{bottleneck_hl_forward.7} parent=89 // pred_region
              loop: start=0, step=1, limit=1
              $region99: #{bottleneck_hl_forward.7} parent=97 // loop_pre_header
                _
              $region100: #{bottleneck_hl_forward.7} parent=97 // loop_header
                %s493 = sphi 0, %s497
                %p494 = scmp.ge.s32.totalorder %s493, 1
                %s498 = sphi %s477, %s477
                %s499 = sphi %s484, %s484
              $region101: #{bottleneck_hl_forward.7} parent=97 // loop_header_branch
                %496 = sbr.rel (%p494) target = $region105
              $region102: #{bottleneck_hl_forward.7} parent=97 // loop_body
                %v500 = vld [vmem:[%s498] sm:$0xff]
                %501 = vst [vmem:[%s499] sm:$0xff] %v500
                %v502 = vld [vmem:[%s498 + $0x8] sm:$0xff]
                %503 = vst [vmem:[%s499 + $0x10] sm:$0xff] %v502
                %v504 = vld [vmem:[%s498 + $0x10] sm:$0xff]
                %505 = vst [vmem:[%s499 + $0x20] sm:$0xff] %v504
                %v506 = vld [vmem:[%s498 + $0x18] sm:$0xff]
                %507 = vst [vmem:[%s499 + $0x30] sm:$0xff] %v506
              $region103: #{bottleneck_hl_forward.7} parent=97 // loop_footer
                %s497 = sadd.s32 1, %s493
              $region104: #{bottleneck_hl_forward.7} parent=97 // loop_footer_branch
                %492 = sbr.rel target = $region100
              $region105: #{bottleneck_hl_forward.7} parent=97 // loop_exit
                _
            $region98: #{bottleneck_hl_forward.7} parent=89 // pred_fallthru
              _
          $region90: #{bottleneck_hl_forward.7} parent=85 // pred_fallthru
            _
          %528 = vnop
        $region86: #{bottleneck_hl_forward.7} parent=77 // pred_fallthru
          _
      $region78: #{bottleneck_hl_forward.7} parent=5 // pred_fallthru
        _
      %p529 = scmp.le.s32.totalorder 2, %s12
      // Predicated region
      $region121: #{bottleneck_hl_forward.7} parent=5 // pred_check
        %p530 = pneg %p529
      $region122: #{bottleneck_hl_forward.7} parent=5 // pred_check_branch
        %532 = sbr.rel (%p530) target = $region124
      $region123: #{bottleneck_hl_forward.7} parent=5 // pred_region
        %s533 = ssub.s32 %s12, 2
        // Predicated region
        $region125: #{bottleneck_hl_forward.7} parent=123 // pred_check
          %p534 = pneg %p195
        $region126: #{bottleneck_hl_forward.7} parent=123 // pred_check_branch
          %536 = sbr.rel (%p534) target = $region128
        $region127: #{bottleneck_hl_forward.7} parent=123 // pred_region
          %s537 = sand.u32 %s180, 1
          %s538 = sand.u32 %s180, 1
          %s539 = smul.addr %s538, 32
          %s540 = scalar_lea.vmem [#allocation3], %s539
        $region128: #{bottleneck_hl_forward.7} parent=123 // pred_fallthru
          _
      $region124: #{bottleneck_hl_forward.7} parent=5 // pred_fallthru
        _
    $region6: #{bottleneck_hl_forward.7} parent=1 // loop_footer
      %s16 = sadd.s32 1, %s12
    $region7: #{bottleneck_hl_forward.7} parent=1 // loop_footer_branch
      %11 = sbr.rel target = $region3
    $region8: #{bottleneck_hl_forward.7} parent=1 // loop_exit
      _

// kernel: bottleneck_hl_forward.5
$region0: #{bottleneck_hl_forward.5}
  #allocation0 [shape = 'u32[]', space=smem, size = 0x4, offset = 0x4, fixed_abs, tag = 'smem constant byte address 0x4 - core index']
  #allocation1 [shape = 'u32[144,128]{1,0:T(1,128)}', space=vmem, size = 0x12000, scoped, tag = 'internal scratch']
  #allocation2 [shape = 'bf16[208,256]{1,0:T(16,128)(2,1)}', space=vmem, size = 0x1a000, scoped, tag = 'scratch operand']
  %s0 = inlined_call_operand.vmem [shape: bf16[2,8,256], index: 0, kind: input, shape index: {}]
  %s1 = inlined_call_operand.vmem [shape: f32[8,1], index: 1, kind: input, shape index: {}]
  %s2 = inlined_call_operand.vmem [shape: f32[8,1], index: 2, kind: input, shape index: {}]
  %s3 = inlined_call_operand.vmem [shape: bf16[8,208], index: 3, kind: input, shape index: {}]
  %s4 = inlined_call_operand.vmem [shape: s32[1,256], index: 4, kind: input, shape index: {}]
  %s5 = inlined_call_operand.vmem [shape: bf16[2,8,256], index: 5, kind: output, shape index: {0}]
  %s6 = inlined_call_operand.vmem [shape: f32[2,1,16,1], index: 6, kind: output, shape index: {1}]
  %7 = xla_tuple %s5, %s6
  %s8 = sld [smem:[#allocation0]]
  $region61: #{bottleneck_hl_forward.5} parent=0
    _
  %s10 = ssub.s32 1, %s8
  %s11 = scalar_select 0, %s10, %s8
  loop: start=0, step=1, limit=4
  $region2: #{bottleneck_hl_forward.5} parent=0 // loop_pre_header
    _
  $region3: #{bottleneck_hl_forward.5} parent=0 // loop_header
    %s13 = sphi 0, %s17
    %p14 = scmp.ge.s32.totalorder %s13, 4
    %s23 = sphi 0, %s25
    %s26 = sphi 0, %s23
    %s27 = sphi 0, %s26
    %s43 = sphi 0, %s27
    %s47 = sphi 0, %s47
    %s49 = sphi 0, %s47
    %s50 = sphi 0, %s49
    %s64 = sphi 0, %s50
    %s68 = sphi 0, %s68
    %s70 = sphi 0, %s68
    %s71 = sphi 0, %s70
    %s85 = sphi 0, %s71
    %s89 = sphi 0, %s89
    %s91 = sphi 0, %s89
    %s92 = sphi 0, %s91
    %s106 = sphi 0, %s92
    %s110 = sphi 0, %s110
    %s112 = sphi 0, %s110
    %s113 = sphi 0, %s112
    %s127 = sphi 0, %s113
    %s133 = sphi 0, %s135
    %s136 = sphi 0, %s133
    %s137 = sphi 0, %s136
    %s153 = sphi 0, %s137
    %s159 = sphi 0, %s161
    %s162 = sphi 0, %s159
    %s163 = sphi 0, %s162
    %s179 = sphi 0, %s163
  $region4: #{bottleneck_hl_forward.5} parent=0 // loop_header_branch
    %16 = sbr.rel (%p14) target = $region8
  $region5: #{bottleneck_hl_forward.5} parent=0 // loop_body
    %s18 = ssub.s32 %s13, 1
    %s19 = ssub.s32 %s13, 2
    %s20 = sadd.s32 %s13, 1
    %s21 = ssub.s32 %s13, %s20
    %p22 = scmp.eq.s32.totalorder %s21, 0
    %s24 = sadd.s32 %s23, 1
    %s25 = scalar_select %p22, %s23, %s24
    %p28 = pneg %p22
    %p29 = scmp.eq.s32.totalorder %s13, 1
    %p30 = por %p28, %p29
    %p31 = scmp.ne.s32.totalorder %s23, %s26
    %p32 = scmp.eq.s32.totalorder %s13, 0
    %p33 = por %p31, %p32
    %p34 = scmp.ne.s32.totalorder %s23, %s26
    %p35 = scmp.eq.s32.totalorder %s18, 1
    %p36 = por %p34, %p35
    %p37 = scmp.ne.s32.totalorder %s26, %s27
    %p38 = scmp.eq.s32.totalorder %s18, 0
    %p39 = por %p37, %p38
    %p40 = scmp.ne.s32.totalorder %s26, %s27
    %p41 = scmp.eq.s32.totalorder %s19, 1
    %p42 = por %p40, %p41
    %p44 = scmp.ne.s32.totalorder %s27, %s43
    %p45 = scmp.eq.s32.totalorder %s19, 0
    %p46 = por %p44, %p45
    %s48 = sadd.s32 %s47, 1
    %p51 = scmp.eq.s32.totalorder %s13, 1
    %p52 = scmp.ne.s32.totalorder %s47, %s49
    %p53 = scmp.eq.s32.totalorder %s13, 0
    %p54 = por %p52, %p53
    %p55 = scmp.ne.s32.totalorder %s47, %s49
    %p56 = scmp.eq.s32.totalorder %s18, 1
    %p57 = por %p55, %p56
    %p58 = scmp.ne.s32.totalorder %s49, %s50
    %p59 = scmp.eq.s32.totalorder %s18, 0
    %p60 = por %p58, %p59
    %p61 = scmp.ne.s32.totalorder %s49, %s50
    %p62 = scmp.eq.s32.totalorder %s19, 1
    %p63 = por %p61, %p62
    %p65 = scmp.ne.s32.totalorder %s50, %s64
    %p66 = scmp.eq.s32.totalorder %s19, 0
    %p67 = por %p65, %p66
    %s69 = sadd.s32 %s68, 1
    %p72 = scmp.eq.s32.totalorder %s13, 1
    %p73 = scmp.ne.s32.totalorder %s68, %s70
    %p74 = scmp.eq.s32.totalorder %s13, 0
    %p75 = por %p73, %p74
    %p76 = scmp.ne.s32.totalorder %s68, %s70
    %p77 = scmp.eq.s32.totalorder %s18, 1
    %p78 = por %p76, %p77
    %p79 = scmp.ne.s32.totalorder %s70, %s71
    %p80 = scmp.eq.s32.totalorder %s18, 0
    %p81 = por %p79, %p80
    %p82 = scmp.ne.s32.totalorder %s70, %s71
    %p83 = scmp.eq.s32.totalorder %s19, 1
    %p84 = por %p82, %p83
    %p86 = scmp.ne.s32.totalorder %s71, %s85
    %p87 = scmp.eq.s32.totalorder %s19, 0
    %p88 = por %p86, %p87
    %s90 = sadd.s32 %s89, 1
    %p93 = scmp.eq.s32.totalorder %s13, 1
    %p94 = scmp.ne.s32.totalorder %s89, %s91
    %p95 = scmp.eq.s32.totalorder %s13, 0
    %p96 = por %p94, %p95
    %p97 = scmp.ne.s32.totalorder %s89, %s91
    %p98 = scmp.eq.s32.totalorder %s18, 1
    %p99 = por %p97, %p98
    %p100 = scmp.ne.s32.totalorder %s91, %s92
    %p101 = scmp.eq.s32.totalorder %s18, 0
    %p102 = por %p100, %p101
    %p103 = scmp.ne.s32.totalorder %s91, %s92
    %p104 = scmp.eq.s32.totalorder %s19, 1
    %p105 = por %p103, %p104
    %p107 = scmp.ne.s32.totalorder %s92, %s106
    %p108 = scmp.eq.s32.totalorder %s19, 0
    %p109 = por %p107, %p108
    %s111 = sadd.s32 %s110, 1
    %p114 = scmp.eq.s32.totalorder %s13, 1
    %p115 = scmp.ne.s32.totalorder %s110, %s112
    %p116 = scmp.eq.s32.totalorder %s13, 0
    %p117 = por %p115, %p116
    %p118 = scmp.ne.s32.totalorder %s110, %s112
    %p119 = scmp.eq.s32.totalorder %s18, 1
    %p120 = por %p118, %p119
    %p121 = scmp.ne.s32.totalorder %s112, %s113
    %p122 = scmp.eq.s32.totalorder %s18, 0
    %p123 = por %p121, %p122
    %p124 = scmp.ne.s32.totalorder %s112, %s113
    %p125 = scmp.eq.s32.totalorder %s19, 1
    %p126 = por %p124, %p125
    %p128 = scmp.ne.s32.totalorder %s113, %s127
    %p129 = scmp.eq.s32.totalorder %s19, 0
    %p130 = por %p128, %p129
    %s131 = ssub.s32 %s13, %s20
    %p132 = scmp.eq.s32.totalorder %s131, 0
    %s134 = sadd.s32 %s133, 1
    %s135 = scalar_select %p132, %s133, %s134
    %p138 = pneg %p132
    %p139 = scmp.eq.s32.totalorder %s13, 1
    %p140 = por %p138, %p139
    %p141 = scmp.ne.s32.totalorder %s133, %s136
    %p142 = scmp.eq.s32.totalorder %s13, 0
    %p143 = por %p141, %p142
    %p144 = scmp.ne.s32.totalorder %s133, %s136
    %p145 = scmp.eq.s32.totalorder %s18, 1
    %p146 = por %p144, %p145
    %p147 = scmp.ne.s32.totalorder %s136, %s137
    %p148 = scmp.eq.s32.totalorder %s18, 0
    %p149 = por %p147, %p148
    %p150 = scmp.ne.s32.totalorder %s136, %s137
    %p151 = scmp.eq.s32.totalorder %s19, 1
    %p152 = por %p150, %p151
    %p154 = scmp.ne.s32.totalorder %s137, %s153
    %p155 = scmp.eq.s32.totalorder %s19, 0
    %p156 = por %p154, %p155
    %s157 = ssub.s32 %s13, %s20
    %p158 = scmp.eq.s32.totalorder %s157, 0
    %s160 = sadd.s32 %s159, 1
    %s161 = scalar_select %p158, %s159, %s160
    %p164 = pneg %p158
    %p165 = scmp.eq.s32.totalorder %s13, 1
    %p166 = por %p164, %p165
    %p167 = scmp.ne.s32.totalorder %s159, %s162
    %p168 = scmp.eq.s32.totalorder %s13, 0
    %p169 = por %p167, %p168
    %p170 = scmp.ne.s32.totalorder %s159, %s162
    %p171 = scmp.eq.s32.totalorder %s18, 1
    %p172 = por %p170, %p171
    %p173 = scmp.ne.s32.totalorder %s162, %s163
    %p174 = scmp.eq.s32.totalorder %s18, 0
    %p175 = por %p173, %p174
    %p176 = scmp.ne.s32.totalorder %s162, %s163
    %p177 = scmp.eq.s32.totalorder %s19, 1
    %p178 = por %p176, %p177
    %p180 = scmp.ne.s32.totalorder %s163, %s179
    %p181 = scmp.eq.s32.totalorder %s19, 0
    %p182 = por %p180, %p181
    %p183 = scmp.le.s32.totalorder 1, %s13
    %p184 = scmp.lt.s32.totalorder %s13, 3
    %p185 = pnand %p183, %p184
    %p186 = pneg %p185
    // Predicated region
    $region9: #{bottleneck_hl_forward.5} parent=5 // pred_check
      _
    $region10: #{bottleneck_hl_forward.5} parent=5 // pred_check_branch
      %188 = sbr.rel (%p185) target = $region12
    $region11: #{bottleneck_hl_forward.5} parent=5 // pred_region
      %s189 = ssub.s32 %s13, 1
      // Predicated region
      $region13: #{bottleneck_hl_forward.5} parent=11 // pred_check
        %p190 = pneg %p60
      $region14: #{bottleneck_hl_forward.5} parent=11 // pred_check_branch
        %192 = sbr.rel (%p190) target = $region16
      $region15: #{bottleneck_hl_forward.5} parent=11 // pred_region
        _
      $region16: #{bottleneck_hl_forward.5} parent=11 // pred_fallthru
        _
      // Predicated region
      $region17: #{bottleneck_hl_forward.5} parent=11 // pred_check
        %p193 = pneg %p81
      $region18: #{bottleneck_hl_forward.5} parent=11 // pred_check_branch
        %195 = sbr.rel (%p193) target = $region20
      $region19: #{bottleneck_hl_forward.5} parent=11 // pred_region
        _
      $region20: #{bottleneck_hl_forward.5} parent=11 // pred_fallthru
        _
      // Predicated region
      $region21: #{bottleneck_hl_forward.5} parent=11 // pred_check
        %p196 = pneg %p102
      $region22: #{bottleneck_hl_forward.5} parent=11 // pred_check_branch
        %198 = sbr.rel (%p196) target = $region24
      $region23: #{bottleneck_hl_forward.5} parent=11 // pred_region
        _
      $region24: #{bottleneck_hl_forward.5} parent=11 // pred_fallthru
        _
      // Predicated region
      $region25: #{bottleneck_hl_forward.5} parent=11 // pred_check
        %p199 = pneg %p123
      $region26: #{bottleneck_hl_forward.5} parent=11 // pred_check_branch
        %201 = sbr.rel (%p199) target = $region28
      $region27: #{bottleneck_hl_forward.5} parent=11 // pred_region
        _
      $region28: #{bottleneck_hl_forward.5} parent=11 // pred_fallthru
        _
    $region12: #{bottleneck_hl_forward.5} parent=5 // pred_fallthru
      _
    %p202 = scmp.lt.s32.totalorder %s13, 2
    // Predicated region
    $region29: #{bottleneck_hl_forward.5} parent=5 // pred_check
      %p203 = pneg %p202
    $region30: #{bottleneck_hl_forward.5} parent=5 // pred_check_branch
      %205 = sbr.rel (%p203) target = $region32
    $region31: #{bottleneck_hl_forward.5} parent=5 // pred_region
      // Predicated region
      $region33: #{bottleneck_hl_forward.5} parent=31 // pred_check
        %p206 = pneg %p33
      $region34: #{bottleneck_hl_forward.5} parent=31 // pred_check_branch
        %208 = sbr.rel (%p206) target = $region36
      $region35: #{bottleneck_hl_forward.5} parent=31 // pred_region
        %p209 = scmp.lt.s32.totalorder %s13, 1
        %s210 = scalar_select %p209, %s13, 1
        %s211 = smul.addr %s210, 2
        %s212 = smul.addr %s211, 4
        %s213 = scalar_lea.vmem %s0, %s212
      $region36: #{bottleneck_hl_forward.5} parent=31 // pred_fallthru
        _
    $region32: #{bottleneck_hl_forward.5} parent=5 // pred_fallthru
      _
    %p214 = scmp.le.s32.totalorder 1, %s13
    %p215 = scmp.lt.s32.totalorder %s13, 3
    %p216 = pnand %p214, %p215
    %p217 = pneg %p216
    // Predicated region
    $region37: #{bottleneck_hl_forward.5} parent=5 // pred_check
      _
    $region38: #{bottleneck_hl_forward.5} parent=5 // pred_check_branch
      %219 = sbr.rel (%p216) target = $region40
    $region39: #{bottleneck_hl_forward.5} parent=5 // pred_region
      %s220 = ssub.s32 %s13, 1
      %p221 = scmp.lt.s32.totalorder %s18, 1
      %s222 = scalar_select %p221, %s18, 1
      %s223 = smul.addr %s222, 2
      %s224 = smul.addr %s223, 4
      %s225 = scalar_lea.vmem %s0, %s224
      %p226 = pneg %p39
      %p227 = pneg %p36
      %p228 = pneg %p60
      %p229 = pneg %p57
      %p230 = pneg %p81
      %p231 = pneg %p78
      %p232 = pneg %p102
      %p233 = pneg %p99
      %p234 = pneg %p123
      %p235 = pneg %p120
      %p236 = pneg %p149
      %p237 = pneg %p146
      %p238 = scmp.lt.s32.totalorder %s18, 1
      %s239 = scalar_select %p238, %s18, 1
      %s240 = smul.addr %s239, 2
      %s241 = smul.addr %s240, 4
      %s242 = scalar_lea.vmem %s5, %s241
      %p243 = pneg %p175
      %p244 = pneg %p172
      %p245 = scmp.lt.s32.totalorder %s18, 1
      %s246 = scalar_select %p245, %s18, 1
      %s247 = smul.addr %s246, 2
      %s248 = smul.addr %s247, 8
      %s249 = scalar_lea.vmem %s6, %s248
      %p250 = scmp.lt.s32.totalorder %s18, 1
      %s251 = scalar_select %p250, %s18, 1
      %s252 = smul.addr %s251, 2
      %s253 = smul.addr %s252, 4
      %s254 = scalar_lea.vmem %s0, %s253
      %p255 = scmp.lt.s32.totalorder %s18, 1
      %s256 = scalar_select %p255, %s18, 1
      %s257 = smul.addr %s256, 2
      %s258 = smul.addr %s257, 4
      %s259 = scalar_lea.vmem %s5, %s258
      %p260 = scmp.lt.s32.totalorder %s18, 1
      %s261 = scalar_select %p260, %s18, 1
      %s262 = smul.addr %s261, 2
      %s263 = smul.addr %s262, 8
      %s264 = scalar_lea.vmem %s6, %s263
      %v266 = vld [vmem:[%s254] sm:$0xff]
      %v267 = vunpack.c.l.bf16 %v266
      %v268 = vunpack.c.h.bf16 %v266
      %v269 = vld [vmem:[%s1] sm:$0xff]
      %271 = vset.pattern.permute.xlu0 0
      %272 = vperm.xlu0 %271, %v269
      %v273 = vpop.permute.xlu0 %272
      %v275 = vmul.f32 %v267, %v273
      %v276 = vmul.f32 %v268, %v273
      %v277 = vld [vmem:[%s2] sm:$0xff]
      %279 = vset.pattern.permute.xlu0 0
      %280 = vperm.xlu0 %279, %v277
      %v281 = vpop.permute.xlu0 %280
      %v283 = vadd.f32 %v275, %v281
      %v284 = vadd.f32 %v276, %v281
      %v285 = vmax.f32 %v283, 0.0
      %v286 = vmax.f32 %v284, 0.0
      %v287 = vlaneseq
      %v288 = vand.u32 %v287, 127
      %v289 = vadd.s32 %v288, 128
      %v290 = vld [vmem:[%s4] sm:$0x3]
      %291 = vrot.lane.b32.xlu0 %v285, 34
      %v292 = vpop.permute.xlu0 %291
      %293 = vrot.lane.b32.xlu0 %v286, 34
      %v294 = vpop.permute.xlu0 %293
      %vm295 = vcmp.lt.s32.totalorder %v288, 34
      %v296 = vsel %vm295, %v292, %v294
      %v297 = vsel %vm295, %v294, %v292
      %vm298 = vcmp.ge.s32.totalorder %v288, 32
      %vm299 = vcmp.ge.s32.totalorder %v289, 32
      %vm300 = vcmp.lt.s32.totalorder %v288, 288
      %vm301 = vcmp.lt.s32.totalorder %v289, 288
      %vm302 = vmand %vm298, %vm300
      %vm303 = vmand %vm299, %vm301
      %vm304 = vcmp.ge.s32.totalorder %v290, 2
      %v305 = vsel %vm304, 1, 0
      %v306 = vlaneseq
      %v307 = vshrl.u32 %v306, 7
      %v308 = vsub.s32 0, %v307
      %v309 = vrot.slane %v305, %v308
      %v310 = vlaneseq
      %v311 = vshrl.u32 %v310, 7
      %v312 = vsub.s32 1, %v311
      %v313 = vrot.slane %v305, %v312
      %vm314 = vcmp.ne.s32.totalorder %v309, 0
      %vm315 = vcmp.ne.s32.totalorder %v313, 0
      %vm316 = vmand %vm302, %vm314
      %vm317 = vmand %vm303, %vm315
      %vm318 = vcmp.lt.s32.totalorder %v290, 18
      %v319 = vsel %vm318, 1, 0
      %v320 = vlaneseq
      %v321 = vshrl.u32 %v320, 7
      %v322 = vsub.s32 0, %v321
      %v323 = vrot.slane %v319, %v322
      %v324 = vlaneseq
      %v325 = vshrl.u32 %v324, 7
      %v326 = vsub.s32 1, %v325
      %v327 = vrot.slane %v319, %v326
      %vm328 = vcmp.ne.s32.totalorder %v323, 0
      %vm329 = vcmp.ne.s32.totalorder %v327, 0
      %vm330 = vmand %vm316, %vm328
      %vm331 = vmand %vm317, %vm329
      %v332 = vsel %vm330, 1, 0
      %v333 = vsel %vm331, 1, 0
      %v334 = vlaneseq
      %v335 = vshrl.u32 %v334, 7
      %v336 = vsub.s32 0, %v335
      %v337 = vrot.slane %v332, %v336
      %v338 = vlaneseq
      %v339 = vshrl.u32 %v338, 7
      %v340 = vsub.s32 0, %v339
      %v341 = vrot.slane %v333, %v340
      %vm342 = vcmp.eq.s32.totalorder %v337, 1
      %vm343 = vcmp.eq.s32.totalorder %v341, 1
      %v344 = vsel %vm342, %v297, 0.0
      %v345 = vsel %vm343, %v296, 0.0
      %346 = vrot.lane.b32.xlu0 %v285, 33
      %v347 = vpop.permute.xlu0 %346
      %348 = vrot.lane.b32.xlu0 %v286, 33
      %v349 = vpop.permute.xlu0 %348
      %vm350 = vcmp.lt.s32.totalorder %v288, 33
      %v351 = vsel %vm350, %v347, %v349
      %v352 = vsel %vm350, %v349, %v347
      %vm353 = vcmp.ge.s32.totalorder %v290, 1
      %v354 = vsel %vm353, 1, 0
      %v355 = vlaneseq
      %v356 = vshrl.u32 %v355, 7
      %v357 = vsub.s32 0, %v356
      %v358 = vrot.slane %v354, %v357
      %v359 = vlaneseq
      %v360 = vshrl.u32 %v359, 7
      %v361 = vsub.s32 1, %v360
      %v362 = vrot.slane %v354, %v361
      %vm363 = vcmp.ne.s32.totalorder %v358, 0
      %vm364 = vcmp.ne.s32.totalorder %v362, 0
      %vm365 = vmand %vm302, %vm363
      %vm366 = vmand %vm303, %vm364
      %vm367 = vcmp.lt.s32.totalorder %v290, 17
      %v368 = vsel %vm367, 1, 0
      %v369 = vlaneseq
      %v370 = vshrl.u32 %v369, 7
      %v371 = vsub.s32 0, %v370
      %v372 = vrot.slane %v368, %v371
      %v373 = vlaneseq
      %v374 = vshrl.u32 %v373, 7
      %v375 = vsub.s32 1, %v374
      %v376 = vrot.slane %v368, %v375
      %vm377 = vcmp.ne.s32.totalorder %v372, 0
      %vm378 = vcmp.ne.s32.totalorder %v376, 0
      %vm379 = vmand %vm365, %vm377
      %vm380 = vmand %vm366, %vm378
      %v381 = vsel %vm379, 1, 0
      %v382 = vsel %vm380, 1, 0
      %v383 = vlaneseq
      %v384 = vshrl.u32 %v383, 7
      %v385 = vsub.s32 0, %v384
      %v386 = vrot.slane %v381, %v385
      %v387 = vlaneseq
      %v388 = vshrl.u32 %v387, 7
      %v389 = vsub.s32 0, %v388
      %v390 = vrot.slane %v382, %v389
      %vm391 = vcmp.eq.s32.totalorder %v386, 1
      %vm392 = vcmp.eq.s32.totalorder %v390, 1
      %v393 = vsel %vm391, %v352, 0.0
      %v394 = vsel %vm392, %v351, 0.0
      %v395 = vpack.c.bf16 %v393, %v344
      %v396 = vpack.c.bf16 %v394, %v345
      %397 = vst [vmem:[#allocation2] sm:$0xff] %v395
      %398 = vst [vmem:[#allocation2 + $0x8] sm:$0xff] %v396
      %399 = vrot.lane.b32.xlu0 %v285, 32
      %v400 = vpop.permute.xlu0 %399
      %401 = vrot.lane.b32.xlu0 %v286, 32
      %v402 = vpop.permute.xlu0 %401
      %vm403 = vcmp.lt.s32.totalorder %v288, 32
      %v404 = vsel %vm403, %v400, %v402
      %v405 = vsel %vm403, %v402, %v400
      %vm406 = vcmp.ge.s32.totalorder %v290, 0
      %v407 = vsel %vm406, 1, 0
      %v408 = vlaneseq
      %v409 = vshrl.u32 %v408, 7
      %v410 = vsub.s32 0, %v409
      %v411 = vrot.slane %v407, %v410
      %v412 = vlaneseq
      %v413 = vshrl.u32 %v412, 7
      %v414 = vsub.s32 1, %v413
      %v415 = vrot.slane %v407, %v414
      %vm416 = vcmp.ne.s32.totalorder %v411, 0
      %vm417 = vcmp.ne.s32.totalorder %v415, 0
      %vm418 = vmand %vm302, %vm416
      %vm419 = vmand %vm303, %vm417
      %vm420 = vcmp.lt.s32.totalorder %v290, 16
      %v421 = vsel %vm420, 1, 0
      %v422 = vlaneseq
      %v423 = vshrl.u32 %v422, 7
      %v424 = vsub.s32 0, %v423
      %v425 = vrot.slane %v421, %v424
      %v426 = vlaneseq
      %v427 = vshrl.u32 %v426, 7
      %v428 = vsub.s32 1, %v427
      %v429 = vrot.slane %v421, %v428
      %vm430 = vcmp.ne.s32.totalorder %v425, 0
      %vm431 = vcmp.ne.s32.totalorder %v429, 0
      %vm432 = vmand %vm418, %vm430
      %vm433 = vmand %vm419, %vm431
      %v434 = vsel %vm432, 1, 0
      %v435 = vsel %vm433, 1, 0
      %v436 = vlaneseq
      %v437 = vshrl.u32 %v436, 7
      %v438 = vsub.s32 0, %v437
      %v439 = vrot.slane %v434, %v438
      %v440 = vlaneseq
      %v441 = vshrl.u32 %v440, 7
      %v442 = vsub.s32 0, %v441
      %v443 = vrot.slane %v435, %v442
      %vm444 = vcmp.eq.s32.totalorder %v439, 1
      %vm445 = vcmp.eq.s32.totalorder %v443, 1
      %v446 = vsel %vm444, %v405, 0.0
      %v447 = vsel %vm445, %v404, 0.0
      %448 = vrot.lane.b32.xlu0 %v285, 31
      %v449 = vpop.permute.xlu0 %448
      %450 = vrot.lane.b32.xlu0 %v286, 31
      %v451 = vpop.permute.xlu0 %450
      %vm452 = vcmp.lt.s32.totalorder %v288, 31
      %v453 = vsel %vm452, %v449, %v451
      %v454 = vsel %vm452, %v451, %v449
      %vm455 = vcmp.ge.s32.totalorder %v290, 4294967295
      %v456 = vsel %vm455, 1, 0
      %v457 = vlaneseq
      %v458 = vshrl.u32 %v457, 7
      %v459 = vsub.s32 0, %v458
      %v460 = vrot.slane %v456, %v459
      %v461 = vlaneseq
      %v462 = vshrl.u32 %v461, 7
      %v463 = vsub.s32 1, %v462
      %v464 = vrot.slane %v456, %v463
      %vm465 = vcmp.ne.s32.totalorder %v460, 0
      %vm466 = vcmp.ne.s32.totalorder %v464, 0
      %vm467 = vmand %vm302, %vm465
      %vm468 = vmand %vm303, %vm466
      %vm469 = vcmp.lt.s32.totalorder %v290, 15
      %v470 = vsel %vm469, 1, 0
      %v471 = vlaneseq
      %v472 = vshrl.u32 %v471, 7
      %v473 = vsub.s32 0, %v472
      %v474 = vrot.slane %v470, %v473
      %v475 = vlaneseq
      %v476 = vshrl.u32 %v475, 7
      %v477 = vsub.s32 1, %v476
      %v478 = vrot.slane %v470, %v477
      %vm479 = vcmp.ne.s32.totalorder %v474, 0
      %vm480 = vcmp.ne.s32.totalorder %v478, 0
      %vm481 = vmand %vm467, %vm479
      %vm482 = vmand %vm468, %vm480
      %v483 = vsel %vm481, 1, 0
      %v484 = vsel %vm482, 1, 0
      %v485 = vlaneseq
      %v486 = vshrl.u32 %v485, 7
      %v487 = vsub.s32 0, %v486
      %v488 = vrot.slane %v483, %v487
      %v489 = vlaneseq
      %v490 = vshrl.u32 %v489, 7
      %v491 = vsub.s32 0, %v490
      %v492 = vrot.slane %v484, %v491
      %vm493 = vcmp.eq.s32.totalorder %v488, 1
      %vm494 = vcmp.eq.s32.totalorder %v492, 1
      %v495 = vsel %vm493, %v454, 0.0
      %v496 = vsel %vm494, %v453, 0.0
      %v497 = vpack.c.bf16 %v495, %v446
      %v498 = vpack.c.bf16 %v496, %v447
      %499 = vst [vmem:[#allocation2 + $0x10] sm:$0xff] %v497
      %500 = vst [vmem:[#allocation2 + $0x18] sm:$0xff] %v498
      %501 = vrot.lane.b32.xlu0 %v285, 30
      %v502 = vpop.permute.xlu0 %501
      %503 = vrot.lane.b32.xlu0 %v286, 30
      %v504 = vpop.permute.xlu0 %503
      %vm505 = vcmp.lt.s32.totalorder %v288, 30
      %v506 = vsel %vm505, %v502, %v504
      %v507 = vsel %vm505, %v504, %v502
      %vm508 = vcmp.ge.s32.totalorder %v290, 4294967294
      %v509 = vsel %vm508, 1, 0
      %v510 = vlaneseq
      %v511 = vshrl.u32 %v510, 7
      %v512 = vsub.s32 0, %v511
      %v513 = vrot.slane %v509, %v512
      %v514 = vlaneseq
      %v515 = vshrl.u32 %v514, 7
      %v516 = vsub.s32 1, %v515
      %v517 = vrot.slane %v509, %v516
      %vm518 = vcmp.ne.s32.totalorder %v513, 0
      %vm519 = vcmp.ne.s32.totalorder %v517, 0
      %vm520 = vmand %vm302, %vm518
      %vm521 = vmand %vm303, %vm519
      %vm522 = vcmp.lt.s32.totalorder %v290, 14
      %v523 = vsel %vm522, 1, 0
      %v524 = vlaneseq
      %v525 = vshrl.u32 %v524, 7
      %v526 = vsub.s32 0, %v525
      %v527 = vrot.slane %v523, %v526
      %v528 = vlaneseq
      %v529 = vshrl.u32 %v528, 7
      %v530 = vsub.s32 1, %v529
      %v531 = vrot.slane %v523, %v530
      %vm532 = vcmp.ne.s32.totalorder %v527, 0
      %vm533 = vcmp.ne.s32.totalorder %v531, 0
      %vm534 = vmand %vm520, %vm532
      %vm535 = vmand %vm521, %vm533
      %v536 = vsel %vm534, 1, 0
      %v537 = vsel %vm535, 1, 0
      %v538 = vlaneseq
      %v539 = vshrl.u32 %v538, 7
      %v540 = vsub.s32 0, %v539
      %v541 = vrot.slane %v536, %v540
      %v542 = vlaneseq
      %v543 = vshrl.u32 %v542, 7
      %v544 = vsub.s32 0, %v543
      %v545 = vrot.slane %v537, %v544
      %vm546 = vcmp.eq.s32.totalorder %v541, 1
      %vm547 = vcmp.eq.s32.totalorder %v545, 1
      %v548 = vsel %vm546, %v507, 0.0
      %v549 = vsel %vm547, %v506, 0.0
      %550 = vrot.lane.b32.xlu0 %v285, 18
      %v551 = vpop.permute.xlu0 %550
      %552 = vrot.lane.b32.xlu0 %v286, 18
      %v553 = vpop.permute.xlu0 %552
      %vm554 = vcmp.lt.s32.totalorder %v288, 18
      %v555 = vsel %vm554, %v551, %v553
      %v556 = vsel %vm554, %v553, %v551
      %vm557 = vcmp.ge.s32.totalorder %v288, 16
      %vm558 = vcmp.ge.s32.totalorder %v289, 16
      %vm559 = vcmp.lt.s32.totalorder %v288, 272
      %vm560 = vcmp.lt.s32.totalorder %v289, 272
      %vm561 = vmand %vm557, %vm559
      %vm562 = vmand %vm558, %vm560
      %vm563 = vmand %vm561, %vm314
      %vm564 = vmand %vm562, %vm315
      %vm565 = vmand %vm563, %vm328
      %vm566 = vmand %vm564, %vm329
      %v567 = vsel %vm565, 1, 0
      %v568 = vsel %vm566, 1, 0
      %v569 = vlaneseq
      %v570 = vshrl.u32 %v569, 7
      %v571 = vsub.s32 0, %v570
      %v572 = vrot.slane %v567, %v571
      %v573 = vlaneseq
      %v574 = vshrl.u32 %v573, 7
      %v575 = vsub.s32 0, %v574
      %v576 = vrot.slane %v568, %v575
      %vm577 = vcmp.eq.s32.totalorder %v572, 1
      %vm578 = vcmp.eq.s32.totalorder %v576, 1
      %v579 = vsel %vm577, %v556, 0.0
      %v580 = vsel %vm578, %v555, 0.0
      %v581 = vpack.c.bf16 %v579, %v548
      %v582 = vpack.c.bf16 %v580, %v549
      %583 = vst [vmem:[#allocation2 + $0x20] sm:$0xff] %v581
      %584 = vst [vmem:[#allocation2 + $0x28] sm:$0xff] %v582
      %585 = vrot.lane.b32.xlu0 %v285, 17
      %v586 = vpop.permute.xlu0 %585
      %587 = vrot.lane.b32.xlu0 %v286, 17
      %v588 = vpop.permute.xlu0 %587
      %vm589 = vcmp.lt.s32.totalorder %v288, 17
      %v590 = vsel %vm589, %v586, %v588
      %v591 = vsel %vm589, %v588, %v586
      %vm592 = vmand %vm561, %vm363
      %vm593 = vmand %vm562, %vm364
      %vm594 = vmand %vm592, %vm377
      %vm595 = vmand %vm593, %vm378
      %v596 = vsel %vm594, 1, 0
      %v597 = vsel %vm595, 1, 0
      %v598 = vlaneseq
      %v599 = vshrl.u32 %v598, 7
      %v600 = vsub.s32 0, %v599
      %v601 = vrot.slane %v596, %v600
      %v602 = vlaneseq
      %v603 = vshrl.u32 %v602, 7
      %v604 = vsub.s32 0, %v603
      %v605 = vrot.slane %v597, %v604
      %vm606 = vcmp.eq.s32.totalorder %v601, 1
      %vm607 = vcmp.eq.s32.totalorder %v605, 1
      %v608 = vsel %vm606, %v591, 0.0
      %v609 = vsel %vm607, %v590, 0.0
      %610 = vrot.lane.b32.xlu0 %v285, 16
      %v611 = vpop.permute.xlu0 %610
      %612 = vrot.lane.b32.xlu0 %v286, 16
      %v613 = vpop.permute.xlu0 %612
      %vm614 = vcmp.lt.s32.totalorder %v288, 16
      %v615 = vsel %vm614, %v611, %v613
      %v616 = vsel %vm614, %v613, %v611
      %vm617 = vmand %vm561, %vm416
      %vm618 = vmand %vm562, %vm417
      %vm619 = vmand %vm617, %vm430
      %vm620 = vmand %vm618, %vm431
      %v621 = vsel %vm619, 1, 0
      %v622 = vsel %vm620, 1, 0
      %v623 = vlaneseq
      %v624 = vshrl.u32 %v623, 7
      %v625 = vsub.s32 0, %v624
      %v626 = vrot.slane %v621, %v625
      %v627 = vlaneseq
      %v628 = vshrl.u32 %v627, 7
      %v629 = vsub.s32 0, %v628
      %v630 = vrot.slane %v622, %v629
      %vm631 = vcmp.eq.s32.totalorder %v626, 1
      %vm632 = vcmp.eq.s32.totalorder %v630, 1
      %v633 = vsel %vm631, %v616, 0.0
      %v634 = vsel %vm632, %v615, 0.0
      %v635 = vpack.c.bf16 %v633, %v608
      %v636 = vpack.c.bf16 %v634, %v609
      %637 = vst [vmem:[#allocation2 + $0x30] sm:$0xff] %v635
      %638 = vst [vmem:[#allocation2 + $0x38] sm:$0xff] %v636
      %639 = vrot.lane.b32.xlu0 %v285, 15
      %v640 = vpop.permute.xlu0 %639
      %641 = vrot.lane.b32.xlu0 %v286, 15
      %v642 = vpop.permute.xlu0 %641
      %vm643 = vcmp.lt.s32.totalorder %v288, 15
      %v644 = vsel %vm643, %v640, %v642
      %v645 = vsel %vm643, %v642, %v640
      %vm646 = vmand %vm561, %vm465
      %vm647 = vmand %vm562, %vm466
      %vm648 = vmand %vm646, %vm479
      %vm649 = vmand %vm647, %vm480
      %v650 = vsel %vm648, 1, 0
      %v651 = vsel %vm649, 1, 0
      %v652 = vlaneseq
      %v653 = vshrl.u32 %v652, 7
      %v654 = vsub.s32 0, %v653
      %v655 = vrot.slane %v650, %v654
      %v656 = vlaneseq
      %v657 = vshrl.u32 %v656, 7
      %v658 = vsub.s32 0, %v657
      %v659 = vrot.slane %v651, %v658
      %vm660 = vcmp.eq.s32.totalorder %v655, 1
      %vm661 = vcmp.eq.s32.totalorder %v659, 1
      %v662 = vsel %vm660, %v645, 0.0
      %v663 = vsel %vm661, %v644, 0.0
      %664 = vrot.lane.b32.xlu0 %v285, 14
      %v665 = vpop.permute.xlu0 %664
      %666 = vrot.lane.b32.xlu0 %v286, 14
      %v667 = vpop.permute.xlu0 %666
      %vm668 = vcmp.lt.s32.totalorder %v288, 14
      %v669 = vsel %vm668, %v665, %v667
      %v670 = vsel %vm668, %v667, %v665
      %vm671 = vmand %vm561, %vm518
      %vm672 = vmand %vm562, %vm519
      %vm673 = vmand %vm671, %vm532
      %vm674 = vmand %vm672, %vm533
      %v675 = vsel %vm673, 1, 0
      %v676 = vsel %vm674, 1, 0
      %v677 = vlaneseq
      %v678 = vshrl.u32 %v677, 7
      %v679 = vsub.s32 0, %v678
      %v680 = vrot.slane %v675, %v679
      %v681 = vlaneseq
      %v682 = vshrl.u32 %v681, 7
      %v683 = vsub.s32 0, %v682
      %v684 = vrot.slane %v676, %v683
      %vm685 = vcmp.eq.s32.totalorder %v680, 1
      %vm686 = vcmp.eq.s32.totalorder %v684, 1
      %v687 = vsel %vm685, %v670, 0.0
      %v688 = vsel %vm686, %v669, 0.0
      %v689 = vpack.c.bf16 %v687, %v662
      %v690 = vpack.c.bf16 %v688, %v663
      %691 = vst [vmem:[#allocation2 + $0x40] sm:$0xff] %v689
      %692 = vst [vmem:[#allocation2 + $0x48] sm:$0xff] %v690
      %693 = vrot.lane.b32.xlu0 %v285, 2
      %v694 = vpop.permute.xlu0 %693
      %695 = vrot.lane.b32.xlu0 %v286, 2
      %v696 = vpop.permute.xlu0 %695
      %vm697 = vcmp.lt.s32.totalorder %v288, 2
      %v698 = vsel %vm697, %v694, %v696
      %v699 = vsel %vm697, %v696, %v694
      %vm700 = vcmp.ge.s32.totalorder %v288, 0
      %vm701 = vcmp.ge.s32.totalorder %v289, 0
      %vm702 = vcmp.lt.s32.totalorder %v288, 256
      %vm703 = vcmp.lt.s32.totalorder %v289, 256
      %vm704 = vmand %vm700, %vm702
      %vm705 = vmand %vm701, %vm703
      %vm706 = vmand %vm704, %vm314
      %vm707 = vmand %vm705, %vm315
      %vm708 = vmand %vm706, %vm328
      %vm709 = vmand %vm707, %vm329
      %v710 = vsel %vm708, 1, 0
      %v711 = vsel %vm709, 1, 0
      %v712 = vlaneseq
      %v713 = vshrl.u32 %v712, 7
      %v714 = vsub.s32 0, %v713
      %v715 = vrot.slane %v710, %v714
      %v716 = vlaneseq
      %v717 = vshrl.u32 %v716, 7
      %v718 = vsub.s32 0, %v717
      %v719 = vrot.slane %v711, %v718
      %vm720 = vcmp.eq.s32.totalorder %v715, 1
      %vm721 = vcmp.eq.s32.totalorder %v719, 1
      %v722 = vsel %vm720, %v699, 0.0
      %v723 = vsel %vm721, %v698, 0.0
      %724 = vrot.lane.b32.xlu0 %v285, 1
      %v725 = vpop.permute.xlu0 %724
      %726 = vrot.lane.b32.xlu0 %v286, 1
      %v727 = vpop.permute.xlu0 %726
      %vm728 = vcmp.lt.s32.totalorder %v288, 1
      %v729 = vsel %vm728, %v725, %v727
      %v730 = vsel %vm728, %v727, %v725
      %vm731 = vmand %vm704, %vm363
      %vm732 = vmand %vm705, %vm364
      %vm733 = vmand %vm731, %vm377
      %vm734 = vmand %vm732, %vm378
      %v735 = vsel %vm733, 1, 0
      %v736 = vsel %vm734, 1, 0
      %v737 = vlaneseq
      %v738 = vshrl.u32 %v737, 7
      %v739 = vsub.s32 0, %v738
      %v740 = vrot.slane %v735, %v739
      %v741 = vlaneseq
      %v742 = vshrl.u32 %v741, 7
      %v743 = vsub.s32 0, %v742
      %v744 = vrot.slane %v736, %v743
      %vm745 = vcmp.eq.s32.totalorder %v740, 1
      %vm746 = vcmp.eq.s32.totalorder %v744, 1
      %v747 = vsel %vm745, %v730, 0.0
      %v748 = vsel %vm746, %v729, 0.0
      %v749 = vpack.c.bf16 %v747, %v722
      %v750 = vpack.c.bf16 %v748, %v723
      %751 = vst [vmem:[#allocation2 + $0x50] sm:$0xff] %v749
      %752 = vst [vmem:[#allocation2 + $0x58] sm:$0xff] %v750
      %753 = vrot.lane.b32.xlu0 %v285, 127
      %v754 = vpop.permute.xlu0 %753
      %755 = vrot.lane.b32.xlu0 %v286, 127
      %v756 = vpop.permute.xlu0 %755
      %vm757 = vcmp.lt.s32.totalorder %v288, 127
      %v758 = vsel %vm757, %v754, %v756
      %v759 = vsel %vm757, %v756, %v754
      %vm760 = vmand %vm704, %vm465
      %vm761 = vmand %vm705, %vm466
      %vm762 = vmand %vm760, %vm479
      %vm763 = vmand %vm761, %vm480
      %v764 = vsel %vm762, 1, 0
      %v765 = vsel %vm763, 1, 0
      %v766 = vlaneseq
      %v767 = vshrl.u32 %v766, 7
      %v768 = vsub.s32 0, %v767
      %v769 = vrot.slane %v764, %v768
      %v770 = vlaneseq
      %v771 = vshrl.u32 %v770, 7
      %v772 = vsub.s32 0, %v771
      %v773 = vrot.slane %v765, %v772
      %vm774 = vcmp.eq.s32.totalorder %v769, 1
      %vm775 = vcmp.eq.s32.totalorder %v773, 1
      %v776 = vsel %vm774, %v758, 0.0
      %v777 = vsel %vm775, %v759, 0.0
      %v778 = vpack.c.bf16 %v776, %v285
      %v779 = vpack.c.bf16 %v777, %v286
      %780 = vst [vmem:[#allocation2 + $0x60] sm:$0xff] %v778
      %781 = vst [vmem:[#allocation2 + $0x68] sm:$0xff] %v779
      %782 = vrot.lane.b32.xlu0 %v285, 126
      %v783 = vpop.permute.xlu0 %782
      %784 = vrot.lane.b32.xlu0 %v286, 126
      %v785 = vpop.permute.xlu0 %784
      %vm786 = vcmp.lt.s32.totalorder %v288, 126
      %v787 = vsel %vm786, %v783, %v785
      %v788 = vsel %vm786, %v785, %v783
      %vm789 = vmand %vm704, %vm518
      %vm790 = vmand %vm705, %vm519
      %vm791 = vmand %vm789, %vm532
      %vm792 = vmand %vm790, %vm533
      %v793 = vsel %vm791, 1, 0
      %v794 = vsel %vm792, 1, 0
      %v795 = vlaneseq
      %v796 = vshrl.u32 %v795, 7
      %v797 = vsub.s32 0, %v796
      %v798 = vrot.slane %v793, %v797
      %v799 = vlaneseq
      %v800 = vshrl.u32 %v799, 7
      %v801 = vsub.s32 0, %v800
      %v802 = vrot.slane %v794, %v801
      %vm803 = vcmp.eq.s32.totalorder %v798, 1
      %vm804 = vcmp.eq.s32.totalorder %v802, 1
      %v805 = vsel %vm803, %v787, 0.0
      %v806 = vsel %vm804, %v788, 0.0
      %807 = vrot.lane.b32.xlu0 %v285, 114
      %v808 = vpop.permute.xlu0 %807
      %809 = vrot.lane.b32.xlu0 %v286, 114
      %v810 = vpop.permute.xlu0 %809
      %vm811 = vcmp.lt.s32.totalorder %v288, 114
      %v812 = vsel %vm811, %v808, %v810
      %v813 = vsel %vm811, %v810, %v808
      %vm814 = vcmp.ge.s32.totalorder %v288, 4294967280
      %vm815 = vcmp.ge.s32.totalorder %v289, 4294967280
      %vm816 = vcmp.lt.s32.totalorder %v288, 240
      %vm817 = vcmp.lt.s32.totalorder %v289, 240
      %vm818 = vmand %vm814, %vm816
      %vm819 = vmand %vm815, %vm817
      %vm820 = vmand %vm818, %vm314
      %vm821 = vmand %vm819, %vm315
      %vm822 = vmand %vm820, %vm328
      %vm823 = vmand %vm821, %vm329
      %v824 = vsel %vm822, 1, 0
      %v825 = vsel %vm823, 1, 0
      %v826 = vlaneseq
      %v827 = vshrl.u32 %v826, 7
      %v828 = vsub.s32 0, %v827
      %v829 = vrot.slane %v824, %v828
      %v830 = vlaneseq
      %v831 = vshrl.u32 %v830, 7
      %v832 = vsub.s32 0, %v831
      %v833 = vrot.slane %v825, %v832
      %vm834 = vcmp.eq.s32.totalorder %v829, 1
      %vm835 = vcmp.eq.s32.totalorder %v833, 1
      %v836 = vsel %vm834, %v812, 0.0
      %v837 = vsel %vm835, %v813, 0.0
      %v838 = vpack.c.bf16 %v836, %v805
      %v839 = vpack.c.bf16 %v837, %v806
      %840 = vst [vmem:[#allocation2 + $0x70] sm:$0xff] %v838
      %841 = vst [vmem:[#allocation2 + $0x78] sm:$0xff] %v839
      %842 = vrot.lane.b32.xlu0 %v285, 113
      %v843 = vpop.permute.xlu0 %842
      %844 = vrot.lane.b32.xlu0 %v286, 113
      %v845 = vpop.permute.xlu0 %844
      %vm846 = vcmp.lt.s32.totalorder %v288, 113
      %v847 = vsel %vm846, %v843, %v845
      %v848 = vsel %vm846, %v845, %v843
      %vm849 = vmand %vm818, %vm363
      %vm850 = vmand %vm819, %vm364
      %vm851 = vmand %vm849, %vm377
      %vm852 = vmand %vm850, %vm378
      %v853 = vsel %vm851, 1, 0
      %v854 = vsel %vm852, 1, 0
      %v855 = vlaneseq
      %v856 = vshrl.u32 %v855, 7
      %v857 = vsub.s32 0, %v856
      %v858 = vrot.slane %v853, %v857
      %v859 = vlaneseq
      %v860 = vshrl.u32 %v859, 7
      %v861 = vsub.s32 0, %v860
      %v862 = vrot.slane %v854, %v861
      %vm863 = vcmp.eq.s32.totalorder %v858, 1
      %vm864 = vcmp.eq.s32.totalorder %v862, 1
      %v865 = vsel %vm863, %v847, 0.0
      %v866 = vsel %vm864, %v848, 0.0
      %867 = vrot.lane.b32.xlu0 %v285, 112
      %v868 = vpop.permute.xlu0 %867
      %869 = vrot.lane.b32.xlu0 %v286, 112
      %v870 = vpop.permute.xlu0 %869
      %vm871 = vcmp.lt.s32.totalorder %v288, 112
      %v872 = vsel %vm871, %v868, %v870
      %v873 = vsel %vm871, %v870, %v868
      %vm874 = vmand %vm818, %vm416
      %vm875 = vmand %vm819, %vm417
      %vm876 = vmand %vm874, %vm430
      %vm877 = vmand %vm875, %vm431
      %v878 = vsel %vm876, 1, 0
      %v879 = vsel %vm877, 1, 0
      %v880 = vlaneseq
      %v881 = vshrl.u32 %v880, 7
      %v882 = vsub.s32 0, %v881
      %v883 = vrot.slane %v878, %v882
      %v884 = vlaneseq
      %v885 = vshrl.u32 %v884, 7
      %v886 = vsub.s32 0, %v885
      %v887 = vrot.slane %v879, %v886
      %vm888 = vcmp.eq.s32.totalorder %v883, 1
      %vm889 = vcmp.eq.s32.totalorder %v887, 1
      %v890 = vsel %vm888, %v872, 0.0
      %v891 = vsel %vm889, %v873, 0.0
      %v892 = vpack.c.bf16 %v890, %v865
      %v893 = vpack.c.bf16 %v891, %v866
      %894 = vst [vmem:[#allocation2 + $0x80] sm:$0xff] %v892
      %895 = vst [vmem:[#allocation2 + $0x88] sm:$0xff] %v893
      %896 = vrot.lane.b32.xlu0 %v285, 111
      %v897 = vpop.permute.xlu0 %896
      %898 = vrot.lane.b32.xlu0 %v286, 111
      %v899 = vpop.permute.xlu0 %898
      %vm900 = vcmp.lt.s32.totalorder %v288, 111
      %v901 = vsel %vm900, %v897, %v899
      %v902 = vsel %vm900, %v899, %v897
      %vm903 = vmand %vm818, %vm465
      %vm904 = vmand %vm819, %vm466
      %vm905 = vmand %vm903, %vm479
      %vm906 = vmand %vm904, %vm480
      %v907 = vsel %vm905, 1, 0
      %v908 = vsel %vm906, 1, 0
      %v909 = vlaneseq
      %v910 = vshrl.u32 %v909, 7
      %v911 = vsub.s32 0, %v910
      %v912 = vrot.slane %v907, %v911
      %v913 = vlaneseq
      %v914 = vshrl.u32 %v913, 7
      %v915 = vsub.s32 0, %v914
      %v916 = vrot.slane %v908, %v915
      %vm917 = vcmp.eq.s32.totalorder %v912, 1
      %vm918 = vcmp.eq.s32.totalorder %v916, 1
      %v919 = vsel %vm917, %v901, 0.0
      %v920 = vsel %vm918, %v902, 0.0
      %921 = vrot.lane.b32.xlu0 %v285, 110
      %v922 = vpop.permute.xlu0 %921
      %923 = vrot.lane.b32.xlu0 %v286, 110
      %v924 = vpop.permute.xlu0 %923
      %vm925 = vcmp.lt.s32.totalorder %v288, 110
      %v926 = vsel %vm925, %v922, %v924
      %v927 = vsel %vm925, %v924, %v922
      %vm928 = vmand %vm818, %vm518
      %vm929 = vmand %vm819, %vm519
      %vm930 = vmand %vm928, %vm532
      %vm931 = vmand %vm929, %vm533
      %v932 = vsel %vm930, 1, 0
      %v933 = vsel %vm931, 1, 0
      %v934 = vlaneseq
      %v935 = vshrl.u32 %v934, 7
      %v936 = vsub.s32 0, %v935
      %v937 = vrot.slane %v932, %v936
      %v938 = vlaneseq
      %v939 = vshrl.u32 %v938, 7
      %v940 = vsub.s32 0, %v939
      %v941 = vrot.slane %v933, %v940
      %vm942 = vcmp.eq.s32.totalorder %v937, 1
      %vm943 = vcmp.eq.s32.totalorder %v941, 1
      %v944 = vsel %vm942, %v926, 0.0
      %v945 = vsel %vm943, %v927, 0.0
      %v946 = vpack.c.bf16 %v944, %v919
      %v947 = vpack.c.bf16 %v945, %v920
      %948 = vst [vmem:[#allocation2 + $0x90] sm:$0xff] %v946
      %949 = vst [vmem:[#allocation2 + $0x98] sm:$0xff] %v947
      %950 = vrot.lane.b32.xlu0 %v285, 98
      %v951 = vpop.permute.xlu0 %950
      %952 = vrot.lane.b32.xlu0 %v286, 98
      %v953 = vpop.permute.xlu0 %952
      %vm954 = vcmp.lt.s32.totalorder %v288, 98
      %v955 = vsel %vm954, %v951, %v953
      %v956 = vsel %vm954, %v953, %v951
      %vm957 = vcmp.ge.s32.totalorder %v288, 4294967264
      %vm958 = vcmp.ge.s32.totalorder %v289, 4294967264
      %vm959 = vcmp.lt.s32.totalorder %v288, 224
      %vm960 = vcmp.lt.s32.totalorder %v289, 224
      %vm961 = vmand %vm957, %vm959
      %vm962 = vmand %vm958, %vm960
      %vm963 = vmand %vm961, %vm314
      %vm964 = vmand %vm962, %vm315
      %vm965 = vmand %vm963, %vm328
      %vm966 = vmand %vm964, %vm329
      %v967 = vsel %vm965, 1, 0
      %v968 = vsel %vm966, 1, 0
      %v969 = vlaneseq
      %v970 = vshrl.u32 %v969, 7
      %v971 = vsub.s32 0, %v970
      %v972 = vrot.slane %v967, %v971
      %v973 = vlaneseq
      %v974 = vshrl.u32 %v973, 7
      %v975 = vsub.s32 0, %v974
      %v976 = vrot.slane %v968, %v975
      %vm977 = vcmp.eq.s32.totalorder %v972, 1
      %vm978 = vcmp.eq.s32.totalorder %v976, 1
      %v979 = vsel %vm977, %v955, 0.0
      %v980 = vsel %vm978, %v956, 0.0
      %981 = vrot.lane.b32.xlu0 %v285, 97
      %v982 = vpop.permute.xlu0 %981
      %983 = vrot.lane.b32.xlu0 %v286, 97
      %v984 = vpop.permute.xlu0 %983
      %vm985 = vcmp.lt.s32.totalorder %v288, 97
      %v986 = vsel %vm985, %v982, %v984
      %v987 = vsel %vm985, %v984, %v982
      %vm988 = vmand %vm961, %vm363
      %vm989 = vmand %vm962, %vm364
      %vm990 = vmand %vm988, %vm377
      %vm991 = vmand %vm989, %vm378
      %v992 = vsel %vm990, 1, 0
      %v993 = vsel %vm991, 1, 0
      %v994 = vlaneseq
      %v995 = vshrl.u32 %v994, 7
      %v996 = vsub.s32 0, %v995
      %v997 = vrot.slane %v992, %v996
      %v998 = vlaneseq
      %v999 = vshrl.u32 %v998, 7
      %v1000 = vsub.s32 0, %v999
      %v1001 = vrot.slane %v993, %v1000
      %vm1002 = vcmp.eq.s32.totalorder %v997, 1
      %vm1003 = vcmp.eq.s32.totalorder %v1001, 1
      %v1004 = vsel %vm1002, %v986, 0.0
      %v1005 = vsel %vm1003, %v987, 0.0
      %v1006 = vpack.c.bf16 %v1004, %v979
      %v1007 = vpack.c.bf16 %v1005, %v980
      %1008 = vst [vmem:[#allocation2 + $0xa0] sm:$0xff] %v1006
      %1009 = vst [vmem:[#allocation2 + $0xa8] sm:$0xff] %v1007
      %1010 = vrot.lane.b32.xlu0 %v285, 96
      %v1011 = vpop.permute.xlu0 %1010
      %1012 = vrot.lane.b32.xlu0 %v286, 96
      %v1013 = vpop.permute.xlu0 %1012
      %vm1014 = vcmp.lt.s32.totalorder %v288, 96
      %v1015 = vsel %vm1014, %v1011, %v1013
      %v1016 = vsel %vm1014, %v1013, %v1011
      %vm1017 = vmand %vm961, %vm416
      %vm1018 = vmand %vm962, %vm417
      %vm1019 = vmand %vm1017, %vm430
      %vm1020 = vmand %vm1018, %vm431
      %v1021 = vsel %vm1019, 1, 0
      %v1022 = vsel %vm1020, 1, 0
      %v1023 = vlaneseq
      %v1024 = vshrl.u32 %v1023, 7
      %v1025 = vsub.s32 0, %v1024
      %v1026 = vrot.slane %v1021, %v1025
      %v1027 = vlaneseq
      %v1028 = vshrl.u32 %v1027, 7
      %v1029 = vsub.s32 0, %v1028
      %v1030 = vrot.slane %v1022, %v1029
      %vm1031 = vcmp.eq.s32.totalorder %v1026, 1
      %vm1032 = vcmp.eq.s32.totalorder %v1030, 1
      %v1033 = vsel %vm1031, %v1015, 0.0
      %v1034 = vsel %vm1032, %v1016, 0.0
      %1035 = vrot.lane.b32.xlu0 %v285, 95
      %v1036 = vpop.permute.xlu0 %1035
      %1037 = vrot.lane.b32.xlu0 %v286, 95
      %v1038 = vpop.permute.xlu0 %1037
      %vm1039 = vcmp.lt.s32.totalorder %v288, 95
      %v1040 = vsel %vm1039, %v1036, %v1038
      %v1041 = vsel %vm1039, %v1038, %v1036
      %vm1042 = vmand %vm961, %vm465
      %vm1043 = vmand %vm962, %vm466
      %vm1044 = vmand %vm1042, %vm479
      %vm1045 = vmand %vm1043, %vm480
      %v1046 = vsel %vm1044, 1, 0
      %v1047 = vsel %vm1045, 1, 0
      %v1048 = vlaneseq
      %v1049 = vshrl.u32 %v1048, 7
      %v1050 = vsub.s32 0, %v1049
      %v1051 = vrot.slane %v1046, %v1050
      %v1052 = vlaneseq
      %v1053 = vshrl.u32 %v1052, 7
      %v1054 = vsub.s32 0, %v1053
      %v1055 = vrot.slane %v1047, %v1054
      %vm1056 = vcmp.eq.s32.totalorder %v1051, 1
      %vm1057 = vcmp.eq.s32.totalorder %v1055, 1
      %v1058 = vsel %vm1056, %v1040, 0.0
      %v1059 = vsel %vm1057, %v1041, 0.0
      %v1060 = vpack.c.bf16 %v1058, %v1033
      %v1061 = vpack.c.bf16 %v1059, %v1034
      %1062 = vst [vmem:[#allocation2 + $0xb0] sm:$0xff] %v1060
      %1063 = vst [vmem:[#allocation2 + $0xb8] sm:$0xff] %v1061
      %1064 = vrot.lane.b32.xlu0 %v285, 94
      %v1065 = vpop.permute.xlu0 %1064
      %1066 = vrot.lane.b32.xlu0 %v286, 94
      %v1067 = vpop.permute.xlu0 %1066
      %vm1068 = vcmp.lt.s32.totalorder %v288, 94
      %v1069 = vsel %vm1068, %v1065, %v1067
      %v1070 = vsel %vm1068, %v1067, %v1065
      %vm1071 = vmand %vm961, %vm518
      %vm1072 = vmand %vm962, %vm519
      %vm1073 = vmand %vm1071, %vm532
      %vm1074 = vmand %vm1072, %vm533
      %v1075 = vsel %vm1073, 1, 0
      %v1076 = vsel %vm1074, 1, 0
      %v1077 = vlaneseq
      %v1078 = vshrl.u32 %v1077, 7
      %v1079 = vsub.s32 0, %v1078
      %v1080 = vrot.slane %v1075, %v1079
      %v1081 = vlaneseq
      %v1082 = vshrl.u32 %v1081, 7
      %v1083 = vsub.s32 0, %v1082
      %v1084 = vrot.slane %v1076, %v1083
      %vm1085 = vcmp.eq.s32.totalorder %v1080, 1
      %vm1086 = vcmp.eq.s32.totalorder %v1084, 1
      %v1087 = vsel %vm1085, %v1069, 0.0
      %v1088 = vsel %vm1086, %v1070, 0.0
      %v1089 = vpack.c.bf16 0.0, %v1087
      %v1090 = vpack.c.bf16 0.0, %v1088
      %1091 = vst [vmem:[#allocation2 + $0xc0] sm:$0xff] %v1089
      %1092 = vst [vmem:[#allocation2 + $0xc8] sm:$0xff] %v1090
      %v1093 = vld [vmem:[%s3] sm:$0xff]
      %v1094 = vld [vmem:[#allocation2] sm:$0xff]
      %v1095 = vld [vmem:[#allocation2 + $0x8] sm:$0xff]
      %v1096 = vld [vmem:[#allocation2 + $0x10] sm:$0xff]
      %v1097 = vld [vmem:[#allocation2 + $0x18] sm:$0xff]
      %v1098 = vld [vmem:[#allocation2 + $0x20] sm:$0xff]
      %v1099 = vld [vmem:[#allocation2 + $0x28] sm:$0xff]
      %v1100 = vld [vmem:[#allocation2 + $0x30] sm:$0xff]
      %v1101 = vld [vmem:[#allocation2 + $0x38] sm:$0xff]
      %v1102 = vld [vmem:[#allocation2 + $0x40] sm:$0xff]
      %v1103 = vld [vmem:[#allocation2 + $0x48] sm:$0xff]
      %v1104 = vld [vmem:[#allocation2 + $0x50] sm:$0xff]
      %v1105 = vld [vmem:[#allocation2 + $0x58] sm:$0xff]
      %v1106 = vld [vmem:[#allocation2 + $0x60] sm:$0xff]
      %v1107 = vld [vmem:[#allocation2 + $0x68] sm:$0xff]
      %v1108 = vld [vmem:[#allocation2 + $0x70] sm:$0xff]
      %v1109 = vld [vmem:[#allocation2 + $0x78] sm:$0xff]
      %v1110 = vld [vmem:[#allocation2 + $0x80] sm:$0xff]
      %v1111 = vld [vmem:[#allocation2 + $0x88] sm:$0xff]
      %v1112 = vld [vmem:[#allocation2 + $0x90] sm:$0xff]
      %v1113 = vld [vmem:[#allocation2 + $0x98] sm:$0xff]
      %v1114 = vld [vmem:[#allocation2 + $0xa0] sm:$0xff]
      %v1115 = vld [vmem:[#allocation2 + $0xa8] sm:$0xff]
      %v1116 = vld [vmem:[#allocation2 + $0xb0] sm:$0xff]
      %v1117 = vld [vmem:[#allocation2 + $0xb8] sm:$0xff]
      %v1118 = vld [vmem:[#allocation2 + $0xc0] sm:$0xff]
      %v1119 = vld [vmem:[#allocation2 + $0xc8] sm:$0xff]
      %v1121 = vunpack.c.l.b16 %v1093
      %v1122 = vunpack.c.h.b16 %v1093
      %v1123 = vpack.c.b16 %v1121, %v1121
      %v1124 = vpack.c.b16 %v1122, %v1122
      %vm1126 = vcmask 654336
      %v1128 = vsel %vm1126, %v1124, 0
      %1130 = vmatprep.subr.bf16.mxu0 %v1095
      %1131 = vmatpush1.bf16.msra.mxu0 %v1094
      %1132 = vmatprep.subr.bf16.mxu0 %v1097
      %1133 = vmatpush1.bf16.msra.mxu0 %v1096
      %1134 = vmatprep.subr.bf16.mxu0 %v1099
      %1135 = vmatpush1.bf16.msra.mxu0 %v1098
      %1136 = vmatprep.subr.bf16.mxu0 %v1101
      %1137 = vmatpush1.bf16.msra.mxu0 %v1100
      %1138 = vmatprep.subr.bf16.mxu0 %v1103
      %1139 = vmatpush1.bf16.msra.mxu0 %v1102
      %1140 = vmatprep.subr.bf16.mxu0 %v1105
      %1141 = vmatpush1.bf16.msra.mxu0 %v1104
      %1142 = vmatprep.subr.bf16.mxu0 %v1107
      %1143 = vmatpush1.bf16.msra.mxu0 %v1106
      %1144 = vmatprep.subr.bf16.mxu0 %v1109
      %1145 = vmatpush1.bf16.msra.mxu0 %v1108
      %1146 = vmatprep.subr.bf16.mxu0 %v1111
      %1147 = vmatpush1.bf16.msra.mxu0 %v1110
      %1148 = vmatprep.subr.bf16.mxu0 %v1113
      %1149 = vmatpush1.bf16.msra.mxu0 %v1112
      %1150 = vmatprep.subr.bf16.mxu0 %v1115
      %1151 = vmatpush1.bf16.msra.mxu0 %v1114
      %1152 = vmatprep.subr.bf16.mxu0 %v1117
      %1153 = vmatpush1.bf16.msra.mxu0 %v1116
      %1154 = vmatprep.subr.bf16.mxu0 %v1119
      %1155 = vmatpush1.bf16.msra.mxu0 %v1118
      %1156 = vmatprep.subr.bf16.mxu0 0
      %1157 = vmatpush1.bf16.msra.mxu0 0
      %1158 = vmatprep.subr.bf16.mxu0 0
      %1159 = vmatpush1.bf16.msra.mxu0 0
      %1160 = vmatprep.subr.bf16.mxu0 0
      %1161 = vmatpush1.bf16.msra.mxu0 0
      %1162 = vmatprep.mubr.bf16.mxu0 %v1128
      %1163 = vmatmul.mubr.bf16.gmra.mrb[0].mxu0 %v1123
      %v1164 = vpop.f32.mrb[0].mxu0
      %v1165 = vadd.f32 0.0, %v1164
      %v1166 = vpop.f32.mrb[0].mxu0
      %v1167 = vadd.f32 0.0, %v1166
      %v1168 = vpop.f32.mrb[0].mxu0
      %v1169 = vpop.f32.mrb[0].mxu0
      %1170 = vdwg.mxu0
      %v1171 = vpack.c.bf16 %v1165, %v1165
      %v1172 = vpack.c.bf16 %v1167, %v1167
      %v1175 = vunpack.c.l.b16 %v1171
      %v1176 = vunpack.c.l.b16 %v1172
      %v1177 = vpack.c.b16 %v1176, %v1175
      %1179 = vst [vmem:[%s259] sm:$0xff] %v1177
      %v1180 = vunpack.c.l.bf16 %v1171
      %v1181 = vunpack.c.l.bf16 %v1172
      %v1182 = vadd.f32 %v1180, %v1181
      %1183 = vadd.xlane.f32.xlu0 %v1182
      %v1184 = vpop.xlane.xlu0 %1183
      %vm1185 = vcmask 7168
      %1186 = vst.msk [vmem:[%s264] sm:$0xff] %vm1185, %v1184
      %v1187 = vmul.f32 %v1180, %v1180
      %v1188 = vmul.f32 %v1181, %v1181
      %v1189 = vadd.f32 %v1187, %v1188
      %1190 = vadd.xlane.f32.xlu0 %v1189
      %v1191 = vpop.xlane.xlu0 %1190
      %1192 = vst.msk [vmem:[%s264 + $0x8] sm:$0xff] %vm1185, %v1191
      %p1193 = scmp.lt.s32.totalorder %s18, 1
      %s1194 = scalar_select %p1193, %s18, 1
      %s1195 = smul.addr %s1194, 2
      %s1196 = smul.addr %s1195, 4
      %s1197 = scalar_lea.vmem %s5, %s1196
      %p1198 = scmp.lt.s32.totalorder %s18, 1
      %s1199 = scalar_select %p1198, %s18, 1
      %s1200 = smul.addr %s1199, 2
      %s1201 = smul.addr %s1200, 8
      %s1202 = scalar_lea.vmem %s6, %s1201
      // Predicated region
      $region41: #{bottleneck_hl_forward.5} parent=39 // pred_check
        %p1203 = pneg %p146
      $region42: #{bottleneck_hl_forward.5} parent=39 // pred_check_branch
        %1205 = sbr.rel (%p1203) target = $region44
      $region43: #{bottleneck_hl_forward.5} parent=39 // pred_region
        _
      $region44: #{bottleneck_hl_forward.5} parent=39 // pred_fallthru
        _
      // Predicated region
      $region45: #{bottleneck_hl_forward.5} parent=39 // pred_check
        %p1206 = pneg %p172
      $region46: #{bottleneck_hl_forward.5} parent=39 // pred_check_branch
        %1208 = sbr.rel (%p1206) target = $region48
      $region47: #{bottleneck_hl_forward.5} parent=39 // pred_region
        _
      $region48: #{bottleneck_hl_forward.5} parent=39 // pred_fallthru
        _
    $region40: #{bottleneck_hl_forward.5} parent=5 // pred_fallthru
      _
    %p1209 = scmp.le.s32.totalorder 2, %s13
    // Predicated region
    $region49: #{bottleneck_hl_forward.5} parent=5 // pred_check
      %p1210 = pneg %p1209
    $region50: #{bottleneck_hl_forward.5} parent=5 // pred_check_branch
      %1212 = sbr.rel (%p1210) target = $region52
    $region51: #{bottleneck_hl_forward.5} parent=5 // pred_region
      %s1213 = ssub.s32 %s13, 2
      // Predicated region
      $region53: #{bottleneck_hl_forward.5} parent=51 // pred_check
        %p1214 = pneg %p152
      $region54: #{bottleneck_hl_forward.5} parent=51 // pred_check_branch
        %1216 = sbr.rel (%p1214) target = $region56
      $region55: #{bottleneck_hl_forward.5} parent=51 // pred_region
        %p1217 = scmp.lt.s32.totalorder %s19, 1
        %s1218 = scalar_select %p1217, %s19, 1
        %s1219 = smul.addr %s1218, 2
        %s1220 = smul.addr %s1219, 4
        %s1221 = scalar_lea.vmem %s5, %s1220
      $region56: #{bottleneck_hl_forward.5} parent=51 // pred_fallthru
        _
      // Predicated region
      $region57: #{bottleneck_hl_forward.5} parent=51 // pred_check
        %p1222 = pneg %p178
      $region58: #{bottleneck_hl_forward.5} parent=51 // pred_check_branch
        %1224 = sbr.rel (%p1222) target = $region60
      $region59: #{bottleneck_hl_forward.5} parent=51 // pred_region
        %p1225 = scmp.lt.s32.totalorder %s19, 1
        %s1226 = scalar_select %p1225, %s19, 1
        %s1227 = smul.addr %s1226, 2
        %s1228 = smul.addr %s1227, 8
        %s1229 = scalar_lea.vmem %s6, %s1228
      $region60: #{bottleneck_hl_forward.5} parent=51 // pred_fallthru
        _
    $region52: #{bottleneck_hl_forward.5} parent=5 // pred_fallthru
      _
  $region6: #{bottleneck_hl_forward.5} parent=0 // loop_footer
    %s17 = sadd.s32 1, %s13
  $region7: #{bottleneck_hl_forward.5} parent=0 // loop_footer_branch
    %12 = sbr.rel target = $region3
  $region8: #{bottleneck_hl_forward.5} parent=0 // loop_exit
    _

</llo_original>
